<compile_context>
chip_gen: v7x
topology: tpu7x:2x2x1
jax: 0.10.0
libtpu: 0.0.40
codegen_flags: <defaults>
</compile_context>

<pallas_src>
import numpy as np
import jax
import jax.numpy as jnp
from jax.experimental import pallas as pl
from jax.experimental.pallas import tpu as pltpu

# ---------------- static configuration (small, module-consistent) -----------
B, N, D = 2, 16, 32                 # batch, sequence, model dim
HEADS, DIM_HEAD = 4, 16             # attention heads / head dim
FF_MULT = 4
FF_HID = D * FF_MULT                # 128
CONV_EXP = 2
CONV_INNER = D * CONV_EXP           # 64
KERNEL = 7                          # conv_kernel_size (odd)
PAD = KERNEL // 2
LN_EPS = 1e-5
BN_EPS = 1e-5
ATTN_SCALE = DIM_HEAD ** -0.5
BN_ROWS = B * N                     # token rows (32)

# rows of the packed (N_VEC_D, D) small-vector table
FF1_LN_G, FF1_LN_B, FF1_B2 = 0, 1, 2
ATTN_LN_G, ATTN_LN_B, BO = 3, 4, 5
CONV_LN_G, CONV_LN_B, PW2_B = 6, 7, 8
FF2_LN_G, FF2_LN_B, FF2_B2 = 9, 10, 11
POST_G, POST_B = 12, 13
N_VEC_D = 14
# rows of the packed (N_VEC_H, FF_HID) table
FF1_B1, PW1_B, FF2_B1 = 0, 1, 2
N_VEC_H = 3

# ---------------- "natural" (torch-like) parameter layout --------------------
PARAM_SPECS = [
    ("ff1_ln_g", (1, D)), ("ff1_ln_b", (1, D)),
    ("ff1_w1", (D, FF_HID)), ("ff1_b1", (1, FF_HID)),
    ("ff1_w2", (FF_HID, D)), ("ff1_b2", (1, D)),
    ("attn_ln_g", (1, D)), ("attn_ln_b", (1, D)),
    ("wq", (HEADS, D, DIM_HEAD)), ("wk", (HEADS, D, DIM_HEAD)),
    ("wv", (HEADS, D, DIM_HEAD)), ("wo", (HEADS, DIM_HEAD, D)),
    ("bo", (1, D)),
    ("conv_ln_g", (1, D)), ("conv_ln_b", (1, D)),
    ("pw1_wa", (D, CONV_INNER)), ("pw1_ba", (1, CONV_INNER)),
    ("pw1_wg", (D, CONV_INNER)), ("pw1_bg", (1, CONV_INNER)),
    ("dw_w", (KERNEL, CONV_INNER)), ("dw_b", (1, CONV_INNER)),
    ("bn_g", (1, CONV_INNER)), ("bn_b", (1, CONV_INNER)),
    ("bn_rm", (1, CONV_INNER)), ("bn_rv", (1, CONV_INNER)),
    ("pw2_w", (CONV_INNER, D)), ("pw2_b", (1, D)),
    ("ff2_ln_g", (1, D)), ("ff2_ln_b", (1, D)),
    ("ff2_w1", (D, FF_HID)), ("ff2_b1", (1, FF_HID)),
    ("ff2_w2", (FF_HID, D)), ("ff2_b2", (1, D)),
    ("post_g", (1, D)), ("post_b", (1, D)),
]


# ---------------- constant depthwise-conv shift-gather matrix -----------------
# out[r, c] = sum_k dw[k, c] * glu[row(r)+k-PAD, c]   (zero outside each batch)
# expressed as  out = T @ G  with  G[k*BN + r', c] = dw[k, c] * glu[r', c].
def _build_dw_gather():
    t = np.zeros((BN_ROWS, KERNEL * BN_ROWS), np.float32)
    for b in range(B):
        for n in range(N):
            r = b * N + n
            for k in range(KERNEL):
                m = n + k - PAD
                if 0 <= m < N:
                    t[r, k * BN_ROWS + b * N + m] = 1.0
    return t


DW_GATHER = jnp.asarray(_build_dw_gather())


# ---------------------------- in-kernel helpers ------------------------------
def _layernorm(y, g, b):
    mu = jnp.mean(y, axis=-1, keepdims=True)
    var = jnp.mean(jnp.square(y - mu), axis=-1, keepdims=True)
    return (y - mu) * jax.lax.rsqrt(var + LN_EPS) * g + b


def _swish(y):
    return y * jax.nn.sigmoid(y)


# ------------------------------- the kernel ----------------------------------
def conformer_block_kernel(
        x_ref, vd_ref, vh_ref,
        ff1_w1_ref, ff1_w2_ref,
        w_qkv_ref, w_o_ref,
        pw1_w_ref, dw_w_ref, dw_b_ref, dw_t_ref, pw2_w_ref,
        ff2_w1_ref, ff2_w2_ref,
        out_ref):
    vd = vd_ref[...]                                   # (N_VEC_D, D)
    vh = vh_ref[...]                                   # (N_VEC_H, FF_HID)
    row_d = lambda i: vd[i:i + 1, :]                   # (1, D)
    row_h = lambda i: vh[i:i + 1, :]                   # (1, FF_HID)

    # keep working activations 2-D: tokens on sublanes, features on lanes
    x2 = x_ref[...].reshape(BN_ROWS, D)                # (B*N, D)

    def feed_forward(y2, g, b, w1, b1, w2, b2):
        h = _layernorm(y2, g, b)
        h = _swish(jnp.dot(h, w1, preferred_element_type=jnp.float32) + b1)
        return jnp.dot(h, w2, preferred_element_type=jnp.float32) + b2

    # ---- Scale(0.5, PreNorm(FF1)) + residual ---------------------------------
    x2 = 0.5 * feed_forward(x2, row_d(FF1_LN_G), row_d(FF1_LN_B),
                            ff1_w1_ref[...], row_h(FF1_B1),
                            ff1_w2_ref[...], row_d(FF1_B2)) + x2

    # ---- PreNorm(multi-head self-attention) + residual -----------------------
    h2 = _layernorm(x2, row_d(ATTN_LN_G), row_d(ATTN_LN_B))
    # fused Q|K|V projection: one (B*N, 3*H*Dh) matmul
    qkv = jnp.dot(h2, w_qkv_ref[...], preferred_element_type=jnp.float32)
    q_off, k_off, v_off = 0, HEADS * DIM_HEAD, 2 * HEADS * DIM_HEAD
    ctx_cols = []
    for hd in range(HEADS):                            # tiny static loop; matmuls fused
        lo, hi = hd * DIM_HEAD, (hd + 1) * DIM_HEAD
        qh = qkv[:, q_off + lo:q_off + hi].reshape(B, N, DIM_HEAD)
        kh = qkv[:, k_off + lo:k_off + hi].reshape(B, N, DIM_HEAD)
        vhd = qkv[:, v_off + lo:v_off + hi].reshape(B, N, DIM_HEAD)
        dots = jnp.einsum('bnd,bmd->bnm', qh, kh,
                          preferred_element_type=jnp.float32) * ATTN_SCALE
        m = jnp.max(dots, axis=-1, keepdims=True)
        e = jnp.exp(dots - m)
        p = e * pl.reciprocal(jnp.sum(e, axis=-1, keepdims=True), approx=True)
        oh = jnp.einsum('bnm,bmd->bnd', p, vhd,
                        preferred_element_type=jnp.float32)
        ctx_cols.append(oh.reshape(BN_ROWS, DIM_HEAD))
    ctx = jnp.concatenate(ctx_cols, axis=1)            # (B*N, H*Dh)
    attn_out = jnp.dot(ctx, w_o_ref[...],
                       preferred_element_type=jnp.float32) + row_d(BO)
    x2 = attn_out + x2

    # ---- ConformerConvModule + residual --------------------------------------
    h2 = _layernorm(x2, row_d(CONV_LN_G), row_d(CONV_LN_B))
    # fused GLU pointwise conv: one (B*N, 2*Ci) matmul, split columns
    ag = jnp.dot(h2, pw1_w_ref[...], preferred_element_type=jnp.float32) + row_h(PW1_B)
    glu = ag[:, :CONV_INNER] * jax.nn.sigmoid(ag[:, CONV_INNER:])   # (B*N, Ci)
    # depthwise conv (BatchNorm already folded into dw weights/bias in the wrapper):
    # per-tap weighted activations stacked along sublanes, gathered by one matmul.
    gk = (dw_w_ref[...][:, None, :] * glu[None, :, :]).reshape(KERNEL * BN_ROWS,
                                                               CONV_INNER)
    acc = jnp.dot(dw_t_ref[...], gk, preferred_element_type=jnp.float32) + dw_b_ref[...]
    acc = _swish(acc)
    conv_out = jnp.dot(acc, pw2_w_ref[...],
                       preferred_element_type=jnp.float32) + row_d(PW2_B)
    x2 = conv_out + x2

    # ---- Scale(0.5, PreNorm(FF2)) + residual ---------------------------------
    x2 = 0.5 * feed_forward(x2, row_d(FF2_LN_G), row_d(FF2_LN_B),
                            ff2_w1_ref[...], row_h(FF2_B1),
                            ff2_w2_ref[...], row_d(FF2_B2)) + x2

    # ---- post LayerNorm -------------------------------------------------------
    y2 = _layernorm(x2, row_d(POST_G), row_d(POST_B))
    out_ref[...] = y2.reshape(B, N, D).astype(out_ref.dtype)


# --------------------------- wrapper-side packing -----------------------------
def pack_params(params):
    # fused QKV weight: columns [Q | K | V], head-major inside each block
    qb = jnp.transpose(params["wq"], (1, 0, 2)).reshape(D, HEADS * DIM_HEAD)
    kb = jnp.transpose(params["wk"], (1, 0, 2)).reshape(D, HEADS * DIM_HEAD)
    vb = jnp.transpose(params["wv"], (1, 0, 2)).reshape(D, HEADS * DIM_HEAD)
    w_qkv = jnp.concatenate([qb, kb, vb], axis=1)                     # (D, 192)
    w_o = params["wo"].reshape(HEADS * DIM_HEAD, D)                   # (64, D)
    # fused GLU pointwise-conv weight / bias
    pw1_w = jnp.concatenate([params["pw1_wa"], params["pw1_wg"]], axis=1)   # (D, 128)
    pw1_b = jnp.concatenate([params["pw1_ba"], params["pw1_bg"]], axis=1)   # (1, 128)
    # fold BatchNorm (eval mode) into depthwise conv
    bn_scale = params["bn_g"] * jax.lax.rsqrt(params["bn_rv"] + BN_EPS)     # (1, Ci)
    dw_w = params["dw_w"] * bn_scale                                        # (K, Ci)
    dw_b = (params["dw_b"] - params["bn_rm"]) * bn_scale + params["bn_b"]   # (1, Ci)
    # pack all small gain/bias vectors into two stacked tables
    vd = jnp.concatenate([
        params["ff1_ln_g"], params["ff1_ln_b"], params["ff1_b2"],
        params["attn_ln_g"], params["attn_ln_b"], params["bo"],
        params["conv_ln_g"], params["conv_ln_b"], params["pw2_b"],
        params["ff2_ln_g"], params["ff2_ln_b"], params["ff2_b2"],
        params["post_g"], params["post_b"]], axis=0)                  # (14, D)
    vh = jnp.concatenate([params["ff1_b1"], pw1_b, params["ff2_b1"]], axis=0)  # (3, 128)
    return dict(vd=vd, vh=vh,
                ff1_w1=params["ff1_w1"], ff1_w2=params["ff1_w2"],
                w_qkv=w_qkv, w_o=w_o,
                pw1_w=pw1_w, dw_w=dw_w, dw_b=dw_b, dw_t=DW_GATHER,
                pw2_w=params["pw2_w"],
                ff2_w1=params["ff2_w1"], ff2_w2=params["ff2_w2"])


ARG_ORDER = ["vd", "vh", "ff1_w1", "ff1_w2", "w_qkv", "w_o",
             "pw1_w", "dw_w", "dw_b", "dw_t", "pw2_w", "ff2_w1", "ff2_w2"]


def _cost_estimate():
    flops = (2 * 2 * 2 * BN_ROWS * D * FF_HID              # two FF blocks, 2 matmuls each
             + 2 * BN_ROWS * D * 3 * HEADS * DIM_HEAD      # fused QKV
             + 2 * 2 * B * HEADS * N * N * DIM_HEAD        # scores + context
             + 2 * BN_ROWS * HEADS * DIM_HEAD * D          # output projection
             + 2 * BN_ROWS * D * 2 * CONV_INNER            # fused GLU pointwise conv
             + 2 * BN_ROWS * KERNEL * BN_ROWS * CONV_INNER # depthwise as matmul
             + 2 * BN_ROWS * CONV_INNER * D)               # pointwise conv 2
    transcendentals = (B * HEADS * N * N                   # softmax exp
                       + 2 * BN_ROWS * FF_HID              # FF swish sigmoids
                       + 2 * BN_ROWS * CONV_INNER          # GLU + conv swish sigmoids
                       + 5 * BN_ROWS)                      # layernorm rsqrt
    bytes_accessed = 4 * (2 * B * N * D + N_VEC_D * D + N_VEC_H * FF_HID
                          + 4 * D * FF_HID + D * 3 * HEADS * DIM_HEAD
                          + HEADS * DIM_HEAD * D + D * 2 * CONV_INNER
                          + KERNEL * CONV_INNER + CONV_INNER
                          + BN_ROWS * KERNEL * BN_ROWS + CONV_INNER * D)
    return pl.CostEstimate(flops=flops, transcendentals=transcendentals,
                           bytes_accessed=bytes_accessed)


def conformer_block(x, params):
    packed = pack_params(params)
    args = [x] + [packed[k] for k in ARG_ORDER]
    return pl.pallas_call(
        conformer_block_kernel,
        out_shape=jax.ShapeDtypeStruct((B, N, D), jnp.float32),
        in_specs=[pl.BlockSpec(memory_space=pltpu.MemorySpace.VMEM)] * len(args),
        out_specs=pl.BlockSpec(memory_space=pltpu.MemorySpace.VMEM),
        cost_estimate=_cost_estimate(),
    )(*args)


# --------------------------- parameter init ----------------------------------
def init_params(key):
    params = {}
    keys = jax.random.split(key, len(PARAM_SPECS))
    for (name, shape), k in zip(PARAM_SPECS, keys):
        if name.endswith("_ln_g") or name in ("bn_g", "bn_rv", "post_g"):
            params[name] = jnp.ones(shape, jnp.float32)
        elif name.endswith("_ln_b") or name in ("bn_b", "bn_rm", "post_b"):
            params[name] = jnp.zeros(shape, jnp.float32)
        else:
            params[name] = 0.05 * jax.random.normal(k, shape, jnp.float32)
    return params


# --------------------------- pure-JAX reference --------------------------------
def reference_forward(x, params):
    def ln(y, g, b):
        mu = jnp.mean(y, -1, keepdims=True)
        var = jnp.mean(jnp.square(y - mu), -1, keepdims=True)
        return (y - mu) * jax.lax.rsqrt(var + LN_EPS) * g + b

    def swish(y):
        return y * jax.nn.sigmoid(y)

    def ff(y, p):
        h = ln(y, params[p + "_ln_g"], params[p + "_ln_b"])
        h = swish(jnp.einsum('bnd,dh->bnh', h, params[p + "_w1"]) + params[p + "_b1"])
        return jnp.einsum('bnh,hd->bnd', h, params[p + "_w2"]) + params[p + "_b2"]

    x = 0.5 * ff(x, "ff1") + x
    h = ln(x, params["attn_ln_g"], params["attn_ln_b"])
    attn = jnp.zeros_like(x)
    for hh in range(HEADS):
        q = jnp.einsum('bnd,de->bne', h, params["wq"][hh])
        k = jnp.einsum('bnd,de->bne', h, params["wk"][hh])
        v = jnp.einsum('bnd,de->bne', h, params["wv"][hh])
        dots = jnp.einsum('bne,bme->bnm', q, k) * ATTN_SCALE
        p = jax.nn.softmax(dots, axis=-1)
        o = jnp.einsum('bnm,bme->bne', p, v)
        attn = attn + jnp.einsum('bne,ed->bnd', o, params["wo"][hh])
    x = attn + params["bo"] + x
    h = ln(x, params["conv_ln_g"], params["conv_ln_b"])
    a = jnp.einsum('bnd,dc->bnc', h, params["pw1_wa"]) + params["pw1_ba"]
    g = jnp.einsum('bnd,dc->bnc', h, params["pw1_wg"]) + params["pw1_bg"]
    glu = a * jax.nn.sigmoid(g)
    padded = jnp.pad(glu, ((0, 0), (PAD, PAD), (0, 0)))
    acc = sum(padded[:, k:k + N, :] * params["dw_w"][k] for k in range(KERNEL))
    acc = acc + params["dw_b"]
    acc = ((acc - params["bn_rm"]) * jax.lax.rsqrt(params["bn_rv"] + BN_EPS)
           * params["bn_g"] + params["bn_b"])
    acc = swish(acc)
    conv = jnp.einsum('bnc,cd->bnd', acc, params["pw2_w"]) + params["pw2_b"]
    x = conv + x
    x = 0.5 * ff(x, "ff2") + x
    return ln(x, params["post_g"], params["post_b"])


if __name__ == "__main__":
    key = jax.random.PRNGKey(0)
    kx, kp = jax.random.split(key)
    x = jax.random.normal(kx, (B, N, D), jnp.float32)
    params = init_params(kp)

    out = jax.jit(conformer_block)(x, params)
    out = jax.block_until_ready(out)

    assert out.shape == (B, N, D), out.shape
    assert bool(jnp.all(jnp.isfinite(out)))

    ref = reference_forward(x, params)
    err = float(jnp.max(jnp.abs(out - ref)))
    assert err < 2e-2, f"max abs error vs reference: {err}"
    print("KERNEL_OK")
</pallas_src>

<mosaic_0001>
module attributes {stable_mosaic.version = 11 : i64} {
  func.func @conformer_block_kernel(%arg0: memref<2x16x32xf32, #tpu.memory_space<vmem>>, %arg1: memref<14x32xf32, #tpu.memory_space<vmem>>, %arg2: memref<3x128xf32, #tpu.memory_space<vmem>>, %arg3: memref<32x128xf32, #tpu.memory_space<vmem>>, %arg4: memref<128x32xf32, #tpu.memory_space<vmem>>, %arg5: memref<32x192xf32, #tpu.memory_space<vmem>>, %arg6: memref<64x32xf32, #tpu.memory_space<vmem>>, %arg7: memref<32x128xf32, #tpu.memory_space<vmem>>, %arg8: memref<7x64xf32, #tpu.memory_space<vmem>>, %arg9: memref<1x64xf32, #tpu.memory_space<vmem>>, %arg10: memref<32x224xf32, #tpu.memory_space<vmem>>, %arg11: memref<64x32xf32, #tpu.memory_space<vmem>>, %arg12: memref<32x128xf32, #tpu.memory_space<vmem>>, %arg13: memref<128x32xf32, #tpu.memory_space<vmem>>, %arg14: memref<2x16x32xf32, #tpu.memory_space<vmem>>) attributes {dimension_semantics = [], scalar_prefetch = 0 : i64, scratch_operands = 0 : i64, tpu.core_type = #tpu.core_type<tc>} {
    %c0 = arith.constant 0 : index
    %c0_0 = arith.constant 0 : index
    %0 = vector.load %arg1[%c0, %c0_0] : memref<14x32xf32, #tpu.memory_space<vmem>>, vector<14x32xf32>
    %c0_1 = arith.constant 0 : index
    %c0_2 = arith.constant 0 : index
    %1 = vector.load %arg2[%c0_1, %c0_2] : memref<3x128xf32, #tpu.memory_space<vmem>>, vector<3x128xf32>
    %c0_3 = arith.constant 0 : index
    %c0_4 = arith.constant 0 : index
    %c0_5 = arith.constant 0 : index
    %2 = vector.load %arg0[%c0_3, %c0_4, %c0_5] : memref<2x16x32xf32, #tpu.memory_space<vmem>>, vector<2x16x32xf32>
    %3 = vector.shape_cast %2 : vector<2x16x32xf32> to vector<32x32xf32>
    %4 = vector.extract_strided_slice %0 {offsets = [0, 0], sizes = [1, 32], strides = [1, 1]} : vector<14x32xf32> to vector<1x32xf32>
    %5 = vector.extract_strided_slice %0 {offsets = [1, 0], sizes = [1, 32], strides = [1, 1]} : vector<14x32xf32> to vector<1x32xf32>
    %c0_6 = arith.constant 0 : index
    %c0_7 = arith.constant 0 : index
    %6 = vector.load %arg3[%c0_6, %c0_7] : memref<32x128xf32, #tpu.memory_space<vmem>>, vector<32x128xf32>
    %7 = vector.extract_strided_slice %1 {offsets = [0, 0], sizes = [1, 128], strides = [1, 1]} : vector<3x128xf32> to vector<1x128xf32>
    %c0_8 = arith.constant 0 : index
    %c0_9 = arith.constant 0 : index
    %8 = vector.load %arg4[%c0_8, %c0_9] : memref<128x32xf32, #tpu.memory_space<vmem>>, vector<128x32xf32>
    %9 = vector.extract_strided_slice %0 {offsets = [2, 0], sizes = [1, 32], strides = [1, 1]} : vector<14x32xf32> to vector<1x32xf32>
    %cst = arith.constant dense<0.000000e+00> : vector<32xf32>
    %10 = vector.multi_reduction <add>, %3, %cst [1] : vector<32x32xf32> to vector<32xf32>
    %11 = vector.shape_cast %10 : vector<32xf32> to vector<32x1xf32>
    %cst_10 = arith.constant 3.200000e+01 : f32
    %12 = vector.broadcast %cst_10 : f32 to vector<32x1xf32>
    %13 = arith.divf %11, %12 : vector<32x1xf32>
    %14 = vector.broadcast %13 : vector<32x1xf32> to vector<32x32xf32>
    %15 = arith.subf %3, %14 : vector<32x32xf32>
    %16 = arith.mulf %15, %15 : vector<32x32xf32>
    %cst_11 = arith.constant dense<0.000000e+00> : vector<32xf32>
    %17 = vector.multi_reduction <add>, %16, %cst_11 [1] : vector<32x32xf32> to vector<32xf32>
    %18 = vector.shape_cast %17 : vector<32xf32> to vector<32x1xf32>
    %cst_12 = arith.constant 3.200000e+01 : f32
    %19 = vector.broadcast %cst_12 : f32 to vector<32x1xf32>
    %20 = arith.divf %18, %19 : vector<32x1xf32>
    %21 = vector.broadcast %13 : vector<32x1xf32> to vector<32x32xf32>
    %22 = arith.subf %3, %21 : vector<32x32xf32>
    %cst_13 = arith.constant 9.99999974E-6 : f32
    %23 = vector.broadcast %cst_13 : f32 to vector<32x1xf32>
    %24 = arith.addf %20, %23 : vector<32x1xf32>
    %25 = math.rsqrt %24 : vector<32x1xf32>
    %26 = vector.broadcast %25 : vector<32x1xf32> to vector<32x32xf32>
    %27 = arith.mulf %22, %26 : vector<32x32xf32>
    %28 = vector.broadcast %4 : vector<1x32xf32> to vector<32x32xf32>
    %29 = arith.mulf %27, %28 : vector<32x32xf32>
    %30 = vector.broadcast %5 : vector<1x32xf32> to vector<32x32xf32>
    %31 = arith.addf %29, %30 : vector<32x32xf32>
    %cst_14 = arith.constant dense<0.000000e+00> : vector<32x128xf32>
    %32 = tpu.matmul %31, %6, %cst_14 {dimension_numbers = #tpu.dot_dimension_numbers<[1], [0], [0], [1], [0, 0, 1, 1], [], []>} : vector<32x32xf32>, vector<32x128xf32>, vector<32x128xf32> -> vector<32x128xf32>
    %33 = vector.broadcast %7 : vector<1x128xf32> to vector<32x128xf32>
    %34 = arith.addf %32, %33 : vector<32x128xf32>
    %35 = arith.negf %34 : vector<32x128xf32>
    %36 = math.exp %35 : vector<32x128xf32>
    %cst_15 = arith.constant 1.000000e+00 : f32
    %37 = vector.broadcast %cst_15 : f32 to vector<32x128xf32>
    %38 = arith.addf %37, %36 : vector<32x128xf32>
    %39 = arith.divf %37, %38 : vector<32x128xf32>
    %40 = arith.mulf %34, %39 : vector<32x128xf32>
    %cst_16 = arith.constant dense<0.000000e+00> : vector<32x32xf32>
    %41 = tpu.matmul %40, %8, %cst_16 {dimension_numbers = #tpu.dot_dimension_numbers<[1], [0], [0], [1], [0, 0, 1, 1], [], []>} : vector<32x128xf32>, vector<128x32xf32>, vector<32x32xf32> -> vector<32x32xf32>
    %42 = vector.broadcast %9 : vector<1x32xf32> to vector<32x32xf32>
    %43 = arith.addf %41, %42 : vector<32x32xf32>
    %cst_17 = arith.constant 5.000000e-01 : f32
    %44 = vector.broadcast %cst_17 : f32 to vector<32x32xf32>
    %45 = arith.mulf %44, %43 : vector<32x32xf32>
    %46 = arith.addf %45, %3 : vector<32x32xf32>
    %47 = vector.extract_strided_slice %0 {offsets = [3, 0], sizes = [1, 32], strides = [1, 1]} : vector<14x32xf32> to vector<1x32xf32>
    %48 = vector.extract_strided_slice %0 {offsets = [4, 0], sizes = [1, 32], strides = [1, 1]} : vector<14x32xf32> to vector<1x32xf32>
    %cst_18 = arith.constant dense<0.000000e+00> : vector<32xf32>
    %49 = vector.multi_reduction <add>, %46, %cst_18 [1] : vector<32x32xf32> to vector<32xf32>
    %50 = vector.shape_cast %49 : vector<32xf32> to vector<32x1xf32>
    %cst_19 = arith.constant 3.200000e+01 : f32
    %51 = vector.broadcast %cst_19 : f32 to vector<32x1xf32>
    %52 = arith.divf %50, %51 : vector<32x1xf32>
    %53 = vector.broadcast %52 : vector<32x1xf32> to vector<32x32xf32>
    %54 = arith.subf %46, %53 : vector<32x32xf32>
    %55 = arith.mulf %54, %54 : vector<32x32xf32>
    %cst_20 = arith.constant dense<0.000000e+00> : vector<32xf32>
    %56 = vector.multi_reduction <add>, %55, %cst_20 [1] : vector<32x32xf32> to vector<32xf32>
    %57 = vector.shape_cast %56 : vector<32xf32> to vector<32x1xf32>
    %cst_21 = arith.constant 3.200000e+01 : f32
    %58 = vector.broadcast %cst_21 : f32 to vector<32x1xf32>
    %59 = arith.divf %57, %58 : vector<32x1xf32>
    %60 = vector.broadcast %52 : vector<32x1xf32> to vector<32x32xf32>
    %61 = arith.subf %46, %60 : vector<32x32xf32>
    %cst_22 = arith.constant 9.99999974E-6 : f32
    %62 = vector.broadcast %cst_22 : f32 to vector<32x1xf32>
    %63 = arith.addf %59, %62 : vector<32x1xf32>
    %64 = math.rsqrt %63 : vector<32x1xf32>
    %65 = vector.broadcast %64 : vector<32x1xf32> to vector<32x32xf32>
    %66 = arith.mulf %61, %65 : vector<32x32xf32>
    %67 = vector.broadcast %47 : vector<1x32xf32> to vector<32x32xf32>
    %68 = arith.mulf %66, %67 : vector<32x32xf32>
    %69 = vector.broadcast %48 : vector<1x32xf32> to vector<32x32xf32>
    %70 = arith.addf %68, %69 : vector<32x32xf32>
    %c0_23 = arith.constant 0 : index
    %c0_24 = arith.constant 0 : index
    %71 = vector.load %arg5[%c0_23, %c0_24] : memref<32x192xf32, #tpu.memory_space<vmem>>, vector<32x192xf32>
    %cst_25 = arith.constant dense<0.000000e+00> : vector<32x192xf32>
    %72 = tpu.matmul %70, %71, %cst_25 {dimension_numbers = #tpu.dot_dimension_numbers<[1], [0], [0], [1], [0, 0, 1, 1], [], []>} : vector<32x32xf32>, vector<32x192xf32>, vector<32x192xf32> -> vector<32x192xf32>
    %73 = vector.extract_strided_slice %72 {offsets = [0, 0], sizes = [32, 16], strides = [1, 1]} : vector<32x192xf32> to vector<32x16xf32>
    %74 = vector.shape_cast %73 : vector<32x16xf32> to vector<2x16x16xf32>
    %75 = vector.extract_strided_slice %72 {offsets = [0, 64], sizes = [32, 16], strides = [1, 1]} : vector<32x192xf32> to vector<32x16xf32>
    %76 = vector.shape_cast %75 : vector<32x16xf32> to vector<2x16x16xf32>
    %77 = vector.extract_strided_slice %72 {offsets = [0, 128], sizes = [32, 16], strides = [1, 1]} : vector<32x192xf32> to vector<32x16xf32>
    %78 = vector.shape_cast %77 : vector<32x16xf32> to vector<2x16x16xf32>
    "tpu.trace_start"() <{level = 10 : i32, message = "bnd,bmd->bnm"}> : () -> ()
    %cst_26 = arith.constant dense<0.000000e+00> : vector<2x16x16xf32>
    %79 = tpu.matmul %74, %76, %cst_26 {dimension_numbers = #tpu.dot_dimension_numbers<[2], [2], [1], [1], [0, 0, 0, 1, 1, 1], [0], [0]>} : vector<2x16x16xf32>, vector<2x16x16xf32>, vector<2x16x16xf32> -> vector<2x16x16xf32>
    "tpu.trace_stop"() : () -> ()
    %cst_27 = arith.constant 2.500000e-01 : f32
    %80 = vector.broadcast %cst_27 : f32 to vector<2x16x16xf32>
    %81 = arith.mulf %79, %80 : vector<2x16x16xf32>
    %cst_28 = arith.constant dense<0xFF800000> : vector<2x16xf32>
    %82 = vector.multi_reduction <maximumf>, %81, %cst_28 [2] : vector<2x16x16xf32> to vector<2x16xf32>
    %83 = vector.shape_cast %82 : vector<2x16xf32> to vector<2x16x1xf32>
    %84 = vector.broadcast %83 : vector<2x16x1xf32> to vector<2x16x16xf32>
    %85 = arith.subf %81, %84 : vector<2x16x16xf32>
    %86 = math.exp %85 : vector<2x16x16xf32>
    %cst_29 = arith.constant dense<0.000000e+00> : vector<2x16xf32>
    %87 = vector.multi_reduction <add>, %86, %cst_29 [2] : vector<2x16x16xf32> to vector<2x16xf32>
    %88 = vector.shape_cast %87 : vector<2x16xf32> to vector<2x16x1xf32>
    %89 = tpu.reciprocal %88 {approx = true} : vector<2x16x1xf32> -> vector<2x16x1xf32>
    %90 = vector.broadcast %89 : vector<2x16x1xf32> to vector<2x16x16xf32>
    %91 = arith.mulf %86, %90 : vector<2x16x16xf32>
    "tpu.trace_start"() <{level = 10 : i32, message = "bnm,bmd->bnd"}> : () -> ()
    %cst_30 = arith.constant dense<0.000000e+00> : vector<2x16x16xf32>
    %92 = tpu.matmul %91, %78, %cst_30 {dimension_numbers = #tpu.dot_dimension_numbers<[2], [1], [1], [2], [0, 0, 0, 1, 1, 2], [0], [0]>} : vector<2x16x16xf32>, vector<2x16x16xf32>, vector<2x16x16xf32> -> vector<2x16x16xf32>
    "tpu.trace_stop"() : () -> ()
    %93 = vector.shape_cast %92 : vector<2x16x16xf32> to vector<32x16xf32>
    %94 = vector.extract_strided_slice %72 {offsets = [0, 16], sizes = [32, 16], strides = [1, 1]} : vector<32x192xf32> to vector<32x16xf32>
    %95 = vector.shape_cast %94 : vector<32x16xf32> to vector<2x16x16xf32>
    %96 = vector.extract_strided_slice %72 {offsets = [0, 80], sizes = [32, 16], strides = [1, 1]} : vector<32x192xf32> to vector<32x16xf32>
    %97 = vector.shape_cast %96 : vector<32x16xf32> to vector<2x16x16xf32>
    %98 = vector.extract_strided_slice %72 {offsets = [0, 144], sizes = [32, 16], strides = [1, 1]} : vector<32x192xf32> to vector<32x16xf32>
    %99 = vector.shape_cast %98 : vector<32x16xf32> to vector<2x16x16xf32>
    "tpu.trace_start"() <{level = 10 : i32, message = "bnd,bmd->bnm"}> : () -> ()
    %cst_31 = arith.constant dense<0.000000e+00> : vector<2x16x16xf32>
    %100 = tpu.matmul %95, %97, %cst_31 {dimension_numbers = #tpu.dot_dimension_numbers<[2], [2], [1], [1], [0, 0, 0, 1, 1, 1], [0], [0]>} : vector<2x16x16xf32>, vector<2x16x16xf32>, vector<2x16x16xf32> -> vector<2x16x16xf32>
    "tpu.trace_stop"() : () -> ()
    %cst_32 = arith.constant 2.500000e-01 : f32
    %101 = vector.broadcast %cst_32 : f32 to vector<2x16x16xf32>
    %102 = arith.mulf %100, %101 : vector<2x16x16xf32>
    %cst_33 = arith.constant dense<0xFF800000> : vector<2x16xf32>
    %103 = vector.multi_reduction <maximumf>, %102, %cst_33 [2] : vector<2x16x16xf32> to vector<2x16xf32>
    %104 = vector.shape_cast %103 : vector<2x16xf32> to vector<2x16x1xf32>
    %105 = vector.broadcast %104 : vector<2x16x1xf32> to vector<2x16x16xf32>
    %106 = arith.subf %102, %105 : vector<2x16x16xf32>
    %107 = math.exp %106 : vector<2x16x16xf32>
    %cst_34 = arith.constant dense<0.000000e+00> : vector<2x16xf32>
    %108 = vector.multi_reduction <add>, %107, %cst_34 [2] : vector<2x16x16xf32> to vector<2x16xf32>
    %109 = vector.shape_cast %108 : vector<2x16xf32> to vector<2x16x1xf32>
    %110 = tpu.reciprocal %109 {approx = true} : vector<2x16x1xf32> -> vector<2x16x1xf32>
    %111 = vector.broadcast %110 : vector<2x16x1xf32> to vector<2x16x16xf32>
    %112 = arith.mulf %107, %111 : vector<2x16x16xf32>
    "tpu.trace_start"() <{level = 10 : i32, message = "bnm,bmd->bnd"}> : () -> ()
    %cst_35 = arith.constant dense<0.000000e+00> : vector<2x16x16xf32>
    %113 = tpu.matmul %112, %99, %cst_35 {dimension_numbers = #tpu.dot_dimension_numbers<[2], [1], [1], [2], [0, 0, 0, 1, 1, 2], [0], [0]>} : vector<2x16x16xf32>, vector<2x16x16xf32>, vector<2x16x16xf32> -> vector<2x16x16xf32>
    "tpu.trace_stop"() : () -> ()
    %114 = vector.shape_cast %113 : vector<2x16x16xf32> to vector<32x16xf32>
    %115 = vector.extract_strided_slice %72 {offsets = [0, 32], sizes = [32, 16], strides = [1, 1]} : vector<32x192xf32> to vector<32x16xf32>
    %116 = vector.shape_cast %115 : vector<32x16xf32> to vector<2x16x16xf32>
    %117 = vector.extract_strided_slice %72 {offsets = [0, 96], sizes = [32, 16], strides = [1, 1]} : vector<32x192xf32> to vector<32x16xf32>
    %118 = vector.shape_cast %117 : vector<32x16xf32> to vector<2x16x16xf32>
    %119 = vector.extract_strided_slice %72 {offsets = [0, 160], sizes = [32, 16], strides = [1, 1]} : vector<32x192xf32> to vector<32x16xf32>
    %120 = vector.shape_cast %119 : vector<32x16xf32> to vector<2x16x16xf32>
    "tpu.trace_start"() <{level = 10 : i32, message = "bnd,bmd->bnm"}> : () -> ()
    %cst_36 = arith.constant dense<0.000000e+00> : vector<2x16x16xf32>
    %121 = tpu.matmul %116, %118, %cst_36 {dimension_numbers = #tpu.dot_dimension_numbers<[2], [2], [1], [1], [0, 0, 0, 1, 1, 1], [0], [0]>} : vector<2x16x16xf32>, vector<2x16x16xf32>, vector<2x16x16xf32> -> vector<2x16x16xf32>
    "tpu.trace_stop"() : () -> ()
    %cst_37 = arith.constant 2.500000e-01 : f32
    %122 = vector.broadcast %cst_37 : f32 to vector<2x16x16xf32>
    %123 = arith.mulf %121, %122 : vector<2x16x16xf32>
    %cst_38 = arith.constant dense<0xFF800000> : vector<2x16xf32>
    %124 = vector.multi_reduction <maximumf>, %123, %cst_38 [2] : vector<2x16x16xf32> to vector<2x16xf32>
    %125 = vector.shape_cast %124 : vector<2x16xf32> to vector<2x16x1xf32>
    %126 = vector.broadcast %125 : vector<2x16x1xf32> to vector<2x16x16xf32>
    %127 = arith.subf %123, %126 : vector<2x16x16xf32>
    %128 = math.exp %127 : vector<2x16x16xf32>
    %cst_39 = arith.constant dense<0.000000e+00> : vector<2x16xf32>
    %129 = vector.multi_reduction <add>, %128, %cst_39 [2] : vector<2x16x16xf32> to vector<2x16xf32>
    %130 = vector.shape_cast %129 : vector<2x16xf32> to vector<2x16x1xf32>
    %131 = tpu.reciprocal %130 {approx = true} : vector<2x16x1xf32> -> vector<2x16x1xf32>
    %132 = vector.broadcast %131 : vector<2x16x1xf32> to vector<2x16x16xf32>
    %133 = arith.mulf %128, %132 : vector<2x16x16xf32>
    "tpu.trace_start"() <{level = 10 : i32, message = "bnm,bmd->bnd"}> : () -> ()
    %cst_40 = arith.constant dense<0.000000e+00> : vector<2x16x16xf32>
    %134 = tpu.matmul %133, %120, %cst_40 {dimension_numbers = #tpu.dot_dimension_numbers<[2], [1], [1], [2], [0, 0, 0, 1, 1, 2], [0], [0]>} : vector<2x16x16xf32>, vector<2x16x16xf32>, vector<2x16x16xf32> -> vector<2x16x16xf32>
    "tpu.trace_stop"() : () -> ()
    %135 = vector.shape_cast %134 : vector<2x16x16xf32> to vector<32x16xf32>
    %136 = vector.extract_strided_slice %72 {offsets = [0, 48], sizes = [32, 16], strides = [1, 1]} : vector<32x192xf32> to vector<32x16xf32>
    %137 = vector.shape_cast %136 : vector<32x16xf32> to vector<2x16x16xf32>
    %138 = vector.extract_strided_slice %72 {offsets = [0, 112], sizes = [32, 16], strides = [1, 1]} : vector<32x192xf32> to vector<32x16xf32>
    %139 = vector.shape_cast %138 : vector<32x16xf32> to vector<2x16x16xf32>
    %140 = vector.extract_strided_slice %72 {offsets = [0, 176], sizes = [32, 16], strides = [1, 1]} : vector<32x192xf32> to vector<32x16xf32>
    %141 = vector.shape_cast %140 : vector<32x16xf32> to vector<2x16x16xf32>
    "tpu.trace_start"() <{level = 10 : i32, message = "bnd,bmd->bnm"}> : () -> ()
    %cst_41 = arith.constant dense<0.000000e+00> : vector<2x16x16xf32>
    %142 = tpu.matmul %137, %139, %cst_41 {dimension_numbers = #tpu.dot_dimension_numbers<[2], [2], [1], [1], [0, 0, 0, 1, 1, 1], [0], [0]>} : vector<2x16x16xf32>, vector<2x16x16xf32>, vector<2x16x16xf32> -> vector<2x16x16xf32>
    "tpu.trace_stop"() : () -> ()
    %cst_42 = arith.constant 2.500000e-01 : f32
    %143 = vector.broadcast %cst_42 : f32 to vector<2x16x16xf32>
    %144 = arith.mulf %142, %143 : vector<2x16x16xf32>
    %cst_43 = arith.constant dense<0xFF800000> : vector<2x16xf32>
    %145 = vector.multi_reduction <maximumf>, %144, %cst_43 [2] : vector<2x16x16xf32> to vector<2x16xf32>
    %146 = vector.shape_cast %145 : vector<2x16xf32> to vector<2x16x1xf32>
    %147 = vector.broadcast %146 : vector<2x16x1xf32> to vector<2x16x16xf32>
    %148 = arith.subf %144, %147 : vector<2x16x16xf32>
    %149 = math.exp %148 : vector<2x16x16xf32>
    %cst_44 = arith.constant dense<0.000000e+00> : vector<2x16xf32>
    %150 = vector.multi_reduction <add>, %149, %cst_44 [2] : vector<2x16x16xf32> to vector<2x16xf32>
    %151 = vector.shape_cast %150 : vector<2x16xf32> to vector<2x16x1xf32>
    %152 = tpu.reciprocal %151 {approx = true} : vector<2x16x1xf32> -> vector<2x16x1xf32>
    %153 = vector.broadcast %152 : vector<2x16x1xf32> to vector<2x16x16xf32>
    %154 = arith.mulf %149, %153 : vector<2x16x16xf32>
    "tpu.trace_start"() <{level = 10 : i32, message = "bnm,bmd->bnd"}> : () -> ()
    %cst_45 = arith.constant dense<0.000000e+00> : vector<2x16x16xf32>
    %155 = tpu.matmul %154, %141, %cst_45 {dimension_numbers = #tpu.dot_dimension_numbers<[2], [1], [1], [2], [0, 0, 0, 1, 1, 2], [0], [0]>} : vector<2x16x16xf32>, vector<2x16x16xf32>, vector<2x16x16xf32> -> vector<2x16x16xf32>
    "tpu.trace_stop"() : () -> ()
    %156 = vector.shape_cast %155 : vector<2x16x16xf32> to vector<32x16xf32>
    %157 = tpu.concatenate %93, %114, %135, %156 in 1 : vector<32x16xf32>, vector<32x16xf32>, vector<32x16xf32>, vector<32x16xf32> -> vector<32x64xf32>
    %c0_46 = arith.constant 0 : index
    %c0_47 = arith.constant 0 : index
    %158 = vector.load %arg6[%c0_46, %c0_47] : memref<64x32xf32, #tpu.memory_space<vmem>>, vector<64x32xf32>
    %cst_48 = arith.constant dense<0.000000e+00> : vector<32x32xf32>
    %159 = tpu.matmul %157, %158, %cst_48 {dimension_numbers = #tpu.dot_dimension_numbers<[1], [0], [0], [1], [0, 0, 1, 1], [], []>} : vector<32x64xf32>, vector<64x32xf32>, vector<32x32xf32> -> vector<32x32xf32>
    %160 = vector.extract_strided_slice %0 {offsets = [5, 0], sizes = [1, 32], strides = [1, 1]} : vector<14x32xf32> to vector<1x32xf32>
    %161 = vector.broadcast %160 : vector<1x32xf32> to vector<32x32xf32>
    %162 = arith.addf %159, %161 : vector<32x32xf32>
    %163 = arith.addf %162, %46 : vector<32x32xf32>
    %164 = vector.extract_strided_slice %0 {offsets = [6, 0], sizes = [1, 32], strides = [1, 1]} : vector<14x32xf32> to vector<1x32xf32>
    %165 = vector.extract_strided_slice %0 {offsets = [7, 0], sizes = [1, 32], strides = [1, 1]} : vector<14x32xf32> to vector<1x32xf32>
    %cst_49 = arith.constant dense<0.000000e+00> : vector<32xf32>
    %166 = vector.multi_reduction <add>, %163, %cst_49 [1] : vector<32x32xf32> to vector<32xf32>
    %167 = vector.shape_cast %166 : vector<32xf32> to vector<32x1xf32>
    %cst_50 = arith.constant 3.200000e+01 : f32
    %168 = vector.broadcast %cst_50 : f32 to vector<32x1xf32>
    %169 = arith.divf %167, %168 : vector<32x1xf32>
    %170 = vector.broadcast %169 : vector<32x1xf32> to vector<32x32xf32>
    %171 = arith.subf %163, %170 : vector<32x32xf32>
    %172 = arith.mulf %171, %171 : vector<32x32xf32>
    %cst_51 = arith.constant dense<0.000000e+00> : vector<32xf32>
    %173 = vector.multi_reduction <add>, %172, %cst_51 [1] : vector<32x32xf32> to vector<32xf32>
    %174 = vector.shape_cast %173 : vector<32xf32> to vector<32x1xf32>
    %cst_52 = arith.constant 3.200000e+01 : f32
    %175 = vector.broadcast %cst_52 : f32 to vector<32x1xf32>
    %176 = arith.divf %174, %175 : vector<32x1xf32>
    %177 = vector.broadcast %169 : vector<32x1xf32> to vector<32x32xf32>
    %178 = arith.subf %163, %177 : vector<32x32xf32>
    %cst_53 = arith.constant 9.99999974E-6 : f32
    %179 = vector.broadcast %cst_53 : f32 to vector<32x1xf32>
    %180 = arith.addf %176, %179 : vector<32x1xf32>
    %181 = math.rsqrt %180 : vector<32x1xf32>
    %182 = vector.broadcast %181 : vector<32x1xf32> to vector<32x32xf32>
    %183 = arith.mulf %178, %182 : vector<32x32xf32>
    %184 = vector.broadcast %164 : vector<1x32xf32> to vector<32x32xf32>
    %185 = arith.mulf %183, %184 : vector<32x32xf32>
    %186 = vector.broadcast %165 : vector<1x32xf32> to vector<32x32xf32>
    %187 = arith.addf %185, %186 : vector<32x32xf32>
    %c0_54 = arith.constant 0 : index
    %c0_55 = arith.constant 0 : index
    %188 = vector.load %arg7[%c0_54, %c0_55] : memref<32x128xf32, #tpu.memory_space<vmem>>, vector<32x128xf32>
    %cst_56 = arith.constant dense<0.000000e+00> : vector<32x128xf32>
    %189 = tpu.matmul %187, %188, %cst_56 {dimension_numbers = #tpu.dot_dimension_numbers<[1], [0], [0], [1], [0, 0, 1, 1], [], []>} : vector<32x32xf32>, vector<32x128xf32>, vector<32x128xf32> -> vector<32x128xf32>
    %190 = vector.extract_strided_slice %1 {offsets = [1, 0], sizes = [1, 128], strides = [1, 1]} : vector<3x128xf32> to vector<1x128xf32>
    %191 = vector.broadcast %190 : vector<1x128xf32> to vector<32x128xf32>
    %192 = arith.addf %189, %191 : vector<32x128xf32>
    %193 = vector.extract_strided_slice %192 {offsets = [0, 0], sizes = [32, 64], strides = [1, 1]} : vector<32x128xf32> to vector<32x64xf32>
    %194 = vector.extract_strided_slice %192 {offsets = [0, 64], sizes = [32, 64], strides = [1, 1]} : vector<32x128xf32> to vector<32x64xf32>
    %195 = arith.negf %194 : vector<32x64xf32>
    %196 = math.exp %195 : vector<32x64xf32>
    %cst_57 = arith.constant 1.000000e+00 : f32
    %197 = vector.broadcast %cst_57 : f32 to vector<32x64xf32>
    %198 = arith.addf %197, %196 : vector<32x64xf32>
    %199 = arith.divf %197, %198 : vector<32x64xf32>
    %200 = arith.mulf %193, %199 : vector<32x64xf32>
    %c0_58 = arith.constant 0 : index
    %c0_59 = arith.constant 0 : index
    %201 = vector.load %arg8[%c0_58, %c0_59] : memref<7x64xf32, #tpu.memory_space<vmem>>, vector<7x64xf32>
    %202 = vector.shape_cast %201 : vector<7x64xf32> to vector<7x1x64xf32>
    %203 = vector.shape_cast %200 : vector<32x64xf32> to vector<1x32x64xf32>
    %204 = vector.broadcast %202 : vector<7x1x64xf32> to vector<7x32x64xf32>
    %205 = vector.broadcast %203 : vector<1x32x64xf32> to vector<7x32x64xf32>
    %206 = arith.mulf %204, %205 : vector<7x32x64xf32>
    %207 = vector.shape_cast %206 : vector<7x32x64xf32> to vector<224x64xf32>
    %c0_60 = arith.constant 0 : index
    %c0_61 = arith.constant 0 : index
    %208 = vector.load %arg10[%c0_60, %c0_61] : memref<32x224xf32, #tpu.memory_space<vmem>>, vector<32x224xf32>
    %cst_62 = arith.constant dense<0.000000e+00> : vector<32x64xf32>
    %209 = tpu.matmul %208, %207, %cst_62 {dimension_numbers = #tpu.dot_dimension_numbers<[1], [0], [0], [1], [0, 0, 1, 1], [], []>} : vector<32x224xf32>, vector<224x64xf32>, vector<32x64xf32> -> vector<32x64xf32>
    %c0_63 = arith.constant 0 : index
    %c0_64 = arith.constant 0 : index
    %210 = vector.load %arg9[%c0_63, %c0_64] : memref<1x64xf32, #tpu.memory_space<vmem>>, vector<1x64xf32>
    %211 = vector.broadcast %210 : vector<1x64xf32> to vector<32x64xf32>
    %212 = arith.addf %209, %211 : vector<32x64xf32>
    %213 = arith.negf %212 : vector<32x64xf32>
    %214 = math.exp %213 : vector<32x64xf32>
    %cst_65 = arith.constant 1.000000e+00 : f32
    %215 = vector.broadcast %cst_65 : f32 to vector<32x64xf32>
    %216 = arith.addf %215, %214 : vector<32x64xf32>
    %217 = arith.divf %215, %216 : vector<32x64xf32>
    %218 = arith.mulf %212, %217 : vector<32x64xf32>
    %c0_66 = arith.constant 0 : index
    %c0_67 = arith.constant 0 : index
    %219 = vector.load %arg11[%c0_66, %c0_67] : memref<64x32xf32, #tpu.memory_space<vmem>>, vector<64x32xf32>
    %cst_68 = arith.constant dense<0.000000e+00> : vector<32x32xf32>
    %220 = tpu.matmul %218, %219, %cst_68 {dimension_numbers = #tpu.dot_dimension_numbers<[1], [0], [0], [1], [0, 0, 1, 1], [], []>} : vector<32x64xf32>, vector<64x32xf32>, vector<32x32xf32> -> vector<32x32xf32>
    %221 = vector.extract_strided_slice %0 {offsets = [8, 0], sizes = [1, 32], strides = [1, 1]} : vector<14x32xf32> to vector<1x32xf32>
    %222 = vector.broadcast %221 : vector<1x32xf32> to vector<32x32xf32>
    %223 = arith.addf %220, %222 : vector<32x32xf32>
    %224 = arith.addf %223, %163 : vector<32x32xf32>
    %225 = vector.extract_strided_slice %0 {offsets = [9, 0], sizes = [1, 32], strides = [1, 1]} : vector<14x32xf32> to vector<1x32xf32>
    %226 = vector.extract_strided_slice %0 {offsets = [10, 0], sizes = [1, 32], strides = [1, 1]} : vector<14x32xf32> to vector<1x32xf32>
    %c0_69 = arith.constant 0 : index
    %c0_70 = arith.constant 0 : index
    %227 = vector.load %arg12[%c0_69, %c0_70] : memref<32x128xf32, #tpu.memory_space<vmem>>, vector<32x128xf32>
    %228 = vector.extract_strided_slice %1 {offsets = [2, 0], sizes = [1, 128], strides = [1, 1]} : vector<3x128xf32> to vector<1x128xf32>
    %c0_71 = arith.constant 0 : index
    %c0_72 = arith.constant 0 : index
    %229 = vector.load %arg13[%c0_71, %c0_72] : memref<128x32xf32, #tpu.memory_space<vmem>>, vector<128x32xf32>
    %230 = vector.extract_strided_slice %0 {offsets = [11, 0], sizes = [1, 32], strides = [1, 1]} : vector<14x32xf32> to vector<1x32xf32>
    %cst_73 = arith.constant dense<0.000000e+00> : vector<32xf32>
    %231 = vector.multi_reduction <add>, %224, %cst_73 [1] : vector<32x32xf32> to vector<32xf32>
    %232 = vector.shape_cast %231 : vector<32xf32> to vector<32x1xf32>
    %cst_74 = arith.constant 3.200000e+01 : f32
    %233 = vector.broadcast %cst_74 : f32 to vector<32x1xf32>
    %234 = arith.divf %232, %233 : vector<32x1xf32>
    %235 = vector.broadcast %234 : vector<32x1xf32> to vector<32x32xf32>
    %236 = arith.subf %224, %235 : vector<32x32xf32>
    %237 = arith.mulf %236, %236 : vector<32x32xf32>
    %cst_75 = arith.constant dense<0.000000e+00> : vector<32xf32>
    %238 = vector.multi_reduction <add>, %237, %cst_75 [1] : vector<32x32xf32> to vector<32xf32>
    %239 = vector.shape_cast %238 : vector<32xf32> to vector<32x1xf32>
    %cst_76 = arith.constant 3.200000e+01 : f32
    %240 = vector.broadcast %cst_76 : f32 to vector<32x1xf32>
    %241 = arith.divf %239, %240 : vector<32x1xf32>
    %242 = vector.broadcast %234 : vector<32x1xf32> to vector<32x32xf32>
    %243 = arith.subf %224, %242 : vector<32x32xf32>
    %cst_77 = arith.constant 9.99999974E-6 : f32
    %244 = vector.broadcast %cst_77 : f32 to vector<32x1xf32>
    %245 = arith.addf %241, %244 : vector<32x1xf32>
    %246 = math.rsqrt %245 : vector<32x1xf32>
    %247 = vector.broadcast %246 : vector<32x1xf32> to vector<32x32xf32>
    %248 = arith.mulf %243, %247 : vector<32x32xf32>
    %249 = vector.broadcast %225 : vector<1x32xf32> to vector<32x32xf32>
    %250 = arith.mulf %248, %249 : vector<32x32xf32>
    %251 = vector.broadcast %226 : vector<1x32xf32> to vector<32x32xf32>
    %252 = arith.addf %250, %251 : vector<32x32xf32>
    %cst_78 = arith.constant dense<0.000000e+00> : vector<32x128xf32>
    %253 = tpu.matmul %252, %227, %cst_78 {dimension_numbers = #tpu.dot_dimension_numbers<[1], [0], [0], [1], [0, 0, 1, 1], [], []>} : vector<32x32xf32>, vector<32x128xf32>, vector<32x128xf32> -> vector<32x128xf32>
    %254 = vector.broadcast %228 : vector<1x128xf32> to vector<32x128xf32>
    %255 = arith.addf %253, %254 : vector<32x128xf32>
    %256 = arith.negf %255 : vector<32x128xf32>
    %257 = math.exp %256 : vector<32x128xf32>
    %cst_79 = arith.constant 1.000000e+00 : f32
    %258 = vector.broadcast %cst_79 : f32 to vector<32x128xf32>
    %259 = arith.addf %258, %257 : vector<32x128xf32>
    %260 = arith.divf %258, %259 : vector<32x128xf32>
    %261 = arith.mulf %255, %260 : vector<32x128xf32>
    %cst_80 = arith.constant dense<0.000000e+00> : vector<32x32xf32>
    %262 = tpu.matmul %261, %229, %cst_80 {dimension_numbers = #tpu.dot_dimension_numbers<[1], [0], [0], [1], [0, 0, 1, 1], [], []>} : vector<32x128xf32>, vector<128x32xf32>, vector<32x32xf32> -> vector<32x32xf32>
    %263 = vector.broadcast %230 : vector<1x32xf32> to vector<32x32xf32>
    %264 = arith.addf %262, %263 : vector<32x32xf32>
    %cst_81 = arith.constant 5.000000e-01 : f32
    %265 = vector.broadcast %cst_81 : f32 to vector<32x32xf32>
    %266 = arith.mulf %265, %264 : vector<32x32xf32>
    %267 = arith.addf %266, %224 : vector<32x32xf32>
    %268 = vector.extract_strided_slice %0 {offsets = [12, 0], sizes = [1, 32], strides = [1, 1]} : vector<14x32xf32> to vector<1x32xf32>
    %269 = vector.extract_strided_slice %0 {offsets = [13, 0], sizes = [1, 32], strides = [1, 1]} : vector<14x32xf32> to vector<1x32xf32>
    %cst_82 = arith.constant dense<0.000000e+00> : vector<32xf32>
    %270 = vector.multi_reduction <add>, %267, %cst_82 [1] : vector<32x32xf32> to vector<32xf32>
    %271 = vector.shape_cast %270 : vector<32xf32> to vector<32x1xf32>
    %cst_83 = arith.constant 3.200000e+01 : f32
    %272 = vector.broadcast %cst_83 : f32 to vector<32x1xf32>
    %273 = arith.divf %271, %272 : vector<32x1xf32>
    %274 = vector.broadcast %273 : vector<32x1xf32> to vector<32x32xf32>
    %275 = arith.subf %267, %274 : vector<32x32xf32>
    %276 = arith.mulf %275, %275 : vector<32x32xf32>
    %cst_84 = arith.constant dense<0.000000e+00> : vector<32xf32>
    %277 = vector.multi_reduction <add>, %276, %cst_84 [1] : vector<32x32xf32> to vector<32xf32>
    %278 = vector.shape_cast %277 : vector<32xf32> to vector<32x1xf32>
    %cst_85 = arith.constant 3.200000e+01 : f32
    %279 = vector.broadcast %cst_85 : f32 to vector<32x1xf32>
    %280 = arith.divf %278, %279 : vector<32x1xf32>
    %281 = vector.broadcast %273 : vector<32x1xf32> to vector<32x32xf32>
    %282 = arith.subf %267, %281 : vector<32x32xf32>
    %cst_86 = arith.constant 9.99999974E-6 : f32
    %283 = vector.broadcast %cst_86 : f32 to vector<32x1xf32>
    %284 = arith.addf %280, %283 : vector<32x1xf32>
    %285 = math.rsqrt %284 : vector<32x1xf32>
    %286 = vector.broadcast %285 : vector<32x1xf32> to vector<32x32xf32>
    %287 = arith.mulf %282, %286 : vector<32x32xf32>
    %288 = vector.broadcast %268 : vector<1x32xf32> to vector<32x32xf32>
    %289 = arith.mulf %287, %288 : vector<32x32xf32>
    %290 = vector.broadcast %269 : vector<1x32xf32> to vector<32x32xf32>
    %291 = arith.addf %289, %290 : vector<32x32xf32>
    %292 = vector.shape_cast %291 : vector<32x32xf32> to vector<2x16x32xf32>
    %c0_87 = arith.constant 0 : index
    %c0_88 = arith.constant 0 : index
    %c0_89 = arith.constant 0 : index
    %293 = vector.load %arg14[%c0_87, %c0_88, %c0_89] : memref<2x16x32xf32, #tpu.memory_space<vmem>>, vector<2x16x32xf32>
    tpu.vector_store %arg14[%c0_87, %c0_88, %c0_89], %292 {strides = array<i32>} : memref<2x16x32xf32, #tpu.memory_space<vmem>>, vector<2x16x32xf32>,
    return
  }
}

</mosaic_0001>

<llo_original>
// kernel: conformer_block.1
$region0: #{conformer_block.1}
  #allocation0 [shape = 'u32[]', space=smem, size = 0x4, offset = 0x4, fixed_abs, tag = 'smem constant byte address 0x4 - core index']
  #allocation1 [shape = 'u32[144,128]{1,0:T(1,128)}', space=vmem, size = 0x12000, scoped, tag = 'internal scratch']
  %s0 = inlined_call_operand.vmem [shape: f32[2,16,32], index: 0, kind: input, shape index: {}]
  %s1 = inlined_call_operand.vmem [shape: f32[14,32], index: 1, kind: input, shape index: {}]
  %s2 = inlined_call_operand.vmem [shape: f32[3,128], index: 2, kind: input, shape index: {}]
  %s3 = inlined_call_operand.vmem [shape: f32[32,128], index: 3, kind: input, shape index: {}]
  %s4 = inlined_call_operand.vmem [shape: f32[128,32], index: 4, kind: input, shape index: {}]
  %s5 = inlined_call_operand.vmem [shape: f32[32,192], index: 5, kind: input, shape index: {}]
  %s6 = inlined_call_operand.vmem [shape: f32[64,32], index: 6, kind: input, shape index: {}]
  %s7 = inlined_call_operand.vmem [shape: f32[32,128], index: 7, kind: input, shape index: {}]
  %s8 = inlined_call_operand.vmem [shape: f32[7,64], index: 8, kind: input, shape index: {}]
  %s9 = inlined_call_operand.vmem [shape: f32[1,64], index: 9, kind: input, shape index: {}]
  %s10 = inlined_call_operand.vmem [shape: f32[32,224], index: 10, kind: input, shape index: {}]
  %s11 = inlined_call_operand.vmem [shape: f32[64,32], index: 11, kind: input, shape index: {}]
  %s12 = inlined_call_operand.vmem [shape: f32[32,128], index: 12, kind: input, shape index: {}]
  %s13 = inlined_call_operand.vmem [shape: f32[128,32], index: 13, kind: input, shape index: {}]
  %s14 = inlined_call_operand.hbm [shape: f32[2,16,32], index: 14, kind: output, shape index: {}]
  %s15 = sld [smem:[#allocation0]]
  $region66: #{conformer_block.1} parent=0
    _
  %s17 = ssub.s32 1, %s15
  %s18 = scalar_select 0, %s17, %s15
  $region1: #{conformer_block.1} parent=0
    #allocation2 [shape = 'u8[16384]{0}', space=vmem, size = 0x4000, scoped, tag = 'output window, operand 0, single buffered']
    #allocation3 [shape = 's32[1]{0}', space=sflag, size = 0x4, scoped, tag = 'scoped memory for conformer_block.1']
    %19 = vsyncpa [#allocation3], 0
    // Predicated region
    $region2: #{conformer_block.1} parent=1 // pred_check
      _
    $region3: #{conformer_block.1} parent=1 // pred_check_branch
      %21 = sbr.rel (0) target = $region5
    $region4: #{conformer_block.1} parent=1 // pred_region
      _
    $region5: #{conformer_block.1} parent=1 // pred_fallthru
      _
    // Predicated region
    $region6: #{conformer_block.1} parent=1 // pred_check
      _
    $region7: #{conformer_block.1} parent=1 // pred_check_branch
      %23 = sbr.rel (0) target = $region9
    $region8: #{conformer_block.1} parent=1 // pred_region
      _
    $region9: #{conformer_block.1} parent=1 // pred_fallthru
      _
    // Predicated region
    $region10: #{conformer_block.1} parent=1 // pred_check
      _
    $region11: #{conformer_block.1} parent=1 // pred_check_branch
      %25 = sbr.rel (0) target = $region13
    $region12: #{conformer_block.1} parent=1 // pred_region
      _
    $region13: #{conformer_block.1} parent=1 // pred_fallthru
      _
    // Predicated region
    $region14: #{conformer_block.1} parent=1 // pred_check
      _
    $region15: #{conformer_block.1} parent=1 // pred_check_branch
      %27 = sbr.rel (0) target = $region17
    $region16: #{conformer_block.1} parent=1 // pred_region
      _
    $region17: #{conformer_block.1} parent=1 // pred_fallthru
      _
    // Predicated region
    $region18: #{conformer_block.1} parent=1 // pred_check
      _
    $region19: #{conformer_block.1} parent=1 // pred_check_branch
      %29 = sbr.rel (0) target = $region21
    $region20: #{conformer_block.1} parent=1 // pred_region
      _
    $region21: #{conformer_block.1} parent=1 // pred_fallthru
      _
    // Predicated region
    $region22: #{conformer_block.1} parent=1 // pred_check
      _
    $region23: #{conformer_block.1} parent=1 // pred_check_branch
      %31 = sbr.rel (0) target = $region25
    $region24: #{conformer_block.1} parent=1 // pred_region
      _
    $region25: #{conformer_block.1} parent=1 // pred_fallthru
      _
    // Predicated region
    $region26: #{conformer_block.1} parent=1 // pred_check
      _
    $region27: #{conformer_block.1} parent=1 // pred_check_branch
      %33 = sbr.rel (0) target = $region29
    $region28: #{conformer_block.1} parent=1 // pred_region
      _
    $region29: #{conformer_block.1} parent=1 // pred_fallthru
      _
    // Predicated region
    $region30: #{conformer_block.1} parent=1 // pred_check
      _
    $region31: #{conformer_block.1} parent=1 // pred_check_branch
      %35 = sbr.rel (0) target = $region33
    $region32: #{conformer_block.1} parent=1 // pred_region
      _
    $region33: #{conformer_block.1} parent=1 // pred_fallthru
      _
    // Predicated region
    $region34: #{conformer_block.1} parent=1 // pred_check
      _
    $region35: #{conformer_block.1} parent=1 // pred_check_branch
      %37 = sbr.rel (0) target = $region37
    $region36: #{conformer_block.1} parent=1 // pred_region
      _
    $region37: #{conformer_block.1} parent=1 // pred_fallthru
      _
    // Predicated region
    $region38: #{conformer_block.1} parent=1 // pred_check
      _
    $region39: #{conformer_block.1} parent=1 // pred_check_branch
      %39 = sbr.rel (0) target = $region41
    $region40: #{conformer_block.1} parent=1 // pred_region
      _
    $region41: #{conformer_block.1} parent=1 // pred_fallthru
      _
    // Predicated region
    $region42: #{conformer_block.1} parent=1 // pred_check
      _
    $region43: #{conformer_block.1} parent=1 // pred_check_branch
      %41 = sbr.rel (0) target = $region45
    $region44: #{conformer_block.1} parent=1 // pred_region
      _
    $region45: #{conformer_block.1} parent=1 // pred_fallthru
      _
    // Predicated region
    $region46: #{conformer_block.1} parent=1 // pred_check
      _
    $region47: #{conformer_block.1} parent=1 // pred_check_branch
      %43 = sbr.rel (0) target = $region49
    $region48: #{conformer_block.1} parent=1 // pred_region
      _
    $region49: #{conformer_block.1} parent=1 // pred_fallthru
      _
    // Predicated region
    $region50: #{conformer_block.1} parent=1 // pred_check
      _
    $region51: #{conformer_block.1} parent=1 // pred_check_branch
      %45 = sbr.rel (0) target = $region53
    $region52: #{conformer_block.1} parent=1 // pred_region
      _
    $region53: #{conformer_block.1} parent=1 // pred_fallthru
      _
    // Predicated region
    $region54: #{conformer_block.1} parent=1 // pred_check
      _
    $region55: #{conformer_block.1} parent=1 // pred_check_branch
      %47 = sbr.rel (0) target = $region57
    $region56: #{conformer_block.1} parent=1 // pred_region
      _
    $region57: #{conformer_block.1} parent=1 // pred_fallthru
      _
    %v48 = vld [vmem:[%s1] sm:$0xff]
    %v49 = vld [vmem:[%s1 + $0x8] sm:$0x3f]
    %v50 = vld [vmem:[%s2] sm:$0x7]
    %v51 = vld [vmem:[%s0] sm:$0xff]
    %v52 = vld [vmem:[%s0 + $0x8] sm:$0xff]
    %v53 = vld [vmem:[%s0 + $0x10] sm:$0xff]
    %v54 = vld [vmem:[%s0 + $0x18] sm:$0xff]
    %v55 = vld [vmem:[%s3] sm:$0xff]
    %v56 = vld [vmem:[%s3 + $0x8] sm:$0xff]
    %v57 = vld [vmem:[%s3 + $0x10] sm:$0xff]
    %v58 = vld [vmem:[%s3 + $0x18] sm:$0xff]
    %v59 = vld [vmem:[%s4] sm:$0xff]
    %v60 = vld [vmem:[%s4 + $0x8] sm:$0xff]
    %v61 = vld [vmem:[%s4 + $0x10] sm:$0xff]
    %v62 = vld [vmem:[%s4 + $0x18] sm:$0xff]
    %v63 = vld [vmem:[%s4 + $0x20] sm:$0xff]
    %v64 = vld [vmem:[%s4 + $0x28] sm:$0xff]
    %v65 = vld [vmem:[%s4 + $0x30] sm:$0xff]
    %v66 = vld [vmem:[%s4 + $0x38] sm:$0xff]
    %v67 = vld [vmem:[%s4 + $0x40] sm:$0xff]
    %v68 = vld [vmem:[%s4 + $0x48] sm:$0xff]
    %v69 = vld [vmem:[%s4 + $0x50] sm:$0xff]
    %v70 = vld [vmem:[%s4 + $0x58] sm:$0xff]
    %v71 = vld [vmem:[%s4 + $0x60] sm:$0xff]
    %v72 = vld [vmem:[%s4 + $0x68] sm:$0xff]
    %v73 = vld [vmem:[%s4 + $0x70] sm:$0xff]
    %v74 = vld [vmem:[%s4 + $0x78] sm:$0xff]
    %vm75 = vcmask 261120
    %v76 = vsel %vm75, %v51, 0.0
    %77 = vadd.xlane.f32.xlu0 %v76
    %v78 = vpop.xlane.xlu0 %77
    %v79 = vsel %vm75, %v52, 0.0
    %80 = vadd.xlane.f32.xlu0 %v79
    %v81 = vpop.xlane.xlu0 %80
    %v82 = vsel %vm75, %v53, 0.0
    %83 = vadd.xlane.f32.xlu0 %v82
    %v84 = vpop.xlane.xlu0 %83
    %v85 = vsel %vm75, %v54, 0.0
    %86 = vadd.xlane.f32.xlu0 %v85
    %v87 = vpop.xlane.xlu0 %86
    %v88 = vrcp.pop 32.0
    %v89 = vmul.f32 %v78, %v88
    %v90 = vmul.f32 %v81, %v88
    %v91 = vmul.f32 %v84, %v88
    %v92 = vmul.f32 %v87, %v88
    %v93 = vsub.f32 %v51, %v89
    %v94 = vsub.f32 %v52, %v90
    %v95 = vsub.f32 %v53, %v91
    %v96 = vsub.f32 %v54, %v92
    %v97 = vmul.f32 %v93, %v93
    %v98 = vmul.f32 %v94, %v94
    %v99 = vmul.f32 %v95, %v95
    %v100 = vmul.f32 %v96, %v96
    %v101 = vsel %vm75, %v97, 0.0
    %102 = vadd.xlane.f32.xlu0 %v101
    %v103 = vpop.xlane.xlu0 %102
    %v104 = vsel %vm75, %v98, 0.0
    %105 = vadd.xlane.f32.xlu0 %v104
    %v106 = vpop.xlane.xlu0 %105
    %v107 = vsel %vm75, %v99, 0.0
    %108 = vadd.xlane.f32.xlu0 %v107
    %v109 = vpop.xlane.xlu0 %108
    %v110 = vsel %vm75, %v100, 0.0
    %111 = vadd.xlane.f32.xlu0 %v110
    %v112 = vpop.xlane.xlu0 %111
    %v113 = vmul.f32 %v103, %v88
    %v114 = vmul.f32 %v106, %v88
    %v115 = vmul.f32 %v109, %v88
    %v116 = vmul.f32 %v112, %v88
    %v117 = vadd.f32 %v113, 1e-05
    %v118 = vadd.f32 %v114, 1e-05
    %v119 = vadd.f32 %v115, 1e-05
    %v120 = vadd.f32 %v116, 1e-05
    %v121 = vrsqrt.pop %v117
    %v122 = vrsqrt.pop %v118
    %v123 = vrsqrt.pop %v119
    %v124 = vrsqrt.pop %v120
    %v125 = vmul.f32 %v93, %v121
    %v126 = vmul.f32 %v94, %v122
    %v127 = vmul.f32 %v95, %v123
    %v128 = vmul.f32 %v96, %v124
    %v129 = vlaneseq
    %v130 = vshrl.u32 %v129, 7
    %v131 = vsub.s32 0, %v130
    %v132 = vrot.slane %v48, %v131
    %v133 = vmul.f32 %v125, %v132
    %v134 = vmul.f32 %v126, %v132
    %v135 = vmul.f32 %v127, %v132
    %v136 = vmul.f32 %v128, %v132
    %v137 = vlaneseq
    %v138 = vshrl.u32 %v137, 7
    %v139 = vsub.s32 1, %v138
    %v140 = vrot.slane %v48, %v139
    %v141 = vadd.f32 %v133, %v140
    %v142 = vadd.f32 %v134, %v140
    %v143 = vadd.f32 %v135, %v140
    %v144 = vadd.f32 %v136, %v140
    %v145 = vlaneseq
    %v146 = vshrl.u32 %v145, 7
    %v147 = vsub.s32 0, %v146
    %v148 = vrot.slane %v50, %v147
    %v150 = vsel %vm75, %v141, 0
    %v153 = vsel %vm75, %v142, 0
    %v156 = vsel %vm75, %v143, 0
    %v159 = vsel %vm75, %v144, 0
    %161 = vmatprep.subr.mxu0 0.0
    %162 = vmatpush1.msra.mxu0 %v55
    %163 = vmatprep.subr.mxu0 0.0
    %164 = vmatpush1.msra.mxu0 %v56
    %165 = vmatprep.subr.mxu0 0.0
    %166 = vmatpush1.msra.mxu0 %v57
    %167 = vmatprep.subr.mxu0 0.0
    %168 = vmatpush1.msra.mxu0 %v58
    %169 = vmatprep.subr.mxu0 0.0
    %170 = vmatpush1.msra.mxu0 0.0
    %171 = vmatprep.subr.mxu0 0.0
    %172 = vmatpush1.msra.mxu0 0.0
    %173 = vmatprep.subr.mxu0 0.0
    %174 = vmatpush1.msra.mxu0 0.0
    %175 = vmatprep.subr.mxu0 0.0
    %176 = vmatpush1.msra.mxu0 0.0
    %177 = vmatprep.subr.mxu0 0.0
    %178 = vmatpush1.msra.mxu0 0.0
    %179 = vmatprep.subr.mxu0 0.0
    %180 = vmatpush1.msra.mxu0 0.0
    %181 = vmatprep.subr.mxu0 0.0
    %182 = vmatpush1.msra.mxu0 0.0
    %183 = vmatprep.subr.mxu0 0.0
    %184 = vmatpush1.msra.mxu0 0.0
    %185 = vmatprep.subr.mxu0 0.0
    %186 = vmatpush1.msra.mxu0 0.0
    %187 = vmatprep.subr.mxu0 0.0
    %188 = vmatpush1.msra.mxu0 0.0
    %189 = vmatprep.subr.mxu0 0.0
    %190 = vmatpush1.msra.mxu0 0.0
    %191 = vmatprep.subr.mxu0 0.0
    %192 = vmatpush1.msra.mxu0 0.0
    %193 = vmatprep.subr.mxu0 0.0
    %194 = vmatpush1.msra.mxu0 0.0
    %195 = vmatprep.subr.mxu0 0.0
    %196 = vmatpush1.msra.mxu0 0.0
    %197 = vmatprep.subr.mxu0 0.0
    %198 = vmatpush1.msra.mxu0 0.0
    %199 = vmatprep.subr.mxu0 0.0
    %200 = vmatpush1.msra.mxu0 0.0
    %201 = vmatprep.subr.mxu0 0.0
    %202 = vmatpush1.msra.mxu0 0.0
    %203 = vmatprep.subr.mxu0 0.0
    %204 = vmatpush1.msra.mxu0 0.0
    %205 = vmatprep.subr.mxu0 0.0
    %206 = vmatpush1.msra.mxu0 0.0
    %207 = vmatprep.subr.mxu0 0.0
    %208 = vmatpush1.msra.mxu0 0.0
    %209 = vmatprep.subr.mxu0 0.0
    %210 = vmatpush1.msra.mxu0 0.0
    %211 = vmatprep.subr.mxu0 0.0
    %212 = vmatpush1.msra.mxu0 0.0
    %213 = vmatprep.subr.mxu0 0.0
    %214 = vmatpush1.msra.mxu0 0.0
    %215 = vmatprep.subr.mxu0 0.0
    %216 = vmatpush1.msra.mxu0 0.0
    %217 = vmatprep.subr.mxu0 0.0
    %218 = vmatpush1.msra.mxu0 0.0
    %219 = vmatprep.subr.mxu0 0.0
    %220 = vmatpush1.msra.mxu0 0.0
    %221 = vmatprep.subr.mxu0 0.0
    %222 = vmatpush1.msra.mxu0 0.0
    %223 = vmatprep.subr.mxu0 0.0
    %224 = vmatpush1.msra.mxu0 0.0
    %225 = vmatprep.mubr.f32.mxu0 0.0
    %226 = vmatmul.mubr.f32.gmra.mrb[0].mxu0 %v150
    %v227 = vpop.f32.mrb[0].mxu0
    %v228 = vadd.f32 %v148, %v227
    %v229 = vpop.f32.mrb[0].mxu0
    %230 = vmatprep.mubr.f32.mxu0 0.0
    %231 = vmatmul.mubr.f32.gmra.mrb[0].mxu0 %v153
    %v232 = vpop.f32.mrb[0].mxu0
    %v233 = vadd.f32 %v148, %v232
    %v234 = vpop.f32.mrb[0].mxu0
    %235 = vmatprep.mubr.f32.mxu0 0.0
    %236 = vmatmul.mubr.f32.gmra.mrb[0].mxu0 %v156
    %v237 = vpop.f32.mrb[0].mxu0
    %v238 = vadd.f32 %v148, %v237
    %v239 = vpop.f32.mrb[0].mxu0
    %240 = vmatprep.mubr.f32.mxu0 0.0
    %241 = vmatmul.mubr.f32.gmra.mrb[0].mxu0 %v159
    %v242 = vpop.f32.mrb[0].mxu0
    %v243 = vadd.f32 %v148, %v242
    %v244 = vpop.f32.mrb[0].mxu0
    %245 = vdwg.mxu0
    %v246 = vxor.u32 %v228, 2147483648
    %v247 = vxor.u32 %v233, 2147483648
    %v248 = vxor.u32 %v238, 2147483648
    %v249 = vxor.u32 %v243, 2147483648
    %v250 = vmul.f32 %v246, 1.442695
    %v251 = vpow.pop %v250
    %v252 = vmul.f32 %v247, 1.442695
    %v253 = vpow.pop %v252
    %v254 = vmul.f32 %v248, 1.442695
    %v255 = vpow.pop %v254
    %v256 = vmul.f32 %v249, 1.442695
    %v257 = vpow.pop %v256
    %v258 = vadd.f32 %v251, 1.0
    %v259 = vadd.f32 %v253, 1.0
    %v260 = vadd.f32 %v255, 1.0
    %v261 = vadd.f32 %v257, 1.0
    %v262 = vrcp.pop %v258
    %v263 = vmul.f32 1.0, %v262
    %v264 = vrcp.pop %v259
    %v265 = vmul.f32 1.0, %v264
    %v266 = vrcp.pop %v260
    %v267 = vmul.f32 1.0, %v266
    %v268 = vrcp.pop %v261
    %v269 = vmul.f32 1.0, %v268
    %v270 = vmul.f32 %v228, %v263
    %v271 = vmul.f32 %v233, %v265
    %v272 = vmul.f32 %v238, %v267
    %v273 = vmul.f32 %v243, %v269
    %v274 = vlaneseq
    %v275 = vshrl.u32 %v274, 7
    %v276 = vsub.s32 2, %v275
    %v277 = vrot.slane %v48, %v276
    %278 = vmatprep.subr.mxu0 0.0
    %279 = vmatpush1.msra.mxu0 %v59
    %280 = vmatprep.subr.mxu0 0.0
    %281 = vmatpush1.msra.mxu0 %v60
    %282 = vmatprep.subr.mxu0 0.0
    %283 = vmatpush1.msra.mxu0 %v61
    %284 = vmatprep.subr.mxu0 0.0
    %285 = vmatpush1.msra.mxu0 %v62
    %286 = vmatprep.subr.mxu0 0.0
    %287 = vmatpush1.msra.mxu0 %v63
    %288 = vmatprep.subr.mxu0 0.0
    %289 = vmatpush1.msra.mxu0 %v64
    %290 = vmatprep.subr.mxu0 0.0
    %291 = vmatpush1.msra.mxu0 %v65
    %292 = vmatprep.subr.mxu0 0.0
    %293 = vmatpush1.msra.mxu0 %v66
    %294 = vmatprep.subr.mxu0 0.0
    %295 = vmatpush1.msra.mxu0 %v67
    %296 = vmatprep.subr.mxu0 0.0
    %297 = vmatpush1.msra.mxu0 %v68
    %298 = vmatprep.subr.mxu0 0.0
    %299 = vmatpush1.msra.mxu0 %v69
    %300 = vmatprep.subr.mxu0 0.0
    %301 = vmatpush1.msra.mxu0 %v70
    %302 = vmatprep.subr.mxu0 0.0
    %303 = vmatpush1.msra.mxu0 %v71
    %304 = vmatprep.subr.mxu0 0.0
    %305 = vmatpush1.msra.mxu0 %v72
    %306 = vmatprep.subr.mxu0 0.0
    %307 = vmatpush1.msra.mxu0 %v73
    %308 = vmatprep.subr.mxu0 0.0
    %309 = vmatpush1.msra.mxu0 %v74
    %310 = vmatprep.subr.mxu0 0.0
    %311 = vmatpush1.msra.mxu0 0.0
    %312 = vmatprep.subr.mxu0 0.0
    %313 = vmatpush1.msra.mxu0 0.0
    %314 = vmatprep.subr.mxu0 0.0
    %315 = vmatpush1.msra.mxu0 0.0
    %316 = vmatprep.subr.mxu0 0.0
    %317 = vmatpush1.msra.mxu0 0.0
    %318 = vmatprep.subr.mxu0 0.0
    %319 = vmatpush1.msra.mxu0 0.0
    %320 = vmatprep.subr.mxu0 0.0
    %321 = vmatpush1.msra.mxu0 0.0
    %322 = vmatprep.subr.mxu0 0.0
    %323 = vmatpush1.msra.mxu0 0.0
    %324 = vmatprep.subr.mxu0 0.0
    %325 = vmatpush1.msra.mxu0 0.0
    %326 = vmatprep.subr.mxu0 0.0
    %327 = vmatpush1.msra.mxu0 0.0
    %328 = vmatprep.subr.mxu0 0.0
    %329 = vmatpush1.msra.mxu0 0.0
    %330 = vmatprep.subr.mxu0 0.0
    %331 = vmatpush1.msra.mxu0 0.0
    %332 = vmatprep.subr.mxu0 0.0
    %333 = vmatpush1.msra.mxu0 0.0
    %334 = vmatprep.subr.mxu0 0.0
    %335 = vmatpush1.msra.mxu0 0.0
    %336 = vmatprep.subr.mxu0 0.0
    %337 = vmatpush1.msra.mxu0 0.0
    %338 = vmatprep.subr.mxu0 0.0
    %339 = vmatpush1.msra.mxu0 0.0
    %340 = vmatprep.subr.mxu0 0.0
    %341 = vmatpush1.msra.mxu0 0.0
    %342 = vmatprep.mubr.f32.mxu0 0.0
    %343 = vmatmul.mubr.f32.gmra.mrb[0].mxu0 %v270
    %v344 = vpop.f32.mrb[0].mxu0
    %v345 = vadd.f32 %v277, %v344
    %v346 = vpop.f32.mrb[0].mxu0
    %347 = vmatprep.mubr.f32.mxu0 0.0
    %348 = vmatmul.mubr.f32.gmra.mrb[0].mxu0 %v271
    %v349 = vpop.f32.mrb[0].mxu0
    %v350 = vadd.f32 %v277, %v349
    %v351 = vpop.f32.mrb[0].mxu0
    %352 = vmatprep.mubr.f32.mxu0 0.0
    %353 = vmatmul.mubr.f32.gmra.mrb[0].mxu0 %v272
    %v354 = vpop.f32.mrb[0].mxu0
    %v355 = vadd.f32 %v277, %v354
    %v356 = vpop.f32.mrb[0].mxu0
    %357 = vmatprep.mubr.f32.mxu0 0.0
    %358 = vmatmul.mubr.f32.gmra.mrb[0].mxu0 %v273
    %v359 = vpop.f32.mrb[0].mxu0
    %v360 = vadd.f32 %v277, %v359
    %v361 = vpop.f32.mrb[0].mxu0
    %362 = vdwg.mxu0
    %v363 = vmul.f32 %v345, 0.5
    %v364 = vmul.f32 %v350, 0.5
    %v365 = vmul.f32 %v355, 0.5
    %v366 = vmul.f32 %v360, 0.5
    %v367 = vadd.f32 %v363, %v51
    %v368 = vadd.f32 %v364, %v52
    %v369 = vadd.f32 %v365, %v53
    %v370 = vadd.f32 %v366, %v54
    %v371 = vsel %vm75, %v367, 0.0
    %372 = vadd.xlane.f32.xlu0 %v371
    %v373 = vpop.xlane.xlu0 %372
    %v374 = vsel %vm75, %v368, 0.0
    %375 = vadd.xlane.f32.xlu0 %v374
    %v376 = vpop.xlane.xlu0 %375
    %v377 = vsel %vm75, %v369, 0.0
    %378 = vadd.xlane.f32.xlu0 %v377
    %v379 = vpop.xlane.xlu0 %378
    %v380 = vsel %vm75, %v370, 0.0
    %381 = vadd.xlane.f32.xlu0 %v380
    %v382 = vpop.xlane.xlu0 %381
    %v383 = vmul.f32 %v373, %v88
    %v384 = vmul.f32 %v376, %v88
    %v385 = vmul.f32 %v379, %v88
    %v386 = vmul.f32 %v382, %v88
    %v387 = vsub.f32 %v367, %v383
    %v388 = vsub.f32 %v368, %v384
    %v389 = vsub.f32 %v369, %v385
    %v390 = vsub.f32 %v370, %v386
    %v391 = vmul.f32 %v387, %v387
    %v392 = vmul.f32 %v388, %v388
    %v393 = vmul.f32 %v389, %v389
    %v394 = vmul.f32 %v390, %v390
    %v395 = vsel %vm75, %v391, 0.0
    %396 = vadd.xlane.f32.xlu0 %v395
    %v397 = vpop.xlane.xlu0 %396
    %v398 = vsel %vm75, %v392, 0.0
    %399 = vadd.xlane.f32.xlu0 %v398
    %v400 = vpop.xlane.xlu0 %399
    %v401 = vsel %vm75, %v393, 0.0
    %402 = vadd.xlane.f32.xlu0 %v401
    %v403 = vpop.xlane.xlu0 %402
    %v404 = vsel %vm75, %v394, 0.0
    %405 = vadd.xlane.f32.xlu0 %v404
    %v406 = vpop.xlane.xlu0 %405
    %v407 = vmul.f32 %v397, %v88
    %v408 = vmul.f32 %v400, %v88
    %v409 = vmul.f32 %v403, %v88
    %v410 = vmul.f32 %v406, %v88
    %v411 = vadd.f32 %v407, 1e-05
    %v412 = vadd.f32 %v408, 1e-05
    %v413 = vadd.f32 %v409, 1e-05
    %v414 = vadd.f32 %v410, 1e-05
    %v415 = vrsqrt.pop %v411
    %v416 = vrsqrt.pop %v412
    %v417 = vrsqrt.pop %v413
    %v418 = vrsqrt.pop %v414
    %v419 = vmul.f32 %v387, %v415
    %v420 = vmul.f32 %v388, %v416
    %v421 = vmul.f32 %v389, %v417
    %v422 = vmul.f32 %v390, %v418
    %v423 = vlaneseq
    %v424 = vshrl.u32 %v423, 7
    %v425 = vsub.s32 3, %v424
    %v426 = vrot.slane %v48, %v425
    %v427 = vmul.f32 %v419, %v426
    %v428 = vmul.f32 %v420, %v426
    %v429 = vmul.f32 %v421, %v426
    %v430 = vmul.f32 %v422, %v426
    %v431 = vlaneseq
    %v432 = vshrl.u32 %v431, 7
    %v433 = vsub.s32 4, %v432
    %v434 = vrot.slane %v48, %v433
    %v435 = vadd.f32 %v427, %v434
    %v436 = vadd.f32 %v428, %v434
    %v437 = vadd.f32 %v429, %v434
    %v438 = vadd.f32 %v430, %v434
    %v439 = vld [vmem:[%s5] sm:$0xff]
    %v440 = vld [vmem:[%s5 + $0x8] sm:$0xff]
    %v441 = vld [vmem:[%s5 + $0x10] sm:$0xff]
    %v442 = vld [vmem:[%s5 + $0x18] sm:$0xff]
    %v443 = vld [vmem:[%s5 + $0x20] sm:$0xff]
    %v444 = vld [vmem:[%s5 + $0x28] sm:$0xff]
    %v445 = vld [vmem:[%s5 + $0x30] sm:$0xff]
    %v446 = vld [vmem:[%s5 + $0x38] sm:$0xff]
    %v448 = vsel %vm75, %v435, 0
    %v451 = vsel %vm75, %v436, 0
    %v454 = vsel %vm75, %v437, 0
    %v457 = vsel %vm75, %v438, 0
    %459 = vmatprep.subr.mxu0 %v440
    %460 = vmatpush1.msra.mxu0 %v439
    %461 = vmatprep.subr.mxu0 %v442
    %462 = vmatpush1.msra.mxu0 %v441
    %463 = vmatprep.subr.mxu0 %v444
    %464 = vmatpush1.msra.mxu0 %v443
    %465 = vmatprep.subr.mxu0 %v446
    %466 = vmatpush1.msra.mxu0 %v445
    %467 = vmatprep.subr.mxu0 0.0
    %468 = vmatpush1.msra.mxu0 0.0
    %469 = vmatprep.subr.mxu0 0.0
    %470 = vmatpush1.msra.mxu0 0.0
    %471 = vmatprep.subr.mxu0 0.0
    %472 = vmatpush1.msra.mxu0 0.0
    %473 = vmatprep.subr.mxu0 0.0
    %474 = vmatpush1.msra.mxu0 0.0
    %475 = vmatprep.subr.mxu0 0.0
    %476 = vmatpush1.msra.mxu0 0.0
    %477 = vmatprep.subr.mxu0 0.0
    %478 = vmatpush1.msra.mxu0 0.0
    %479 = vmatprep.subr.mxu0 0.0
    %480 = vmatpush1.msra.mxu0 0.0
    %481 = vmatprep.subr.mxu0 0.0
    %482 = vmatpush1.msra.mxu0 0.0
    %483 = vmatprep.subr.mxu0 0.0
    %484 = vmatpush1.msra.mxu0 0.0
    %485 = vmatprep.subr.mxu0 0.0
    %486 = vmatpush1.msra.mxu0 0.0
    %487 = vmatprep.subr.mxu0 0.0
    %488 = vmatpush1.msra.mxu0 0.0
    %489 = vmatprep.subr.mxu0 0.0
    %490 = vmatpush1.msra.mxu0 0.0
    %491 = vmatprep.subr.mxu0 0.0
    %492 = vmatpush1.msra.mxu0 0.0
    %493 = vmatprep.subr.mxu0 0.0
    %494 = vmatpush1.msra.mxu0 0.0
    %495 = vmatprep.subr.mxu0 0.0
    %496 = vmatpush1.msra.mxu0 0.0
    %497 = vmatprep.subr.mxu0 0.0
    %498 = vmatpush1.msra.mxu0 0.0
    %499 = vmatprep.subr.mxu0 0.0
    %500 = vmatpush1.msra.mxu0 0.0
    %501 = vmatprep.subr.mxu0 0.0
    %502 = vmatpush1.msra.mxu0 0.0
    %503 = vmatprep.subr.mxu0 0.0
    %504 = vmatpush1.msra.mxu0 0.0
    %505 = vmatprep.subr.mxu0 0.0
    %506 = vmatpush1.msra.mxu0 0.0
    %507 = vmatprep.subr.mxu0 0.0
    %508 = vmatpush1.msra.mxu0 0.0
    %509 = vmatprep.subr.mxu0 0.0
    %510 = vmatpush1.msra.mxu0 0.0
    %511 = vmatprep.subr.mxu0 0.0
    %512 = vmatpush1.msra.mxu0 0.0
    %513 = vmatprep.subr.mxu0 0.0
    %514 = vmatpush1.msra.mxu0 0.0
    %515 = vmatprep.subr.mxu0 0.0
    %516 = vmatpush1.msra.mxu0 0.0
    %517 = vmatprep.subr.mxu0 0.0
    %518 = vmatpush1.msra.mxu0 0.0
    %519 = vmatprep.subr.mxu0 0.0
    %520 = vmatpush1.msra.mxu0 0.0
    %521 = vmatprep.subr.mxu0 0.0
    %522 = vmatpush1.msra.mxu0 0.0
    %523 = vmatprep.mubr.f32.mxu0 0.0
    %524 = vmatmul.mubr.f32.gmra.mrb[0].mxu0 %v448
    %v525 = vpop.f32.mrb[0].mxu0
    %v526 = vadd.f32 0.0, %v525
    %v527 = vpop.f32.mrb[0].mxu0
    %v528 = vadd.f32 0.0, %v527
    %529 = vmatprep.mubr.f32.mxu0 0.0
    %530 = vmatmul.mubr.f32.gmra.mrb[0].mxu0 %v451
    %v531 = vpop.f32.mrb[0].mxu0
    %v532 = vadd.f32 0.0, %v531
    %v533 = vpop.f32.mrb[0].mxu0
    %v534 = vadd.f32 0.0, %v533
    %535 = vmatprep.mubr.f32.mxu0 0.0
    %536 = vmatmul.mubr.f32.gmra.mrb[0].mxu0 %v454
    %v537 = vpop.f32.mrb[0].mxu0
    %v538 = vadd.f32 0.0, %v537
    %v539 = vpop.f32.mrb[0].mxu0
    %v540 = vadd.f32 0.0, %v539
    %541 = vmatprep.mubr.f32.mxu0 0.0
    %542 = vmatmul.mubr.f32.gmra.mrb[0].mxu0 %v457
    %v543 = vpop.f32.mrb[0].mxu0
    %v544 = vadd.f32 0.0, %v543
    %v545 = vpop.f32.mrb[0].mxu0
    %v546 = vadd.f32 0.0, %v545
    %547 = vdwg.mxu0
    %550 = vrot.lane.b32.xlu0 %v526, 64
    %v551 = vpop.permute.xlu0 %550
    %552 = vrot.lane.b32.xlu0 %v532, 64
    %v553 = vpop.permute.xlu0 %552
    %vm554 = vcmask 130048
    %v555 = vsel %vm554, %v526, 0
    %v557 = vsel %vm554, %v532, 0
    %v559 = vsel %vm554, %v551, 0
    %v561 = vsel %vm554, %v553, 0
    %563 = vmatprep.subr.mxu0 0.0
    %564 = vmatpush1.xpose.msra.mxu0 %v559
    %565 = vmatprep.subr.mxu0 0.0
    %566 = vmatpush1.xpose.msra.mxu0 %v561
    %567 = vmatprep.subr.mxu0 0.0
    %568 = vmatpush1.xpose.msra.mxu0 0.0
    %569 = vmatprep.subr.mxu0 0.0
    %570 = vmatpush1.xpose.msra.mxu0 0.0
    %571 = vmatprep.subr.mxu0 0.0
    %572 = vmatpush1.xpose.msra.mxu0 0.0
    %573 = vmatprep.subr.mxu0 0.0
    %574 = vmatpush1.xpose.msra.mxu0 0.0
    %575 = vmatprep.subr.mxu0 0.0
    %576 = vmatpush1.xpose.msra.mxu0 0.0
    %577 = vmatprep.subr.mxu0 0.0
    %578 = vmatpush1.xpose.msra.mxu0 0.0
    %579 = vmatprep.subr.mxu0 0.0
    %580 = vmatpush1.xpose.msra.mxu0 0.0
    %581 = vmatprep.subr.mxu0 0.0
    %582 = vmatpush1.xpose.msra.mxu0 0.0
    %583 = vmatprep.subr.mxu0 0.0
    %584 = vmatpush1.xpose.msra.mxu0 0.0
    %585 = vmatprep.subr.mxu0 0.0
    %586 = vmatpush1.xpose.msra.mxu0 0.0
    %587 = vmatprep.subr.mxu0 0.0
    %588 = vmatpush1.xpose.msra.mxu0 0.0
    %589 = vmatprep.subr.mxu0 0.0
    %590 = vmatpush1.xpose.msra.mxu0 0.0
    %591 = vmatprep.subr.mxu0 0.0
    %592 = vmatpush1.xpose.msra.mxu0 0.0
    %593 = vmatprep.subr.mxu0 0.0
    %594 = vmatpush1.xpose.msra.mxu0 0.0
    %595 = vmatprep.subr.mxu0 0.0
    %596 = vmatpush1.xpose.msra.mxu0 0.0
    %597 = vmatprep.subr.mxu0 0.0
    %598 = vmatpush1.xpose.msra.mxu0 0.0
    %599 = vmatprep.subr.mxu0 0.0
    %600 = vmatpush1.xpose.msra.mxu0 0.0
    %601 = vmatprep.subr.mxu0 0.0
    %602 = vmatpush1.xpose.msra.mxu0 0.0
    %603 = vmatprep.subr.mxu0 0.0
    %604 = vmatpush1.xpose.msra.mxu0 0.0
    %605 = vmatprep.subr.mxu0 0.0
    %606 = vmatpush1.xpose.msra.mxu0 0.0
    %607 = vmatprep.subr.mxu0 0.0
    %608 = vmatpush1.xpose.msra.mxu0 0.0
    %609 = vmatprep.subr.mxu0 0.0
    %610 = vmatpush1.xpose.msra.mxu0 0.0
    %611 = vmatprep.subr.mxu0 0.0
    %612 = vmatpush1.xpose.msra.mxu0 0.0
    %613 = vmatprep.subr.mxu0 0.0
    %614 = vmatpush1.xpose.msra.mxu0 0.0
    %615 = vmatprep.subr.mxu0 0.0
    %616 = vmatpush1.xpose.msra.mxu0 0.0
    %617 = vmatprep.subr.mxu0 0.0
    %618 = vmatpush1.xpose.msra.mxu0 0.0
    %619 = vmatprep.subr.mxu0 0.0
    %620 = vmatpush1.xpose.msra.mxu0 0.0
    %621 = vmatprep.subr.mxu0 0.0
    %622 = vmatpush1.xpose.msra.mxu0 0.0
    %623 = vmatprep.subr.mxu0 0.0
    %624 = vmatpush1.xpose.msra.mxu0 0.0
    %625 = vmatprep.subr.mxu0 0.0
    %626 = vmatpush1.xpose.msra.mxu0 0.0
    %627 = vmatprep.mubr.f32.mxu0 0.0
    %628 = vmatmul.mubr.f32.gmra.mrb[0].mxu0 %v555
    %v629 = vpop.f32.mrb[0].mxu0
    %v630 = vadd.f32 0.0, %v629
    %v631 = vpop.f32.mrb[0].mxu0
    %632 = vmatprep.mubr.f32.mxu0 0.0
    %633 = vmatmul.mubr.f32.gmra.mrb[0].mxu0 %v557
    %v634 = vpop.f32.mrb[0].mxu0
    %v635 = vadd.f32 0.0, %v634
    %v636 = vpop.f32.mrb[0].mxu0
    %637 = vdwg.mxu0
    %640 = vrot.lane.b32.xlu0 %v538, 64
    %v641 = vpop.permute.xlu0 %640
    %642 = vrot.lane.b32.xlu0 %v544, 64
    %v643 = vpop.permute.xlu0 %642
    %v644 = vsel %vm554, %v538, 0
    %v646 = vsel %vm554, %v544, 0
    %v648 = vsel %vm554, %v641, 0
    %v650 = vsel %vm554, %v643, 0
    %652 = vmatprep.subr.mxu0 0.0
    %653 = vmatpush1.xpose.msra.mxu0 %v648
    %654 = vmatprep.subr.mxu0 0.0
    %655 = vmatpush1.xpose.msra.mxu0 %v650
    %656 = vmatprep.subr.mxu0 0.0
    %657 = vmatpush1.xpose.msra.mxu0 0.0
    %658 = vmatprep.subr.mxu0 0.0
    %659 = vmatpush1.xpose.msra.mxu0 0.0
    %660 = vmatprep.subr.mxu0 0.0
    %661 = vmatpush1.xpose.msra.mxu0 0.0
    %662 = vmatprep.subr.mxu0 0.0
    %663 = vmatpush1.xpose.msra.mxu0 0.0
    %664 = vmatprep.subr.mxu0 0.0
    %665 = vmatpush1.xpose.msra.mxu0 0.0
    %666 = vmatprep.subr.mxu0 0.0
    %667 = vmatpush1.xpose.msra.mxu0 0.0
    %668 = vmatprep.subr.mxu0 0.0
    %669 = vmatpush1.xpose.msra.mxu0 0.0
    %670 = vmatprep.subr.mxu0 0.0
    %671 = vmatpush1.xpose.msra.mxu0 0.0
    %672 = vmatprep.subr.mxu0 0.0
    %673 = vmatpush1.xpose.msra.mxu0 0.0
    %674 = vmatprep.subr.mxu0 0.0
    %675 = vmatpush1.xpose.msra.mxu0 0.0
    %676 = vmatprep.subr.mxu0 0.0
    %677 = vmatpush1.xpose.msra.mxu0 0.0
    %678 = vmatprep.subr.mxu0 0.0
    %679 = vmatpush1.xpose.msra.mxu0 0.0
    %680 = vmatprep.subr.mxu0 0.0
    %681 = vmatpush1.xpose.msra.mxu0 0.0
    %682 = vmatprep.subr.mxu0 0.0
    %683 = vmatpush1.xpose.msra.mxu0 0.0
    %684 = vmatprep.subr.mxu0 0.0
    %685 = vmatpush1.xpose.msra.mxu0 0.0
    %686 = vmatprep.subr.mxu0 0.0
    %687 = vmatpush1.xpose.msra.mxu0 0.0
    %688 = vmatprep.subr.mxu0 0.0
    %689 = vmatpush1.xpose.msra.mxu0 0.0
    %690 = vmatprep.subr.mxu0 0.0
    %691 = vmatpush1.xpose.msra.mxu0 0.0
    %692 = vmatprep.subr.mxu0 0.0
    %693 = vmatpush1.xpose.msra.mxu0 0.0
    %694 = vmatprep.subr.mxu0 0.0
    %695 = vmatpush1.xpose.msra.mxu0 0.0
    %696 = vmatprep.subr.mxu0 0.0
    %697 = vmatpush1.xpose.msra.mxu0 0.0
    %698 = vmatprep.subr.mxu0 0.0
    %699 = vmatpush1.xpose.msra.mxu0 0.0
    %700 = vmatprep.subr.mxu0 0.0
    %701 = vmatpush1.xpose.msra.mxu0 0.0
    %702 = vmatprep.subr.mxu0 0.0
    %703 = vmatpush1.xpose.msra.mxu0 0.0
    %704 = vmatprep.subr.mxu0 0.0
    %705 = vmatpush1.xpose.msra.mxu0 0.0
    %706 = vmatprep.subr.mxu0 0.0
    %707 = vmatpush1.xpose.msra.mxu0 0.0
    %708 = vmatprep.subr.mxu0 0.0
    %709 = vmatpush1.xpose.msra.mxu0 0.0
    %710 = vmatprep.subr.mxu0 0.0
    %711 = vmatpush1.xpose.msra.mxu0 0.0
    %712 = vmatprep.subr.mxu0 0.0
    %713 = vmatpush1.xpose.msra.mxu0 0.0
    %714 = vmatprep.subr.mxu0 0.0
    %715 = vmatpush1.xpose.msra.mxu0 0.0
    %716 = vmatprep.mubr.f32.mxu0 0.0
    %717 = vmatmul.mubr.f32.gmra.mrb[0].mxu0 %v644
    %v718 = vpop.f32.mrb[0].mxu0
    %v719 = vadd.f32 0.0, %v718
    %v720 = vpop.f32.mrb[0].mxu0
    %721 = vmatprep.mubr.f32.mxu0 0.0
    %722 = vmatmul.mubr.f32.gmra.mrb[0].mxu0 %v646
    %v723 = vpop.f32.mrb[0].mxu0
    %v724 = vadd.f32 0.0, %v723
    %v725 = vpop.f32.mrb[0].mxu0
    %726 = vdwg.mxu0
    %v727 = vmul.f32 %v630, 0.25
    %v728 = vmul.f32 %v635, 0.25
    %v729 = vmul.f32 %v719, 0.25
    %v730 = vmul.f32 %v724, 0.25
    %v731 = vsel %vm554, %v727, -inf
    %732 = vmax.xlane.f32.xlu0 %v731
    %v733 = vpop.xlane.xlu0 %732
    %v734 = vsel %vm554, %v728, -inf
    %735 = vmax.xlane.f32.xlu0 %v734
    %v736 = vpop.xlane.xlu0 %735
    %v737 = vsel %vm554, %v729, -inf
    %738 = vmax.xlane.f32.xlu0 %v737
    %v739 = vpop.xlane.xlu0 %738
    %v740 = vsel %vm554, %v730, -inf
    %741 = vmax.xlane.f32.xlu0 %v740
    %v742 = vpop.xlane.xlu0 %741
    %v743 = vsub.f32 %v727, %v733
    %v744 = vsub.f32 %v728, %v736
    %v745 = vsub.f32 %v729, %v739
    %v746 = vsub.f32 %v730, %v742
    %v747 = vmul.f32 %v743, 1.442695
    %v748 = vpow.pop %v747
    %v749 = vmul.f32 %v744, 1.442695
    %v750 = vpow.pop %v749
    %v751 = vmul.f32 %v745, 1.442695
    %v752 = vpow.pop %v751
    %v753 = vmul.f32 %v746, 1.442695
    %v754 = vpow.pop %v753
    %v755 = vsel %vm554, %v748, 0.0
    %756 = vadd.xlane.f32.xlu0 %v755
    %v757 = vpop.xlane.xlu0 %756
    %v758 = vsel %vm554, %v750, 0.0
    %759 = vadd.xlane.f32.xlu0 %v758
    %v760 = vpop.xlane.xlu0 %759
    %v761 = vsel %vm554, %v752, 0.0
    %762 = vadd.xlane.f32.xlu0 %v761
    %v763 = vpop.xlane.xlu0 %762
    %v764 = vsel %vm554, %v754, 0.0
    %765 = vadd.xlane.f32.xlu0 %v764
    %v766 = vpop.xlane.xlu0 %765
    %v767 = vrcp.pop %v757
    %v768 = vrcp.pop %v760
    %v769 = vrcp.pop %v763
    %v770 = vrcp.pop %v766
    %v771 = vmul.f32 %v748, %v767
    %v772 = vmul.f32 %v750, %v768
    %v773 = vmul.f32 %v752, %v769
    %v774 = vmul.f32 %v754, %v770
    %v776 = vsel %vm554, %v771, 0
    %v779 = vsel %vm554, %v772, 0
    %781 = vmatprep.subr.mxu0 0.0
    %782 = vmatpush1.msra.mxu0 %v528
    %783 = vmatprep.subr.mxu0 0.0
    %784 = vmatpush1.msra.mxu0 %v534
    %785 = vmatprep.subr.mxu0 0.0
    %786 = vmatpush1.msra.mxu0 0.0
    %787 = vmatprep.subr.mxu0 0.0
    %788 = vmatpush1.msra.mxu0 0.0
    %789 = vmatprep.subr.mxu0 0.0
    %790 = vmatpush1.msra.mxu0 0.0
    %791 = vmatprep.subr.mxu0 0.0
    %792 = vmatpush1.msra.mxu0 0.0
    %793 = vmatprep.subr.mxu0 0.0
    %794 = vmatpush1.msra.mxu0 0.0
    %795 = vmatprep.subr.mxu0 0.0
    %796 = vmatpush1.msra.mxu0 0.0
    %797 = vmatprep.subr.mxu0 0.0
    %798 = vmatpush1.msra.mxu0 0.0
    %799 = vmatprep.subr.mxu0 0.0
    %800 = vmatpush1.msra.mxu0 0.0
    %801 = vmatprep.subr.mxu0 0.0
    %802 = vmatpush1.msra.mxu0 0.0
    %803 = vmatprep.subr.mxu0 0.0
    %804 = vmatpush1.msra.mxu0 0.0
    %805 = vmatprep.subr.mxu0 0.0
    %806 = vmatpush1.msra.mxu0 0.0
    %807 = vmatprep.subr.mxu0 0.0
    %808 = vmatpush1.msra.mxu0 0.0
    %809 = vmatprep.subr.mxu0 0.0
    %810 = vmatpush1.msra.mxu0 0.0
    %811 = vmatprep.subr.mxu0 0.0
    %812 = vmatpush1.msra.mxu0 0.0
    %813 = vmatprep.subr.mxu0 0.0
    %814 = vmatpush1.msra.mxu0 0.0
    %815 = vmatprep.subr.mxu0 0.0
    %816 = vmatpush1.msra.mxu0 0.0
    %817 = vmatprep.subr.mxu0 0.0
    %818 = vmatpush1.msra.mxu0 0.0
    %819 = vmatprep.subr.mxu0 0.0
    %820 = vmatpush1.msra.mxu0 0.0
    %821 = vmatprep.subr.mxu0 0.0
    %822 = vmatpush1.msra.mxu0 0.0
    %823 = vmatprep.subr.mxu0 0.0
    %824 = vmatpush1.msra.mxu0 0.0
    %825 = vmatprep.subr.mxu0 0.0
    %826 = vmatpush1.msra.mxu0 0.0
    %827 = vmatprep.subr.mxu0 0.0
    %828 = vmatpush1.msra.mxu0 0.0
    %829 = vmatprep.subr.mxu0 0.0
    %830 = vmatpush1.msra.mxu0 0.0
    %831 = vmatprep.subr.mxu0 0.0
    %832 = vmatpush1.msra.mxu0 0.0
    %833 = vmatprep.subr.mxu0 0.0
    %834 = vmatpush1.msra.mxu0 0.0
    %835 = vmatprep.subr.mxu0 0.0
    %836 = vmatpush1.msra.mxu0 0.0
    %837 = vmatprep.subr.mxu0 0.0
    %838 = vmatpush1.msra.mxu0 0.0
    %839 = vmatprep.subr.mxu0 0.0
    %840 = vmatpush1.msra.mxu0 0.0
    %841 = vmatprep.subr.mxu0 0.0
    %842 = vmatpush1.msra.mxu0 0.0
    %843 = vmatprep.subr.mxu0 0.0
    %844 = vmatpush1.msra.mxu0 0.0
    %845 = vmatprep.mubr.f32.mxu0 0.0
    %846 = vmatmul.mubr.f32.gmra.mrb[0].mxu0 %v776
    %v847 = vpop.f32.mrb[0].mxu0
    %v848 = vadd.f32 0.0, %v847
    %v849 = vpop.f32.mrb[0].mxu0
    %850 = vmatprep.mubr.f32.mxu0 0.0
    %851 = vmatmul.mubr.f32.gmra.mrb[0].mxu0 %v779
    %v852 = vpop.f32.mrb[0].mxu0
    %v853 = vadd.f32 0.0, %v852
    %v854 = vpop.f32.mrb[0].mxu0
    %855 = vdwg.mxu0
    %v857 = vsel %vm554, %v773, 0
    %v860 = vsel %vm554, %v774, 0
    %862 = vmatprep.subr.mxu0 0.0
    %863 = vmatpush1.msra.mxu0 %v540
    %864 = vmatprep.subr.mxu0 0.0
    %865 = vmatpush1.msra.mxu0 %v546
    %866 = vmatprep.subr.mxu0 0.0
    %867 = vmatpush1.msra.mxu0 0.0
    %868 = vmatprep.subr.mxu0 0.0
    %869 = vmatpush1.msra.mxu0 0.0
    %870 = vmatprep.subr.mxu0 0.0
    %871 = vmatpush1.msra.mxu0 0.0
    %872 = vmatprep.subr.mxu0 0.0
    %873 = vmatpush1.msra.mxu0 0.0
    %874 = vmatprep.subr.mxu0 0.0
    %875 = vmatpush1.msra.mxu0 0.0
    %876 = vmatprep.subr.mxu0 0.0
    %877 = vmatpush1.msra.mxu0 0.0
    %878 = vmatprep.subr.mxu0 0.0
    %879 = vmatpush1.msra.mxu0 0.0
    %880 = vmatprep.subr.mxu0 0.0
    %881 = vmatpush1.msra.mxu0 0.0
    %882 = vmatprep.subr.mxu0 0.0
    %883 = vmatpush1.msra.mxu0 0.0
    %884 = vmatprep.subr.mxu0 0.0
    %885 = vmatpush1.msra.mxu0 0.0
    %886 = vmatprep.subr.mxu0 0.0
    %887 = vmatpush1.msra.mxu0 0.0
    %888 = vmatprep.subr.mxu0 0.0
    %889 = vmatpush1.msra.mxu0 0.0
    %890 = vmatprep.subr.mxu0 0.0
    %891 = vmatpush1.msra.mxu0 0.0
    %892 = vmatprep.subr.mxu0 0.0
    %893 = vmatpush1.msra.mxu0 0.0
    %894 = vmatprep.subr.mxu0 0.0
    %895 = vmatpush1.msra.mxu0 0.0
    %896 = vmatprep.subr.mxu0 0.0
    %897 = vmatpush1.msra.mxu0 0.0
    %898 = vmatprep.subr.mxu0 0.0
    %899 = vmatpush1.msra.mxu0 0.0
    %900 = vmatprep.subr.mxu0 0.0
    %901 = vmatpush1.msra.mxu0 0.0
    %902 = vmatprep.subr.mxu0 0.0
    %903 = vmatpush1.msra.mxu0 0.0
    %904 = vmatprep.subr.mxu0 0.0
    %905 = vmatpush1.msra.mxu0 0.0
    %906 = vmatprep.subr.mxu0 0.0
    %907 = vmatpush1.msra.mxu0 0.0
    %908 = vmatprep.subr.mxu0 0.0
    %909 = vmatpush1.msra.mxu0 0.0
    %910 = vmatprep.subr.mxu0 0.0
    %911 = vmatpush1.msra.mxu0 0.0
    %912 = vmatprep.subr.mxu0 0.0
    %913 = vmatpush1.msra.mxu0 0.0
    %914 = vmatprep.subr.mxu0 0.0
    %915 = vmatpush1.msra.mxu0 0.0
    %916 = vmatprep.subr.mxu0 0.0
    %917 = vmatpush1.msra.mxu0 0.0
    %918 = vmatprep.subr.mxu0 0.0
    %919 = vmatpush1.msra.mxu0 0.0
    %920 = vmatprep.subr.mxu0 0.0
    %921 = vmatpush1.msra.mxu0 0.0
    %922 = vmatprep.subr.mxu0 0.0
    %923 = vmatpush1.msra.mxu0 0.0
    %924 = vmatprep.subr.mxu0 0.0
    %925 = vmatpush1.msra.mxu0 0.0
    %926 = vmatprep.mubr.f32.mxu0 0.0
    %927 = vmatmul.mubr.f32.gmra.mrb[0].mxu0 %v857
    %v928 = vpop.f32.mrb[0].mxu0
    %v929 = vadd.f32 0.0, %v928
    %v930 = vpop.f32.mrb[0].mxu0
    %931 = vmatprep.mubr.f32.mxu0 0.0
    %932 = vmatmul.mubr.f32.gmra.mrb[0].mxu0 %v860
    %v933 = vpop.f32.mrb[0].mxu0
    %v934 = vadd.f32 0.0, %v933
    %v935 = vpop.f32.mrb[0].mxu0
    %936 = vdwg.mxu0
    %937 = vrot.lane.b32.xlu0 %v526, 112
    %v938 = vpop.permute.xlu0 %937
    %939 = vrot.lane.b32.xlu0 %v532, 112
    %v940 = vpop.permute.xlu0 %939
    %941 = vrot.lane.b32.xlu0 %v526, 48
    %v942 = vpop.permute.xlu0 %941
    %943 = vrot.lane.b32.xlu0 %v532, 48
    %v944 = vpop.permute.xlu0 %943
    %v945 = vsel %vm554, %v938, 0
    %v947 = vsel %vm554, %v940, 0
    %v949 = vsel %vm554, %v942, 0
    %v951 = vsel %vm554, %v944, 0
    %953 = vmatprep.subr.mxu0 0.0
    %954 = vmatpush1.xpose.msra.mxu0 %v949
    %955 = vmatprep.subr.mxu0 0.0
    %956 = vmatpush1.xpose.msra.mxu0 %v951
    %957 = vmatprep.subr.mxu0 0.0
    %958 = vmatpush1.xpose.msra.mxu0 0.0
    %959 = vmatprep.subr.mxu0 0.0
    %960 = vmatpush1.xpose.msra.mxu0 0.0
    %961 = vmatprep.subr.mxu0 0.0
    %962 = vmatpush1.xpose.msra.mxu0 0.0
    %963 = vmatprep.subr.mxu0 0.0
    %964 = vmatpush1.xpose.msra.mxu0 0.0
    %965 = vmatprep.subr.mxu0 0.0
    %966 = vmatpush1.xpose.msra.mxu0 0.0
    %967 = vmatprep.subr.mxu0 0.0
    %968 = vmatpush1.xpose.msra.mxu0 0.0
    %969 = vmatprep.subr.mxu0 0.0
    %970 = vmatpush1.xpose.msra.mxu0 0.0
    %971 = vmatprep.subr.mxu0 0.0
    %972 = vmatpush1.xpose.msra.mxu0 0.0
    %973 = vmatprep.subr.mxu0 0.0
    %974 = vmatpush1.xpose.msra.mxu0 0.0
    %975 = vmatprep.subr.mxu0 0.0
    %976 = vmatpush1.xpose.msra.mxu0 0.0
    %977 = vmatprep.subr.mxu0 0.0
    %978 = vmatpush1.xpose.msra.mxu0 0.0
    %979 = vmatprep.subr.mxu0 0.0
    %980 = vmatpush1.xpose.msra.mxu0 0.0
    %981 = vmatprep.subr.mxu0 0.0
    %982 = vmatpush1.xpose.msra.mxu0 0.0
    %983 = vmatprep.subr.mxu0 0.0
    %984 = vmatpush1.xpose.msra.mxu0 0.0
    %985 = vmatprep.subr.mxu0 0.0
    %986 = vmatpush1.xpose.msra.mxu0 0.0
    %987 = vmatprep.subr.mxu0 0.0
    %988 = vmatpush1.xpose.msra.mxu0 0.0
    %989 = vmatprep.subr.mxu0 0.0
    %990 = vmatpush1.xpose.msra.mxu0 0.0
    %991 = vmatprep.subr.mxu0 0.0
    %992 = vmatpush1.xpose.msra.mxu0 0.0
    %993 = vmatprep.subr.mxu0 0.0
    %994 = vmatpush1.xpose.msra.mxu0 0.0
    %995 = vmatprep.subr.mxu0 0.0
    %996 = vmatpush1.xpose.msra.mxu0 0.0
    %997 = vmatprep.subr.mxu0 0.0
    %998 = vmatpush1.xpose.msra.mxu0 0.0
    %999 = vmatprep.subr.mxu0 0.0
    %1000 = vmatpush1.xpose.msra.mxu0 0.0
    %1001 = vmatprep.subr.mxu0 0.0
    %1002 = vmatpush1.xpose.msra.mxu0 0.0
    %1003 = vmatprep.subr.mxu0 0.0
    %1004 = vmatpush1.xpose.msra.mxu0 0.0
    %1005 = vmatprep.subr.mxu0 0.0
    %1006 = vmatpush1.xpose.msra.mxu0 0.0
    %1007 = vmatprep.subr.mxu0 0.0
    %1008 = vmatpush1.xpose.msra.mxu0 0.0
    %1009 = vmatprep.subr.mxu0 0.0
    %1010 = vmatpush1.xpose.msra.mxu0 0.0
    %1011 = vmatprep.subr.mxu0 0.0
    %1012 = vmatpush1.xpose.msra.mxu0 0.0
    %1013 = vmatprep.subr.mxu0 0.0
    %1014 = vmatpush1.xpose.msra.mxu0 0.0
    %1015 = vmatprep.subr.mxu0 0.0
    %1016 = vmatpush1.xpose.msra.mxu0 0.0
    %1017 = vmatprep.mubr.f32.mxu0 0.0
    %1018 = vmatmul.mubr.f32.gmra.mrb[0].mxu0 %v945
    %v1019 = vpop.f32.mrb[0].mxu0
    %v1020 = vadd.f32 0.0, %v1019
    %v1021 = vpop.f32.mrb[0].mxu0
    %1022 = vmatprep.mubr.f32.mxu0 0.0
    %1023 = vmatmul.mubr.f32.gmra.mrb[0].mxu0 %v947
    %v1024 = vpop.f32.mrb[0].mxu0
    %v1025 = vadd.f32 0.0, %v1024
    %v1026 = vpop.f32.mrb[0].mxu0
    %1027 = vdwg.mxu0
    %1028 = vrot.lane.b32.xlu0 %v538, 112
    %v1029 = vpop.permute.xlu0 %1028
    %1030 = vrot.lane.b32.xlu0 %v544, 112
    %v1031 = vpop.permute.xlu0 %1030
    %1032 = vrot.lane.b32.xlu0 %v538, 48
    %v1033 = vpop.permute.xlu0 %1032
    %1034 = vrot.lane.b32.xlu0 %v544, 48
    %v1035 = vpop.permute.xlu0 %1034
    %v1036 = vsel %vm554, %v1029, 0
    %v1038 = vsel %vm554, %v1031, 0
    %v1040 = vsel %vm554, %v1033, 0
    %v1042 = vsel %vm554, %v1035, 0
    %1044 = vmatprep.subr.mxu0 0.0
    %1045 = vmatpush1.xpose.msra.mxu0 %v1040
    %1046 = vmatprep.subr.mxu0 0.0
    %1047 = vmatpush1.xpose.msra.mxu0 %v1042
    %1048 = vmatprep.subr.mxu0 0.0
    %1049 = vmatpush1.xpose.msra.mxu0 0.0
    %1050 = vmatprep.subr.mxu0 0.0
    %1051 = vmatpush1.xpose.msra.mxu0 0.0
    %1052 = vmatprep.subr.mxu0 0.0
    %1053 = vmatpush1.xpose.msra.mxu0 0.0
    %1054 = vmatprep.subr.mxu0 0.0
    %1055 = vmatpush1.xpose.msra.mxu0 0.0
    %1056 = vmatprep.subr.mxu0 0.0
    %1057 = vmatpush1.xpose.msra.mxu0 0.0
    %1058 = vmatprep.subr.mxu0 0.0
    %1059 = vmatpush1.xpose.msra.mxu0 0.0
    %1060 = vmatprep.subr.mxu0 0.0
    %1061 = vmatpush1.xpose.msra.mxu0 0.0
    %1062 = vmatprep.subr.mxu0 0.0
    %1063 = vmatpush1.xpose.msra.mxu0 0.0
    %1064 = vmatprep.subr.mxu0 0.0
    %1065 = vmatpush1.xpose.msra.mxu0 0.0
    %1066 = vmatprep.subr.mxu0 0.0
    %1067 = vmatpush1.xpose.msra.mxu0 0.0
    %1068 = vmatprep.subr.mxu0 0.0
    %1069 = vmatpush1.xpose.msra.mxu0 0.0
    %1070 = vmatprep.subr.mxu0 0.0
    %1071 = vmatpush1.xpose.msra.mxu0 0.0
    %1072 = vmatprep.subr.mxu0 0.0
    %1073 = vmatpush1.xpose.msra.mxu0 0.0
    %1074 = vmatprep.subr.mxu0 0.0
    %1075 = vmatpush1.xpose.msra.mxu0 0.0
    %1076 = vmatprep.subr.mxu0 0.0
    %1077 = vmatpush1.xpose.msra.mxu0 0.0
    %1078 = vmatprep.subr.mxu0 0.0
    %1079 = vmatpush1.xpose.msra.mxu0 0.0
    %1080 = vmatprep.subr.mxu0 0.0
    %1081 = vmatpush1.xpose.msra.mxu0 0.0
    %1082 = vmatprep.subr.mxu0 0.0
    %1083 = vmatpush1.xpose.msra.mxu0 0.0
    %1084 = vmatprep.subr.mxu0 0.0
    %1085 = vmatpush1.xpose.msra.mxu0 0.0
    %1086 = vmatprep.subr.mxu0 0.0
    %1087 = vmatpush1.xpose.msra.mxu0 0.0
    %1088 = vmatprep.subr.mxu0 0.0
    %1089 = vmatpush1.xpose.msra.mxu0 0.0
    %1090 = vmatprep.subr.mxu0 0.0
    %1091 = vmatpush1.xpose.msra.mxu0 0.0
    %1092 = vmatprep.subr.mxu0 0.0
    %1093 = vmatpush1.xpose.msra.mxu0 0.0
    %1094 = vmatprep.subr.mxu0 0.0
    %1095 = vmatpush1.xpose.msra.mxu0 0.0
    %1096 = vmatprep.subr.mxu0 0.0
    %1097 = vmatpush1.xpose.msra.mxu0 0.0
    %1098 = vmatprep.subr.mxu0 0.0
    %1099 = vmatpush1.xpose.msra.mxu0 0.0
    %1100 = vmatprep.subr.mxu0 0.0
    %1101 = vmatpush1.xpose.msra.mxu0 0.0
    %1102 = vmatprep.subr.mxu0 0.0
    %1103 = vmatpush1.xpose.msra.mxu0 0.0
    %1104 = vmatprep.subr.mxu0 0.0
    %1105 = vmatpush1.xpose.msra.mxu0 0.0
    %1106 = vmatprep.subr.mxu0 0.0
    %1107 = vmatpush1.xpose.msra.mxu0 0.0
    %1108 = vmatprep.mubr.f32.mxu0 0.0
    %1109 = vmatmul.mubr.f32.gmra.mrb[0].mxu0 %v1036
    %v1110 = vpop.f32.mrb[0].mxu0
    %v1111 = vadd.f32 0.0, %v1110
    %v1112 = vpop.f32.mrb[0].mxu0
    %1113 = vmatprep.mubr.f32.mxu0 0.0
    %1114 = vmatmul.mubr.f32.gmra.mrb[0].mxu0 %v1038
    %v1115 = vpop.f32.mrb[0].mxu0
    %v1116 = vadd.f32 0.0, %v1115
    %v1117 = vpop.f32.mrb[0].mxu0
    %1118 = vdwg.mxu0
    %v1119 = vmul.f32 %v1020, 0.25
    %v1120 = vmul.f32 %v1025, 0.25
    %v1121 = vmul.f32 %v1111, 0.25
    %v1122 = vmul.f32 %v1116, 0.25
    %v1123 = vsel %vm554, %v1119, -inf
    %1124 = vmax.xlane.f32.xlu0 %v1123
    %v1125 = vpop.xlane.xlu0 %1124
    %v1126 = vsel %vm554, %v1120, -inf
    %1127 = vmax.xlane.f32.xlu0 %v1126
    %v1128 = vpop.xlane.xlu0 %1127
    %v1129 = vsel %vm554, %v1121, -inf
    %1130 = vmax.xlane.f32.xlu0 %v1129
    %v1131 = vpop.xlane.xlu0 %1130
    %v1132 = vsel %vm554, %v1122, -inf
    %1133 = vmax.xlane.f32.xlu0 %v1132
    %v1134 = vpop.xlane.xlu0 %1133
    %v1135 = vsub.f32 %v1119, %v1125
    %v1136 = vsub.f32 %v1120, %v1128
    %v1137 = vsub.f32 %v1121, %v1131
    %v1138 = vsub.f32 %v1122, %v1134
    %v1139 = vmul.f32 %v1135, 1.442695
    %v1140 = vpow.pop %v1139
    %v1141 = vmul.f32 %v1136, 1.442695
    %v1142 = vpow.pop %v1141
    %v1143 = vmul.f32 %v1137, 1.442695
    %v1144 = vpow.pop %v1143
    %v1145 = vmul.f32 %v1138, 1.442695
    %v1146 = vpow.pop %v1145
    %v1147 = vsel %vm554, %v1140, 0.0
    %1148 = vadd.xlane.f32.xlu0 %v1147
    %v1149 = vpop.xlane.xlu0 %1148
    %v1150 = vsel %vm554, %v1142, 0.0
    %1151 = vadd.xlane.f32.xlu0 %v1150
    %v1152 = vpop.xlane.xlu0 %1151
    %v1153 = vsel %vm554, %v1144, 0.0
    %1154 = vadd.xlane.f32.xlu0 %v1153
    %v1155 = vpop.xlane.xlu0 %1154
    %v1156 = vsel %vm554, %v1146, 0.0
    %1157 = vadd.xlane.f32.xlu0 %v1156
    %v1158 = vpop.xlane.xlu0 %1157
    %v1159 = vrcp.pop %v1149
    %v1160 = vrcp.pop %v1152
    %v1161 = vrcp.pop %v1155
    %v1162 = vrcp.pop %v1158
    %v1163 = vmul.f32 %v1140, %v1159
    %v1164 = vmul.f32 %v1142, %v1160
    %v1165 = vmul.f32 %v1144, %v1161
    %v1166 = vmul.f32 %v1146, %v1162
    %1169 = vrot.lane.b32.xlu0 %v528, 112
    %v1170 = vpop.permute.xlu0 %1169
    %1171 = vrot.lane.b32.xlu0 %v534, 112
    %v1172 = vpop.permute.xlu0 %1171
    %v1176 = vsel %vm554, %v1163, 0
    %v1179 = vsel %vm554, %v1164, 0
    %1181 = vmatprep.subr.mxu0 0.0
    %1182 = vmatpush1.msra.mxu0 %v1170
    %1183 = vmatprep.subr.mxu0 0.0
    %1184 = vmatpush1.msra.mxu0 %v1172
    %1185 = vmatprep.subr.mxu0 0.0
    %1186 = vmatpush1.msra.mxu0 0.0
    %1187 = vmatprep.subr.mxu0 0.0
    %1188 = vmatpush1.msra.mxu0 0.0
    %1189 = vmatprep.subr.mxu0 0.0
    %1190 = vmatpush1.msra.mxu0 0.0
    %1191 = vmatprep.subr.mxu0 0.0
    %1192 = vmatpush1.msra.mxu0 0.0
    %1193 = vmatprep.subr.mxu0 0.0
    %1194 = vmatpush1.msra.mxu0 0.0
    %1195 = vmatprep.subr.mxu0 0.0
    %1196 = vmatpush1.msra.mxu0 0.0
    %1197 = vmatprep.subr.mxu0 0.0
    %1198 = vmatpush1.msra.mxu0 0.0
    %1199 = vmatprep.subr.mxu0 0.0
    %1200 = vmatpush1.msra.mxu0 0.0
    %1201 = vmatprep.subr.mxu0 0.0
    %1202 = vmatpush1.msra.mxu0 0.0
    %1203 = vmatprep.subr.mxu0 0.0
    %1204 = vmatpush1.msra.mxu0 0.0
    %1205 = vmatprep.subr.mxu0 0.0
    %1206 = vmatpush1.msra.mxu0 0.0
    %1207 = vmatprep.subr.mxu0 0.0
    %1208 = vmatpush1.msra.mxu0 0.0
    %1209 = vmatprep.subr.mxu0 0.0
    %1210 = vmatpush1.msra.mxu0 0.0
    %1211 = vmatprep.subr.mxu0 0.0
    %1212 = vmatpush1.msra.mxu0 0.0
    %1213 = vmatprep.subr.mxu0 0.0
    %1214 = vmatpush1.msra.mxu0 0.0
    %1215 = vmatprep.subr.mxu0 0.0
    %1216 = vmatpush1.msra.mxu0 0.0
    %1217 = vmatprep.subr.mxu0 0.0
    %1218 = vmatpush1.msra.mxu0 0.0
    %1219 = vmatprep.subr.mxu0 0.0
    %1220 = vmatpush1.msra.mxu0 0.0
    %1221 = vmatprep.subr.mxu0 0.0
    %1222 = vmatpush1.msra.mxu0 0.0
    %1223 = vmatprep.subr.mxu0 0.0
    %1224 = vmatpush1.msra.mxu0 0.0
    %1225 = vmatprep.subr.mxu0 0.0
    %1226 = vmatpush1.msra.mxu0 0.0
    %1227 = vmatprep.subr.mxu0 0.0
    %1228 = vmatpush1.msra.mxu0 0.0
    %1229 = vmatprep.subr.mxu0 0.0
    %1230 = vmatpush1.msra.mxu0 0.0
    %1231 = vmatprep.subr.mxu0 0.0
    %1232 = vmatpush1.msra.mxu0 0.0
    %1233 = vmatprep.subr.mxu0 0.0
    %1234 = vmatpush1.msra.mxu0 0.0
    %1235 = vmatprep.subr.mxu0 0.0
    %1236 = vmatpush1.msra.mxu0 0.0
    %1237 = vmatprep.subr.mxu0 0.0
    %1238 = vmatpush1.msra.mxu0 0.0
    %1239 = vmatprep.subr.mxu0 0.0
    %1240 = vmatpush1.msra.mxu0 0.0
    %1241 = vmatprep.subr.mxu0 0.0
    %1242 = vmatpush1.msra.mxu0 0.0
    %1243 = vmatprep.subr.mxu0 0.0
    %1244 = vmatpush1.msra.mxu0 0.0
    %1245 = vmatprep.mubr.f32.mxu0 0.0
    %1246 = vmatmul.mubr.f32.gmra.mrb[0].mxu0 %v1176
    %v1247 = vpop.f32.mrb[0].mxu0
    %v1248 = vadd.f32 0.0, %v1247
    %v1249 = vpop.f32.mrb[0].mxu0
    %1250 = vmatprep.mubr.f32.mxu0 0.0
    %1251 = vmatmul.mubr.f32.gmra.mrb[0].mxu0 %v1179
    %v1252 = vpop.f32.mrb[0].mxu0
    %v1253 = vadd.f32 0.0, %v1252
    %v1254 = vpop.f32.mrb[0].mxu0
    %1255 = vdwg.mxu0
    %1258 = vrot.lane.b32.xlu0 %v540, 112
    %v1259 = vpop.permute.xlu0 %1258
    %1260 = vrot.lane.b32.xlu0 %v546, 112
    %v1261 = vpop.permute.xlu0 %1260
    %v1265 = vsel %vm554, %v1165, 0
    %v1268 = vsel %vm554, %v1166, 0
    %1270 = vmatprep.subr.mxu0 0.0
    %1271 = vmatpush1.msra.mxu0 %v1259
    %1272 = vmatprep.subr.mxu0 0.0
    %1273 = vmatpush1.msra.mxu0 %v1261
    %1274 = vmatprep.subr.mxu0 0.0
    %1275 = vmatpush1.msra.mxu0 0.0
    %1276 = vmatprep.subr.mxu0 0.0
    %1277 = vmatpush1.msra.mxu0 0.0
    %1278 = vmatprep.subr.mxu0 0.0
    %1279 = vmatpush1.msra.mxu0 0.0
    %1280 = vmatprep.subr.mxu0 0.0
    %1281 = vmatpush1.msra.mxu0 0.0
    %1282 = vmatprep.subr.mxu0 0.0
    %1283 = vmatpush1.msra.mxu0 0.0
    %1284 = vmatprep.subr.mxu0 0.0
    %1285 = vmatpush1.msra.mxu0 0.0
    %1286 = vmatprep.subr.mxu0 0.0
    %1287 = vmatpush1.msra.mxu0 0.0
    %1288 = vmatprep.subr.mxu0 0.0
    %1289 = vmatpush1.msra.mxu0 0.0
    %1290 = vmatprep.subr.mxu0 0.0
    %1291 = vmatpush1.msra.mxu0 0.0
    %1292 = vmatprep.subr.mxu0 0.0
    %1293 = vmatpush1.msra.mxu0 0.0
    %1294 = vmatprep.subr.mxu0 0.0
    %1295 = vmatpush1.msra.mxu0 0.0
    %1296 = vmatprep.subr.mxu0 0.0
    %1297 = vmatpush1.msra.mxu0 0.0
    %1298 = vmatprep.subr.mxu0 0.0
    %1299 = vmatpush1.msra.mxu0 0.0
    %1300 = vmatprep.subr.mxu0 0.0
    %1301 = vmatpush1.msra.mxu0 0.0
    %1302 = vmatprep.subr.mxu0 0.0
    %1303 = vmatpush1.msra.mxu0 0.0
    %1304 = vmatprep.subr.mxu0 0.0
    %1305 = vmatpush1.msra.mxu0 0.0
    %1306 = vmatprep.subr.mxu0 0.0
    %1307 = vmatpush1.msra.mxu0 0.0
    %1308 = vmatprep.subr.mxu0 0.0
    %1309 = vmatpush1.msra.mxu0 0.0
    %1310 = vmatprep.subr.mxu0 0.0
    %1311 = vmatpush1.msra.mxu0 0.0
    %1312 = vmatprep.subr.mxu0 0.0
    %1313 = vmatpush1.msra.mxu0 0.0
    %1314 = vmatprep.subr.mxu0 0.0
    %1315 = vmatpush1.msra.mxu0 0.0
    %1316 = vmatprep.subr.mxu0 0.0
    %1317 = vmatpush1.msra.mxu0 0.0
    %1318 = vmatprep.subr.mxu0 0.0
    %1319 = vmatpush1.msra.mxu0 0.0
    %1320 = vmatprep.subr.mxu0 0.0
    %1321 = vmatpush1.msra.mxu0 0.0
    %1322 = vmatprep.subr.mxu0 0.0
    %1323 = vmatpush1.msra.mxu0 0.0
    %1324 = vmatprep.subr.mxu0 0.0
    %1325 = vmatpush1.msra.mxu0 0.0
    %1326 = vmatprep.subr.mxu0 0.0
    %1327 = vmatpush1.msra.mxu0 0.0
    %1328 = vmatprep.subr.mxu0 0.0
    %1329 = vmatpush1.msra.mxu0 0.0
    %1330 = vmatprep.subr.mxu0 0.0
    %1331 = vmatpush1.msra.mxu0 0.0
    %1332 = vmatprep.subr.mxu0 0.0
    %1333 = vmatpush1.msra.mxu0 0.0
    %1334 = vmatprep.mubr.f32.mxu0 0.0
    %1335 = vmatmul.mubr.f32.gmra.mrb[0].mxu0 %v1265
    %v1336 = vpop.f32.mrb[0].mxu0
    %v1337 = vadd.f32 0.0, %v1336
    %v1338 = vpop.f32.mrb[0].mxu0
    %1339 = vmatprep.mubr.f32.mxu0 0.0
    %1340 = vmatmul.mubr.f32.gmra.mrb[0].mxu0 %v1268
    %v1341 = vpop.f32.mrb[0].mxu0
    %v1342 = vadd.f32 0.0, %v1341
    %v1343 = vpop.f32.mrb[0].mxu0
    %1344 = vdwg.mxu0
    %1345 = vrot.lane.b32.xlu0 %v526, 96
    %v1346 = vpop.permute.xlu0 %1345
    %1347 = vrot.lane.b32.xlu0 %v532, 96
    %v1348 = vpop.permute.xlu0 %1347
    %1349 = vrot.lane.b32.xlu0 %v526, 32
    %v1350 = vpop.permute.xlu0 %1349
    %1351 = vrot.lane.b32.xlu0 %v532, 32
    %v1352 = vpop.permute.xlu0 %1351
    %v1353 = vsel %vm554, %v1346, 0
    %v1355 = vsel %vm554, %v1348, 0
    %v1357 = vsel %vm554, %v1350, 0
    %v1359 = vsel %vm554, %v1352, 0
    %1361 = vmatprep.subr.mxu0 0.0
    %1362 = vmatpush1.xpose.msra.mxu0 %v1357
    %1363 = vmatprep.subr.mxu0 0.0
    %1364 = vmatpush1.xpose.msra.mxu0 %v1359
    %1365 = vmatprep.subr.mxu0 0.0
    %1366 = vmatpush1.xpose.msra.mxu0 0.0
    %1367 = vmatprep.subr.mxu0 0.0
    %1368 = vmatpush1.xpose.msra.mxu0 0.0
    %1369 = vmatprep.subr.mxu0 0.0
    %1370 = vmatpush1.xpose.msra.mxu0 0.0
    %1371 = vmatprep.subr.mxu0 0.0
    %1372 = vmatpush1.xpose.msra.mxu0 0.0
    %1373 = vmatprep.subr.mxu0 0.0
    %1374 = vmatpush1.xpose.msra.mxu0 0.0
    %1375 = vmatprep.subr.mxu0 0.0
    %1376 = vmatpush1.xpose.msra.mxu0 0.0
    %1377 = vmatprep.subr.mxu0 0.0
    %1378 = vmatpush1.xpose.msra.mxu0 0.0
    %1379 = vmatprep.subr.mxu0 0.0
    %1380 = vmatpush1.xpose.msra.mxu0 0.0
    %1381 = vmatprep.subr.mxu0 0.0
    %1382 = vmatpush1.xpose.msra.mxu0 0.0
    %1383 = vmatprep.subr.mxu0 0.0
    %1384 = vmatpush1.xpose.msra.mxu0 0.0
    %1385 = vmatprep.subr.mxu0 0.0
    %1386 = vmatpush1.xpose.msra.mxu0 0.0
    %1387 = vmatprep.subr.mxu0 0.0
    %1388 = vmatpush1.xpose.msra.mxu0 0.0
    %1389 = vmatprep.subr.mxu0 0.0
    %1390 = vmatpush1.xpose.msra.mxu0 0.0
    %1391 = vmatprep.subr.mxu0 0.0
    %1392 = vmatpush1.xpose.msra.mxu0 0.0
    %1393 = vmatprep.subr.mxu0 0.0
    %1394 = vmatpush1.xpose.msra.mxu0 0.0
    %1395 = vmatprep.subr.mxu0 0.0
    %1396 = vmatpush1.xpose.msra.mxu0 0.0
    %1397 = vmatprep.subr.mxu0 0.0
    %1398 = vmatpush1.xpose.msra.mxu0 0.0
    %1399 = vmatprep.subr.mxu0 0.0
    %1400 = vmatpush1.xpose.msra.mxu0 0.0
    %1401 = vmatprep.subr.mxu0 0.0
    %1402 = vmatpush1.xpose.msra.mxu0 0.0
    %1403 = vmatprep.subr.mxu0 0.0
    %1404 = vmatpush1.xpose.msra.mxu0 0.0
    %1405 = vmatprep.subr.mxu0 0.0
    %1406 = vmatpush1.xpose.msra.mxu0 0.0
    %1407 = vmatprep.subr.mxu0 0.0
    %1408 = vmatpush1.xpose.msra.mxu0 0.0
    %1409 = vmatprep.subr.mxu0 0.0
    %1410 = vmatpush1.xpose.msra.mxu0 0.0
    %1411 = vmatprep.subr.mxu0 0.0
    %1412 = vmatpush1.xpose.msra.mxu0 0.0
    %1413 = vmatprep.subr.mxu0 0.0
    %1414 = vmatpush1.xpose.msra.mxu0 0.0
    %1415 = vmatprep.subr.mxu0 0.0
    %1416 = vmatpush1.xpose.msra.mxu0 0.0
    %1417 = vmatprep.subr.mxu0 0.0
    %1418 = vmatpush1.xpose.msra.mxu0 0.0
    %1419 = vmatprep.subr.mxu0 0.0
    %1420 = vmatpush1.xpose.msra.mxu0 0.0
    %1421 = vmatprep.subr.mxu0 0.0
    %1422 = vmatpush1.xpose.msra.mxu0 0.0
    %1423 = vmatprep.subr.mxu0 0.0
    %1424 = vmatpush1.xpose.msra.mxu0 0.0
    %1425 = vmatprep.mubr.f32.mxu0 0.0
    %1426 = vmatmul.mubr.f32.gmra.mrb[0].mxu0 %v1353
    %v1427 = vpop.f32.mrb[0].mxu0
    %v1428 = vadd.f32 0.0, %v1427
    %v1429 = vpop.f32.mrb[0].mxu0
    %1430 = vmatprep.mubr.f32.mxu0 0.0
    %1431 = vmatmul.mubr.f32.gmra.mrb[0].mxu0 %v1355
    %v1432 = vpop.f32.mrb[0].mxu0
    %v1433 = vadd.f32 0.0, %v1432
    %v1434 = vpop.f32.mrb[0].mxu0
    %1435 = vdwg.mxu0
    %1436 = vrot.lane.b32.xlu0 %v538, 96
    %v1437 = vpop.permute.xlu0 %1436
    %1438 = vrot.lane.b32.xlu0 %v544, 96
    %v1439 = vpop.permute.xlu0 %1438
    %1440 = vrot.lane.b32.xlu0 %v538, 32
    %v1441 = vpop.permute.xlu0 %1440
    %1442 = vrot.lane.b32.xlu0 %v544, 32
    %v1443 = vpop.permute.xlu0 %1442
    %v1444 = vsel %vm554, %v1437, 0
    %v1446 = vsel %vm554, %v1439, 0
    %v1448 = vsel %vm554, %v1441, 0
    %v1450 = vsel %vm554, %v1443, 0
    %1452 = vmatprep.subr.mxu0 0.0
    %1453 = vmatpush1.xpose.msra.mxu0 %v1448
    %1454 = vmatprep.subr.mxu0 0.0
    %1455 = vmatpush1.xpose.msra.mxu0 %v1450
    %1456 = vmatprep.subr.mxu0 0.0
    %1457 = vmatpush1.xpose.msra.mxu0 0.0
    %1458 = vmatprep.subr.mxu0 0.0
    %1459 = vmatpush1.xpose.msra.mxu0 0.0
    %1460 = vmatprep.subr.mxu0 0.0
    %1461 = vmatpush1.xpose.msra.mxu0 0.0
    %1462 = vmatprep.subr.mxu0 0.0
    %1463 = vmatpush1.xpose.msra.mxu0 0.0
    %1464 = vmatprep.subr.mxu0 0.0
    %1465 = vmatpush1.xpose.msra.mxu0 0.0
    %1466 = vmatprep.subr.mxu0 0.0
    %1467 = vmatpush1.xpose.msra.mxu0 0.0
    %1468 = vmatprep.subr.mxu0 0.0
    %1469 = vmatpush1.xpose.msra.mxu0 0.0
    %1470 = vmatprep.subr.mxu0 0.0
    %1471 = vmatpush1.xpose.msra.mxu0 0.0
    %1472 = vmatprep.subr.mxu0 0.0
    %1473 = vmatpush1.xpose.msra.mxu0 0.0
    %1474 = vmatprep.subr.mxu0 0.0
    %1475 = vmatpush1.xpose.msra.mxu0 0.0
    %1476 = vmatprep.subr.mxu0 0.0
    %1477 = vmatpush1.xpose.msra.mxu0 0.0
    %1478 = vmatprep.subr.mxu0 0.0
    %1479 = vmatpush1.xpose.msra.mxu0 0.0
    %1480 = vmatprep.subr.mxu0 0.0
    %1481 = vmatpush1.xpose.msra.mxu0 0.0
    %1482 = vmatprep.subr.mxu0 0.0
    %1483 = vmatpush1.xpose.msra.mxu0 0.0
    %1484 = vmatprep.subr.mxu0 0.0
    %1485 = vmatpush1.xpose.msra.mxu0 0.0
    %1486 = vmatprep.subr.mxu0 0.0
    %1487 = vmatpush1.xpose.msra.mxu0 0.0
    %1488 = vmatprep.subr.mxu0 0.0
    %1489 = vmatpush1.xpose.msra.mxu0 0.0
    %1490 = vmatprep.subr.mxu0 0.0
    %1491 = vmatpush1.xpose.msra.mxu0 0.0
    %1492 = vmatprep.subr.mxu0 0.0
    %1493 = vmatpush1.xpose.msra.mxu0 0.0
    %1494 = vmatprep.subr.mxu0 0.0
    %1495 = vmatpush1.xpose.msra.mxu0 0.0
    %1496 = vmatprep.subr.mxu0 0.0
    %1497 = vmatpush1.xpose.msra.mxu0 0.0
    %1498 = vmatprep.subr.mxu0 0.0
    %1499 = vmatpush1.xpose.msra.mxu0 0.0
    %1500 = vmatprep.subr.mxu0 0.0
    %1501 = vmatpush1.xpose.msra.mxu0 0.0
    %1502 = vmatprep.subr.mxu0 0.0
    %1503 = vmatpush1.xpose.msra.mxu0 0.0
    %1504 = vmatprep.subr.mxu0 0.0
    %1505 = vmatpush1.xpose.msra.mxu0 0.0
    %1506 = vmatprep.subr.mxu0 0.0
    %1507 = vmatpush1.xpose.msra.mxu0 0.0
    %1508 = vmatprep.subr.mxu0 0.0
    %1509 = vmatpush1.xpose.msra.mxu0 0.0
    %1510 = vmatprep.subr.mxu0 0.0
    %1511 = vmatpush1.xpose.msra.mxu0 0.0
    %1512 = vmatprep.subr.mxu0 0.0
    %1513 = vmatpush1.xpose.msra.mxu0 0.0
    %1514 = vmatprep.subr.mxu0 0.0
    %1515 = vmatpush1.xpose.msra.mxu0 0.0
    %1516 = vmatprep.mubr.f32.mxu0 0.0
    %1517 = vmatmul.mubr.f32.gmra.mrb[0].mxu0 %v1444
    %v1518 = vpop.f32.mrb[0].mxu0
    %v1519 = vadd.f32 0.0, %v1518
    %v1520 = vpop.f32.mrb[0].mxu0
    %1521 = vmatprep.mubr.f32.mxu0 0.0
    %1522 = vmatmul.mubr.f32.gmra.mrb[0].mxu0 %v1446
    %v1523 = vpop.f32.mrb[0].mxu0
    %v1524 = vadd.f32 0.0, %v1523
    %v1525 = vpop.f32.mrb[0].mxu0
    %1526 = vdwg.mxu0
    %v1527 = vmul.f32 %v1428, 0.25
    %v1528 = vmul.f32 %v1433, 0.25
    %v1529 = vmul.f32 %v1519, 0.25
    %v1530 = vmul.f32 %v1524, 0.25
    %v1531 = vsel %vm554, %v1527, -inf
    %1532 = vmax.xlane.f32.xlu0 %v1531
    %v1533 = vpop.xlane.xlu0 %1532
    %v1534 = vsel %vm554, %v1528, -inf
    %1535 = vmax.xlane.f32.xlu0 %v1534
    %v1536 = vpop.xlane.xlu0 %1535
    %v1537 = vsel %vm554, %v1529, -inf
    %1538 = vmax.xlane.f32.xlu0 %v1537
    %v1539 = vpop.xlane.xlu0 %1538
    %v1540 = vsel %vm554, %v1530, -inf
    %1541 = vmax.xlane.f32.xlu0 %v1540
    %v1542 = vpop.xlane.xlu0 %1541
    %v1543 = vsub.f32 %v1527, %v1533
    %v1544 = vsub.f32 %v1528, %v1536
    %v1545 = vsub.f32 %v1529, %v1539
    %v1546 = vsub.f32 %v1530, %v1542
    %v1547 = vmul.f32 %v1543, 1.442695
    %v1548 = vpow.pop %v1547
    %v1549 = vmul.f32 %v1544, 1.442695
    %v1550 = vpow.pop %v1549
    %v1551 = vmul.f32 %v1545, 1.442695
    %v1552 = vpow.pop %v1551
    %v1553 = vmul.f32 %v1546, 1.442695
    %v1554 = vpow.pop %v1553
    %v1555 = vsel %vm554, %v1548, 0.0
    %1556 = vadd.xlane.f32.xlu0 %v1555
    %v1557 = vpop.xlane.xlu0 %1556
    %v1558 = vsel %vm554, %v1550, 0.0
    %1559 = vadd.xlane.f32.xlu0 %v1558
    %v1560 = vpop.xlane.xlu0 %1559
    %v1561 = vsel %vm554, %v1552, 0.0
    %1562 = vadd.xlane.f32.xlu0 %v1561
    %v1563 = vpop.xlane.xlu0 %1562
    %v1564 = vsel %vm554, %v1554, 0.0
    %1565 = vadd.xlane.f32.xlu0 %v1564
    %v1566 = vpop.xlane.xlu0 %1565
    %v1567 = vrcp.pop %v1557
    %v1568 = vrcp.pop %v1560
    %v1569 = vrcp.pop %v1563
    %v1570 = vrcp.pop %v1566
    %v1571 = vmul.f32 %v1548, %v1567
    %v1572 = vmul.f32 %v1550, %v1568
    %v1573 = vmul.f32 %v1552, %v1569
    %v1574 = vmul.f32 %v1554, %v1570
    %1575 = vrot.lane.b32.xlu0 %v528, 96
    %v1576 = vpop.permute.xlu0 %1575
    %1577 = vrot.lane.b32.xlu0 %v534, 96
    %v1578 = vpop.permute.xlu0 %1577
    %v1582 = vsel %vm554, %v1571, 0
    %v1585 = vsel %vm554, %v1572, 0
    %1587 = vmatprep.subr.mxu0 0.0
    %1588 = vmatpush1.msra.mxu0 %v1576
    %1589 = vmatprep.subr.mxu0 0.0
    %1590 = vmatpush1.msra.mxu0 %v1578
    %1591 = vmatprep.subr.mxu0 0.0
    %1592 = vmatpush1.msra.mxu0 0.0
    %1593 = vmatprep.subr.mxu0 0.0
    %1594 = vmatpush1.msra.mxu0 0.0
    %1595 = vmatprep.subr.mxu0 0.0
    %1596 = vmatpush1.msra.mxu0 0.0
    %1597 = vmatprep.subr.mxu0 0.0
    %1598 = vmatpush1.msra.mxu0 0.0
    %1599 = vmatprep.subr.mxu0 0.0
    %1600 = vmatpush1.msra.mxu0 0.0
    %1601 = vmatprep.subr.mxu0 0.0
    %1602 = vmatpush1.msra.mxu0 0.0
    %1603 = vmatprep.subr.mxu0 0.0
    %1604 = vmatpush1.msra.mxu0 0.0
    %1605 = vmatprep.subr.mxu0 0.0
    %1606 = vmatpush1.msra.mxu0 0.0
    %1607 = vmatprep.subr.mxu0 0.0
    %1608 = vmatpush1.msra.mxu0 0.0
    %1609 = vmatprep.subr.mxu0 0.0
    %1610 = vmatpush1.msra.mxu0 0.0
    %1611 = vmatprep.subr.mxu0 0.0
    %1612 = vmatpush1.msra.mxu0 0.0
    %1613 = vmatprep.subr.mxu0 0.0
    %1614 = vmatpush1.msra.mxu0 0.0
    %1615 = vmatprep.subr.mxu0 0.0
    %1616 = vmatpush1.msra.mxu0 0.0
    %1617 = vmatprep.subr.mxu0 0.0
    %1618 = vmatpush1.msra.mxu0 0.0
    %1619 = vmatprep.subr.mxu0 0.0
    %1620 = vmatpush1.msra.mxu0 0.0
    %1621 = vmatprep.subr.mxu0 0.0
    %1622 = vmatpush1.msra.mxu0 0.0
    %1623 = vmatprep.subr.mxu0 0.0
    %1624 = vmatpush1.msra.mxu0 0.0
    %1625 = vmatprep.subr.mxu0 0.0
    %1626 = vmatpush1.msra.mxu0 0.0
    %1627 = vmatprep.subr.mxu0 0.0
    %1628 = vmatpush1.msra.mxu0 0.0
    %1629 = vmatprep.subr.mxu0 0.0
    %1630 = vmatpush1.msra.mxu0 0.0
    %1631 = vmatprep.subr.mxu0 0.0
    %1632 = vmatpush1.msra.mxu0 0.0
    %1633 = vmatprep.subr.mxu0 0.0
    %1634 = vmatpush1.msra.mxu0 0.0
    %1635 = vmatprep.subr.mxu0 0.0
    %1636 = vmatpush1.msra.mxu0 0.0
    %1637 = vmatprep.subr.mxu0 0.0
    %1638 = vmatpush1.msra.mxu0 0.0
    %1639 = vmatprep.subr.mxu0 0.0
    %1640 = vmatpush1.msra.mxu0 0.0
    %1641 = vmatprep.subr.mxu0 0.0
    %1642 = vmatpush1.msra.mxu0 0.0
    %1643 = vmatprep.subr.mxu0 0.0
    %1644 = vmatpush1.msra.mxu0 0.0
    %1645 = vmatprep.subr.mxu0 0.0
    %1646 = vmatpush1.msra.mxu0 0.0
    %1647 = vmatprep.subr.mxu0 0.0
    %1648 = vmatpush1.msra.mxu0 0.0
    %1649 = vmatprep.subr.mxu0 0.0
    %1650 = vmatpush1.msra.mxu0 0.0
    %1651 = vmatprep.mubr.f32.mxu0 0.0
    %1652 = vmatmul.mubr.f32.gmra.mrb[0].mxu0 %v1582
    %v1653 = vpop.f32.mrb[0].mxu0
    %v1654 = vadd.f32 0.0, %v1653
    %v1655 = vpop.f32.mrb[0].mxu0
    %1656 = vmatprep.mubr.f32.mxu0 0.0
    %1657 = vmatmul.mubr.f32.gmra.mrb[0].mxu0 %v1585
    %v1658 = vpop.f32.mrb[0].mxu0
    %v1659 = vadd.f32 0.0, %v1658
    %v1660 = vpop.f32.mrb[0].mxu0
    %1661 = vdwg.mxu0
    %1662 = vrot.lane.b32.xlu0 %v540, 96
    %v1663 = vpop.permute.xlu0 %1662
    %1664 = vrot.lane.b32.xlu0 %v546, 96
    %v1665 = vpop.permute.xlu0 %1664
    %v1669 = vsel %vm554, %v1573, 0
    %v1672 = vsel %vm554, %v1574, 0
    %1674 = vmatprep.subr.mxu0 0.0
    %1675 = vmatpush1.msra.mxu0 %v1663
    %1676 = vmatprep.subr.mxu0 0.0
    %1677 = vmatpush1.msra.mxu0 %v1665
    %1678 = vmatprep.subr.mxu0 0.0
    %1679 = vmatpush1.msra.mxu0 0.0
    %1680 = vmatprep.subr.mxu0 0.0
    %1681 = vmatpush1.msra.mxu0 0.0
    %1682 = vmatprep.subr.mxu0 0.0
    %1683 = vmatpush1.msra.mxu0 0.0
    %1684 = vmatprep.subr.mxu0 0.0
    %1685 = vmatpush1.msra.mxu0 0.0
    %1686 = vmatprep.subr.mxu0 0.0
    %1687 = vmatpush1.msra.mxu0 0.0
    %1688 = vmatprep.subr.mxu0 0.0
    %1689 = vmatpush1.msra.mxu0 0.0
    %1690 = vmatprep.subr.mxu0 0.0
    %1691 = vmatpush1.msra.mxu0 0.0
    %1692 = vmatprep.subr.mxu0 0.0
    %1693 = vmatpush1.msra.mxu0 0.0
    %1694 = vmatprep.subr.mxu0 0.0
    %1695 = vmatpush1.msra.mxu0 0.0
    %1696 = vmatprep.subr.mxu0 0.0
    %1697 = vmatpush1.msra.mxu0 0.0
    %1698 = vmatprep.subr.mxu0 0.0
    %1699 = vmatpush1.msra.mxu0 0.0
    %1700 = vmatprep.subr.mxu0 0.0
    %1701 = vmatpush1.msra.mxu0 0.0
    %1702 = vmatprep.subr.mxu0 0.0
    %1703 = vmatpush1.msra.mxu0 0.0
    %1704 = vmatprep.subr.mxu0 0.0
    %1705 = vmatpush1.msra.mxu0 0.0
    %1706 = vmatprep.subr.mxu0 0.0
    %1707 = vmatpush1.msra.mxu0 0.0
    %1708 = vmatprep.subr.mxu0 0.0
    %1709 = vmatpush1.msra.mxu0 0.0
    %1710 = vmatprep.subr.mxu0 0.0
    %1711 = vmatpush1.msra.mxu0 0.0
    %1712 = vmatprep.subr.mxu0 0.0
    %1713 = vmatpush1.msra.mxu0 0.0
    %1714 = vmatprep.subr.mxu0 0.0
    %1715 = vmatpush1.msra.mxu0 0.0
    %1716 = vmatprep.subr.mxu0 0.0
    %1717 = vmatpush1.msra.mxu0 0.0
    %1718 = vmatprep.subr.mxu0 0.0
    %1719 = vmatpush1.msra.mxu0 0.0
    %1720 = vmatprep.subr.mxu0 0.0
    %1721 = vmatpush1.msra.mxu0 0.0
    %1722 = vmatprep.subr.mxu0 0.0
    %1723 = vmatpush1.msra.mxu0 0.0
    %1724 = vmatprep.subr.mxu0 0.0
    %1725 = vmatpush1.msra.mxu0 0.0
    %1726 = vmatprep.subr.mxu0 0.0
    %1727 = vmatpush1.msra.mxu0 0.0
    %1728 = vmatprep.subr.mxu0 0.0
    %1729 = vmatpush1.msra.mxu0 0.0
    %1730 = vmatprep.subr.mxu0 0.0
    %1731 = vmatpush1.msra.mxu0 0.0
    %1732 = vmatprep.subr.mxu0 0.0
    %1733 = vmatpush1.msra.mxu0 0.0
    %1734 = vmatprep.subr.mxu0 0.0
    %1735 = vmatpush1.msra.mxu0 0.0
    %1736 = vmatprep.subr.mxu0 0.0
    %1737 = vmatpush1.msra.mxu0 0.0
    %1738 = vmatprep.mubr.f32.mxu0 0.0
    %1739 = vmatmul.mubr.f32.gmra.mrb[0].mxu0 %v1669
    %v1740 = vpop.f32.mrb[0].mxu0
    %v1741 = vadd.f32 0.0, %v1740
    %v1742 = vpop.f32.mrb[0].mxu0
    %1743 = vmatprep.mubr.f32.mxu0 0.0
    %1744 = vmatmul.mubr.f32.gmra.mrb[0].mxu0 %v1672
    %v1745 = vpop.f32.mrb[0].mxu0
    %v1746 = vadd.f32 0.0, %v1745
    %v1747 = vpop.f32.mrb[0].mxu0
    %1748 = vdwg.mxu0
    %1749 = vrot.lane.b32.xlu0 %v526, 80
    %v1750 = vpop.permute.xlu0 %1749
    %1751 = vrot.lane.b32.xlu0 %v532, 80
    %v1752 = vpop.permute.xlu0 %1751
    %1753 = vrot.lane.b32.xlu0 %v526, 16
    %v1754 = vpop.permute.xlu0 %1753
    %1755 = vrot.lane.b32.xlu0 %v532, 16
    %v1756 = vpop.permute.xlu0 %1755
    %v1757 = vsel %vm554, %v1750, 0
    %v1759 = vsel %vm554, %v1752, 0
    %v1761 = vsel %vm554, %v1754, 0
    %v1763 = vsel %vm554, %v1756, 0
    %1765 = vmatprep.subr.mxu0 0.0
    %1766 = vmatpush1.xpose.msra.mxu0 %v1761
    %1767 = vmatprep.subr.mxu0 0.0
    %1768 = vmatpush1.xpose.msra.mxu0 %v1763
    %1769 = vmatprep.subr.mxu0 0.0
    %1770 = vmatpush1.xpose.msra.mxu0 0.0
    %1771 = vmatprep.subr.mxu0 0.0
    %1772 = vmatpush1.xpose.msra.mxu0 0.0
    %1773 = vmatprep.subr.mxu0 0.0
    %1774 = vmatpush1.xpose.msra.mxu0 0.0
    %1775 = vmatprep.subr.mxu0 0.0
    %1776 = vmatpush1.xpose.msra.mxu0 0.0
    %1777 = vmatprep.subr.mxu0 0.0
    %1778 = vmatpush1.xpose.msra.mxu0 0.0
    %1779 = vmatprep.subr.mxu0 0.0
    %1780 = vmatpush1.xpose.msra.mxu0 0.0
    %1781 = vmatprep.subr.mxu0 0.0
    %1782 = vmatpush1.xpose.msra.mxu0 0.0
    %1783 = vmatprep.subr.mxu0 0.0
    %1784 = vmatpush1.xpose.msra.mxu0 0.0
    %1785 = vmatprep.subr.mxu0 0.0
    %1786 = vmatpush1.xpose.msra.mxu0 0.0
    %1787 = vmatprep.subr.mxu0 0.0
    %1788 = vmatpush1.xpose.msra.mxu0 0.0
    %1789 = vmatprep.subr.mxu0 0.0
    %1790 = vmatpush1.xpose.msra.mxu0 0.0
    %1791 = vmatprep.subr.mxu0 0.0
    %1792 = vmatpush1.xpose.msra.mxu0 0.0
    %1793 = vmatprep.subr.mxu0 0.0
    %1794 = vmatpush1.xpose.msra.mxu0 0.0
    %1795 = vmatprep.subr.mxu0 0.0
    %1796 = vmatpush1.xpose.msra.mxu0 0.0
    %1797 = vmatprep.subr.mxu0 0.0
    %1798 = vmatpush1.xpose.msra.mxu0 0.0
    %1799 = vmatprep.subr.mxu0 0.0
    %1800 = vmatpush1.xpose.msra.mxu0 0.0
    %1801 = vmatprep.subr.mxu0 0.0
    %1802 = vmatpush1.xpose.msra.mxu0 0.0
    %1803 = vmatprep.subr.mxu0 0.0
    %1804 = vmatpush1.xpose.msra.mxu0 0.0
    %1805 = vmatprep.subr.mxu0 0.0
    %1806 = vmatpush1.xpose.msra.mxu0 0.0
    %1807 = vmatprep.subr.mxu0 0.0
    %1808 = vmatpush1.xpose.msra.mxu0 0.0
    %1809 = vmatprep.subr.mxu0 0.0
    %1810 = vmatpush1.xpose.msra.mxu0 0.0
    %1811 = vmatprep.subr.mxu0 0.0
    %1812 = vmatpush1.xpose.msra.mxu0 0.0
    %1813 = vmatprep.subr.mxu0 0.0
    %1814 = vmatpush1.xpose.msra.mxu0 0.0
    %1815 = vmatprep.subr.mxu0 0.0
    %1816 = vmatpush1.xpose.msra.mxu0 0.0
    %1817 = vmatprep.subr.mxu0 0.0
    %1818 = vmatpush1.xpose.msra.mxu0 0.0
    %1819 = vmatprep.subr.mxu0 0.0
    %1820 = vmatpush1.xpose.msra.mxu0 0.0
    %1821 = vmatprep.subr.mxu0 0.0
    %1822 = vmatpush1.xpose.msra.mxu0 0.0
    %1823 = vmatprep.subr.mxu0 0.0
    %1824 = vmatpush1.xpose.msra.mxu0 0.0
    %1825 = vmatprep.subr.mxu0 0.0
    %1826 = vmatpush1.xpose.msra.mxu0 0.0
    %1827 = vmatprep.subr.mxu0 0.0
    %1828 = vmatpush1.xpose.msra.mxu0 0.0
    %1829 = vmatprep.mubr.f32.mxu0 0.0
    %1830 = vmatmul.mubr.f32.gmra.mrb[0].mxu0 %v1757
    %v1831 = vpop.f32.mrb[0].mxu0
    %v1832 = vadd.f32 0.0, %v1831
    %v1833 = vpop.f32.mrb[0].mxu0
    %1834 = vmatprep.mubr.f32.mxu0 0.0
    %1835 = vmatmul.mubr.f32.gmra.mrb[0].mxu0 %v1759
    %v1836 = vpop.f32.mrb[0].mxu0
    %v1837 = vadd.f32 0.0, %v1836
    %v1838 = vpop.f32.mrb[0].mxu0
    %1839 = vdwg.mxu0
    %1840 = vrot.lane.b32.xlu0 %v538, 80
    %v1841 = vpop.permute.xlu0 %1840
    %1842 = vrot.lane.b32.xlu0 %v544, 80
    %v1843 = vpop.permute.xlu0 %1842
    %1844 = vrot.lane.b32.xlu0 %v538, 16
    %v1845 = vpop.permute.xlu0 %1844
    %1846 = vrot.lane.b32.xlu0 %v544, 16
    %v1847 = vpop.permute.xlu0 %1846
    %v1848 = vsel %vm554, %v1841, 0
    %v1850 = vsel %vm554, %v1843, 0
    %v1852 = vsel %vm554, %v1845, 0
    %v1854 = vsel %vm554, %v1847, 0
    %1856 = vmatprep.subr.mxu0 0.0
    %1857 = vmatpush1.xpose.msra.mxu0 %v1852
    %1858 = vmatprep.subr.mxu0 0.0
    %1859 = vmatpush1.xpose.msra.mxu0 %v1854
    %1860 = vmatprep.subr.mxu0 0.0
    %1861 = vmatpush1.xpose.msra.mxu0 0.0
    %1862 = vmatprep.subr.mxu0 0.0
    %1863 = vmatpush1.xpose.msra.mxu0 0.0
    %1864 = vmatprep.subr.mxu0 0.0
    %1865 = vmatpush1.xpose.msra.mxu0 0.0
    %1866 = vmatprep.subr.mxu0 0.0
    %1867 = vmatpush1.xpose.msra.mxu0 0.0
    %1868 = vmatprep.subr.mxu0 0.0
    %1869 = vmatpush1.xpose.msra.mxu0 0.0
    %1870 = vmatprep.subr.mxu0 0.0
    %1871 = vmatpush1.xpose.msra.mxu0 0.0
    %1872 = vmatprep.subr.mxu0 0.0
    %1873 = vmatpush1.xpose.msra.mxu0 0.0
    %1874 = vmatprep.subr.mxu0 0.0
    %1875 = vmatpush1.xpose.msra.mxu0 0.0
    %1876 = vmatprep.subr.mxu0 0.0
    %1877 = vmatpush1.xpose.msra.mxu0 0.0
    %1878 = vmatprep.subr.mxu0 0.0
    %1879 = vmatpush1.xpose.msra.mxu0 0.0
    %1880 = vmatprep.subr.mxu0 0.0
    %1881 = vmatpush1.xpose.msra.mxu0 0.0
    %1882 = vmatprep.subr.mxu0 0.0
    %1883 = vmatpush1.xpose.msra.mxu0 0.0
    %1884 = vmatprep.subr.mxu0 0.0
    %1885 = vmatpush1.xpose.msra.mxu0 0.0
    %1886 = vmatprep.subr.mxu0 0.0
    %1887 = vmatpush1.xpose.msra.mxu0 0.0
    %1888 = vmatprep.subr.mxu0 0.0
    %1889 = vmatpush1.xpose.msra.mxu0 0.0
    %1890 = vmatprep.subr.mxu0 0.0
    %1891 = vmatpush1.xpose.msra.mxu0 0.0
    %1892 = vmatprep.subr.mxu0 0.0
    %1893 = vmatpush1.xpose.msra.mxu0 0.0
    %1894 = vmatprep.subr.mxu0 0.0
    %1895 = vmatpush1.xpose.msra.mxu0 0.0
    %1896 = vmatprep.subr.mxu0 0.0
    %1897 = vmatpush1.xpose.msra.mxu0 0.0
    %1898 = vmatprep.subr.mxu0 0.0
    %1899 = vmatpush1.xpose.msra.mxu0 0.0
    %1900 = vmatprep.subr.mxu0 0.0
    %1901 = vmatpush1.xpose.msra.mxu0 0.0
    %1902 = vmatprep.subr.mxu0 0.0
    %1903 = vmatpush1.xpose.msra.mxu0 0.0
    %1904 = vmatprep.subr.mxu0 0.0
    %1905 = vmatpush1.xpose.msra.mxu0 0.0
    %1906 = vmatprep.subr.mxu0 0.0
    %1907 = vmatpush1.xpose.msra.mxu0 0.0
    %1908 = vmatprep.subr.mxu0 0.0
    %1909 = vmatpush1.xpose.msra.mxu0 0.0
    %1910 = vmatprep.subr.mxu0 0.0
    %1911 = vmatpush1.xpose.msra.mxu0 0.0
    %1912 = vmatprep.subr.mxu0 0.0
    %1913 = vmatpush1.xpose.msra.mxu0 0.0
    %1914 = vmatprep.subr.mxu0 0.0
    %1915 = vmatpush1.xpose.msra.mxu0 0.0
    %1916 = vmatprep.subr.mxu0 0.0
    %1917 = vmatpush1.xpose.msra.mxu0 0.0
    %1918 = vmatprep.subr.mxu0 0.0
    %1919 = vmatpush1.xpose.msra.mxu0 0.0
    %1920 = vmatprep.mubr.f32.mxu0 0.0
    %1921 = vmatmul.mubr.f32.gmra.mrb[0].mxu0 %v1848
    %v1922 = vpop.f32.mrb[0].mxu0
    %v1923 = vadd.f32 0.0, %v1922
    %v1924 = vpop.f32.mrb[0].mxu0
    %1925 = vmatprep.mubr.f32.mxu0 0.0
    %1926 = vmatmul.mubr.f32.gmra.mrb[0].mxu0 %v1850
    %v1927 = vpop.f32.mrb[0].mxu0
    %v1928 = vadd.f32 0.0, %v1927
    %v1929 = vpop.f32.mrb[0].mxu0
    %1930 = vdwg.mxu0
    %v1931 = vmul.f32 %v1832, 0.25
    %v1932 = vmul.f32 %v1837, 0.25
    %v1933 = vmul.f32 %v1923, 0.25
    %v1934 = vmul.f32 %v1928, 0.25
    %v1935 = vsel %vm554, %v1931, -inf
    %1936 = vmax.xlane.f32.xlu0 %v1935
    %v1937 = vpop.xlane.xlu0 %1936
    %v1938 = vsel %vm554, %v1932, -inf
    %1939 = vmax.xlane.f32.xlu0 %v1938
    %v1940 = vpop.xlane.xlu0 %1939
    %v1941 = vsel %vm554, %v1933, -inf
    %1942 = vmax.xlane.f32.xlu0 %v1941
    %v1943 = vpop.xlane.xlu0 %1942
    %v1944 = vsel %vm554, %v1934, -inf
    %1945 = vmax.xlane.f32.xlu0 %v1944
    %v1946 = vpop.xlane.xlu0 %1945
    %v1947 = vsub.f32 %v1931, %v1937
    %v1948 = vsub.f32 %v1932, %v1940
    %v1949 = vsub.f32 %v1933, %v1943
    %v1950 = vsub.f32 %v1934, %v1946
    %v1951 = vmul.f32 %v1947, 1.442695
    %v1952 = vpow.pop %v1951
    %v1953 = vmul.f32 %v1948, 1.442695
    %v1954 = vpow.pop %v1953
    %v1955 = vmul.f32 %v1949, 1.442695
    %v1956 = vpow.pop %v1955
    %v1957 = vmul.f32 %v1950, 1.442695
    %v1958 = vpow.pop %v1957
    %v1959 = vsel %vm554, %v1952, 0.0
    %1960 = vadd.xlane.f32.xlu0 %v1959
    %v1961 = vpop.xlane.xlu0 %1960
    %v1962 = vsel %vm554, %v1954, 0.0
    %1963 = vadd.xlane.f32.xlu0 %v1962
    %v1964 = vpop.xlane.xlu0 %1963
    %v1965 = vsel %vm554, %v1956, 0.0
    %1966 = vadd.xlane.f32.xlu0 %v1965
    %v1967 = vpop.xlane.xlu0 %1966
    %v1968 = vsel %vm554, %v1958, 0.0
    %1969 = vadd.xlane.f32.xlu0 %v1968
    %v1970 = vpop.xlane.xlu0 %1969
    %v1971 = vrcp.pop %v1961
    %v1972 = vrcp.pop %v1964
    %v1973 = vrcp.pop %v1967
    %v1974 = vrcp.pop %v1970
    %v1975 = vmul.f32 %v1952, %v1971
    %v1976 = vmul.f32 %v1954, %v1972
    %v1977 = vmul.f32 %v1956, %v1973
    %v1978 = vmul.f32 %v1958, %v1974
    %1979 = vrot.lane.b32.xlu0 %v528, 80
    %v1980 = vpop.permute.xlu0 %1979
    %1981 = vrot.lane.b32.xlu0 %v534, 80
    %v1982 = vpop.permute.xlu0 %1981
    %v1986 = vsel %vm554, %v1975, 0
    %v1989 = vsel %vm554, %v1976, 0
    %1991 = vmatprep.subr.mxu0 0.0
    %1992 = vmatpush1.msra.mxu0 %v1980
    %1993 = vmatprep.subr.mxu0 0.0
    %1994 = vmatpush1.msra.mxu0 %v1982
    %1995 = vmatprep.subr.mxu0 0.0
    %1996 = vmatpush1.msra.mxu0 0.0
    %1997 = vmatprep.subr.mxu0 0.0
    %1998 = vmatpush1.msra.mxu0 0.0
    %1999 = vmatprep.subr.mxu0 0.0
    %2000 = vmatpush1.msra.mxu0 0.0
    %2001 = vmatprep.subr.mxu0 0.0
    %2002 = vmatpush1.msra.mxu0 0.0
    %2003 = vmatprep.subr.mxu0 0.0
    %2004 = vmatpush1.msra.mxu0 0.0
    %2005 = vmatprep.subr.mxu0 0.0
    %2006 = vmatpush1.msra.mxu0 0.0
    %2007 = vmatprep.subr.mxu0 0.0
    %2008 = vmatpush1.msra.mxu0 0.0
    %2009 = vmatprep.subr.mxu0 0.0
    %2010 = vmatpush1.msra.mxu0 0.0
    %2011 = vmatprep.subr.mxu0 0.0
    %2012 = vmatpush1.msra.mxu0 0.0
    %2013 = vmatprep.subr.mxu0 0.0
    %2014 = vmatpush1.msra.mxu0 0.0
    %2015 = vmatprep.subr.mxu0 0.0
    %2016 = vmatpush1.msra.mxu0 0.0
    %2017 = vmatprep.subr.mxu0 0.0
    %2018 = vmatpush1.msra.mxu0 0.0
    %2019 = vmatprep.subr.mxu0 0.0
    %2020 = vmatpush1.msra.mxu0 0.0
    %2021 = vmatprep.subr.mxu0 0.0
    %2022 = vmatpush1.msra.mxu0 0.0
    %2023 = vmatprep.subr.mxu0 0.0
    %2024 = vmatpush1.msra.mxu0 0.0
    %2025 = vmatprep.subr.mxu0 0.0
    %2026 = vmatpush1.msra.mxu0 0.0
    %2027 = vmatprep.subr.mxu0 0.0
    %2028 = vmatpush1.msra.mxu0 0.0
    %2029 = vmatprep.subr.mxu0 0.0
    %2030 = vmatpush1.msra.mxu0 0.0
    %2031 = vmatprep.subr.mxu0 0.0
    %2032 = vmatpush1.msra.mxu0 0.0
    %2033 = vmatprep.subr.mxu0 0.0
    %2034 = vmatpush1.msra.mxu0 0.0
    %2035 = vmatprep.subr.mxu0 0.0
    %2036 = vmatpush1.msra.mxu0 0.0
    %2037 = vmatprep.subr.mxu0 0.0
    %2038 = vmatpush1.msra.mxu0 0.0
    %2039 = vmatprep.subr.mxu0 0.0
    %2040 = vmatpush1.msra.mxu0 0.0
    %2041 = vmatprep.subr.mxu0 0.0
    %2042 = vmatpush1.msra.mxu0 0.0
    %2043 = vmatprep.subr.mxu0 0.0
    %2044 = vmatpush1.msra.mxu0 0.0
    %2045 = vmatprep.subr.mxu0 0.0
    %2046 = vmatpush1.msra.mxu0 0.0
    %2047 = vmatprep.subr.mxu0 0.0
    %2048 = vmatpush1.msra.mxu0 0.0
    %2049 = vmatprep.subr.mxu0 0.0
    %2050 = vmatpush1.msra.mxu0 0.0
    %2051 = vmatprep.subr.mxu0 0.0
    %2052 = vmatpush1.msra.mxu0 0.0
    %2053 = vmatprep.subr.mxu0 0.0
    %2054 = vmatpush1.msra.mxu0 0.0
    %2055 = vmatprep.mubr.f32.mxu0 0.0
    %2056 = vmatmul.mubr.f32.gmra.mrb[0].mxu0 %v1986
    %v2057 = vpop.f32.mrb[0].mxu0
    %v2058 = vadd.f32 0.0, %v2057
    %v2059 = vpop.f32.mrb[0].mxu0
    %2060 = vmatprep.mubr.f32.mxu0 0.0
    %2061 = vmatmul.mubr.f32.gmra.mrb[0].mxu0 %v1989
    %v2062 = vpop.f32.mrb[0].mxu0
    %v2063 = vadd.f32 0.0, %v2062
    %v2064 = vpop.f32.mrb[0].mxu0
    %2065 = vdwg.mxu0
    %2066 = vrot.lane.b32.xlu0 %v540, 80
    %v2067 = vpop.permute.xlu0 %2066
    %2068 = vrot.lane.b32.xlu0 %v546, 80
    %v2069 = vpop.permute.xlu0 %2068
    %v2073 = vsel %vm554, %v1977, 0
    %v2076 = vsel %vm554, %v1978, 0
    %2078 = vmatprep.subr.mxu0 0.0
    %2079 = vmatpush1.msra.mxu0 %v2067
    %2080 = vmatprep.subr.mxu0 0.0
    %2081 = vmatpush1.msra.mxu0 %v2069
    %2082 = vmatprep.subr.mxu0 0.0
    %2083 = vmatpush1.msra.mxu0 0.0
    %2084 = vmatprep.subr.mxu0 0.0
    %2085 = vmatpush1.msra.mxu0 0.0
    %2086 = vmatprep.subr.mxu0 0.0
    %2087 = vmatpush1.msra.mxu0 0.0
    %2088 = vmatprep.subr.mxu0 0.0
    %2089 = vmatpush1.msra.mxu0 0.0
    %2090 = vmatprep.subr.mxu0 0.0
    %2091 = vmatpush1.msra.mxu0 0.0
    %2092 = vmatprep.subr.mxu0 0.0
    %2093 = vmatpush1.msra.mxu0 0.0
    %2094 = vmatprep.subr.mxu0 0.0
    %2095 = vmatpush1.msra.mxu0 0.0
    %2096 = vmatprep.subr.mxu0 0.0
    %2097 = vmatpush1.msra.mxu0 0.0
    %2098 = vmatprep.subr.mxu0 0.0
    %2099 = vmatpush1.msra.mxu0 0.0
    %2100 = vmatprep.subr.mxu0 0.0
    %2101 = vmatpush1.msra.mxu0 0.0
    %2102 = vmatprep.subr.mxu0 0.0
    %2103 = vmatpush1.msra.mxu0 0.0
    %2104 = vmatprep.subr.mxu0 0.0
    %2105 = vmatpush1.msra.mxu0 0.0
    %2106 = vmatprep.subr.mxu0 0.0
    %2107 = vmatpush1.msra.mxu0 0.0
    %2108 = vmatprep.subr.mxu0 0.0
    %2109 = vmatpush1.msra.mxu0 0.0
    %2110 = vmatprep.subr.mxu0 0.0
    %2111 = vmatpush1.msra.mxu0 0.0
    %2112 = vmatprep.subr.mxu0 0.0
    %2113 = vmatpush1.msra.mxu0 0.0
    %2114 = vmatprep.subr.mxu0 0.0
    %2115 = vmatpush1.msra.mxu0 0.0
    %2116 = vmatprep.subr.mxu0 0.0
    %2117 = vmatpush1.msra.mxu0 0.0
    %2118 = vmatprep.subr.mxu0 0.0
    %2119 = vmatpush1.msra.mxu0 0.0
    %2120 = vmatprep.subr.mxu0 0.0
    %2121 = vmatpush1.msra.mxu0 0.0
    %2122 = vmatprep.subr.mxu0 0.0
    %2123 = vmatpush1.msra.mxu0 0.0
    %2124 = vmatprep.subr.mxu0 0.0
    %2125 = vmatpush1.msra.mxu0 0.0
    %2126 = vmatprep.subr.mxu0 0.0
    %2127 = vmatpush1.msra.mxu0 0.0
    %2128 = vmatprep.subr.mxu0 0.0
    %2129 = vmatpush1.msra.mxu0 0.0
    %2130 = vmatprep.subr.mxu0 0.0
    %2131 = vmatpush1.msra.mxu0 0.0
    %2132 = vmatprep.subr.mxu0 0.0
    %2133 = vmatpush1.msra.mxu0 0.0
    %2134 = vmatprep.subr.mxu0 0.0
    %2135 = vmatpush1.msra.mxu0 0.0
    %2136 = vmatprep.subr.mxu0 0.0
    %2137 = vmatpush1.msra.mxu0 0.0
    %2138 = vmatprep.subr.mxu0 0.0
    %2139 = vmatpush1.msra.mxu0 0.0
    %2140 = vmatprep.subr.mxu0 0.0
    %2141 = vmatpush1.msra.mxu0 0.0
    %2142 = vmatprep.mubr.f32.mxu0 0.0
    %2143 = vmatmul.mubr.f32.gmra.mrb[0].mxu0 %v2073
    %v2144 = vpop.f32.mrb[0].mxu0
    %v2145 = vadd.f32 0.0, %v2144
    %v2146 = vpop.f32.mrb[0].mxu0
    %2147 = vmatprep.mubr.f32.mxu0 0.0
    %2148 = vmatmul.mubr.f32.gmra.mrb[0].mxu0 %v2076
    %v2149 = vpop.f32.mrb[0].mxu0
    %v2150 = vadd.f32 0.0, %v2149
    %v2151 = vpop.f32.mrb[0].mxu0
    %2152 = vdwg.mxu0
    %2157 = vrot.lane.b32.xlu0 %v1248, 16
    %v2158 = vpop.permute.xlu0 %2157
    %2159 = vrot.lane.b32.xlu0 %v1253, 16
    %v2160 = vpop.permute.xlu0 %2159
    %2161 = vrot.lane.b32.xlu0 %v1337, 16
    %v2162 = vpop.permute.xlu0 %2161
    %2163 = vrot.lane.b32.xlu0 %v1342, 16
    %v2164 = vpop.permute.xlu0 %2163
    %2173 = vrot.lane.b32.xlu0 %v1654, 32
    %v2174 = vpop.permute.xlu0 %2173
    %2175 = vrot.lane.b32.xlu0 %v1659, 32
    %v2176 = vpop.permute.xlu0 %2175
    %2177 = vrot.lane.b32.xlu0 %v1741, 32
    %v2178 = vpop.permute.xlu0 %2177
    %2179 = vrot.lane.b32.xlu0 %v1746, 32
    %v2180 = vpop.permute.xlu0 %2179
    %2189 = vrot.lane.b32.xlu0 %v2058, 48
    %v2190 = vpop.permute.xlu0 %2189
    %2191 = vrot.lane.b32.xlu0 %v2063, 48
    %v2192 = vpop.permute.xlu0 %2191
    %2193 = vrot.lane.b32.xlu0 %v2145, 48
    %v2194 = vpop.permute.xlu0 %2193
    %2195 = vrot.lane.b32.xlu0 %v2150, 48
    %v2196 = vpop.permute.xlu0 %2195
    %v2201 = vsel %vm554, %v848, %v2158
    %v2202 = vsel %vm554, %v853, %v2160
    %v2203 = vsel %vm554, %v929, %v2162
    %v2204 = vsel %vm554, %v934, %v2164
    %v2205 = vsel %vm75, %v2201, %v2174
    %v2206 = vsel %vm75, %v2202, %v2176
    %v2207 = vsel %vm75, %v2203, %v2178
    %v2208 = vsel %vm75, %v2204, %v2180
    %vm2209 = vcmask 392192
    %v2210 = vsel %vm2209, %v2205, %v2190
    %v2211 = vsel %vm2209, %v2206, %v2192
    %v2212 = vsel %vm2209, %v2207, %v2194
    %v2213 = vsel %vm2209, %v2208, %v2196
    %v2214 = vld [vmem:[%s6] sm:$0xff]
    %v2215 = vld [vmem:[%s6 + $0x8] sm:$0xff]
    %v2216 = vld [vmem:[%s6 + $0x10] sm:$0xff]
    %v2217 = vld [vmem:[%s6 + $0x18] sm:$0xff]
    %v2218 = vld [vmem:[%s6 + $0x20] sm:$0xff]
    %v2219 = vld [vmem:[%s6 + $0x28] sm:$0xff]
    %v2220 = vld [vmem:[%s6 + $0x30] sm:$0xff]
    %v2221 = vld [vmem:[%s6 + $0x38] sm:$0xff]
    %v2222 = vlaneseq
    %v2223 = vshrl.u32 %v2222, 7
    %v2224 = vsub.s32 5, %v2223
    %v2225 = vrot.slane %v48, %v2224
    %vm2226 = vcmask 523264
    %v2228 = vsel %vm2226, %v2210, 0
    %v2231 = vsel %vm2226, %v2211, 0
    %v2234 = vsel %vm2226, %v2212, 0
    %v2237 = vsel %vm2226, %v2213, 0
    %2239 = vmatprep.subr.mxu0 0.0
    %2240 = vmatpush1.msra.mxu0 %v2214
    %2241 = vmatprep.subr.mxu0 0.0
    %2242 = vmatpush1.msra.mxu0 %v2215
    %2243 = vmatprep.subr.mxu0 0.0
    %2244 = vmatpush1.msra.mxu0 %v2216
    %2245 = vmatprep.subr.mxu0 0.0
    %2246 = vmatpush1.msra.mxu0 %v2217
    %2247 = vmatprep.subr.mxu0 0.0
    %2248 = vmatpush1.msra.mxu0 %v2218
    %2249 = vmatprep.subr.mxu0 0.0
    %2250 = vmatpush1.msra.mxu0 %v2219
    %2251 = vmatprep.subr.mxu0 0.0
    %2252 = vmatpush1.msra.mxu0 %v2220
    %2253 = vmatprep.subr.mxu0 0.0
    %2254 = vmatpush1.msra.mxu0 %v2221
    %2255 = vmatprep.subr.mxu0 0.0
    %2256 = vmatpush1.msra.mxu0 0.0
    %2257 = vmatprep.subr.mxu0 0.0
    %2258 = vmatpush1.msra.mxu0 0.0
    %2259 = vmatprep.subr.mxu0 0.0
    %2260 = vmatpush1.msra.mxu0 0.0
    %2261 = vmatprep.subr.mxu0 0.0
    %2262 = vmatpush1.msra.mxu0 0.0
    %2263 = vmatprep.subr.mxu0 0.0
    %2264 = vmatpush1.msra.mxu0 0.0
    %2265 = vmatprep.subr.mxu0 0.0
    %2266 = vmatpush1.msra.mxu0 0.0
    %2267 = vmatprep.subr.mxu0 0.0
    %2268 = vmatpush1.msra.mxu0 0.0
    %2269 = vmatprep.subr.mxu0 0.0
    %2270 = vmatpush1.msra.mxu0 0.0
    %2271 = vmatprep.subr.mxu0 0.0
    %2272 = vmatpush1.msra.mxu0 0.0
    %2273 = vmatprep.subr.mxu0 0.0
    %2274 = vmatpush1.msra.mxu0 0.0
    %2275 = vmatprep.subr.mxu0 0.0
    %2276 = vmatpush1.msra.mxu0 0.0
    %2277 = vmatprep.subr.mxu0 0.0
    %2278 = vmatpush1.msra.mxu0 0.0
    %2279 = vmatprep.subr.mxu0 0.0
    %2280 = vmatpush1.msra.mxu0 0.0
    %2281 = vmatprep.subr.mxu0 0.0
    %2282 = vmatpush1.msra.mxu0 0.0
    %2283 = vmatprep.subr.mxu0 0.0
    %2284 = vmatpush1.msra.mxu0 0.0
    %2285 = vmatprep.subr.mxu0 0.0
    %2286 = vmatpush1.msra.mxu0 0.0
    %2287 = vmatprep.subr.mxu0 0.0
    %2288 = vmatpush1.msra.mxu0 0.0
    %2289 = vmatprep.subr.mxu0 0.0
    %2290 = vmatpush1.msra.mxu0 0.0
    %2291 = vmatprep.subr.mxu0 0.0
    %2292 = vmatpush1.msra.mxu0 0.0
    %2293 = vmatprep.subr.mxu0 0.0
    %2294 = vmatpush1.msra.mxu0 0.0
    %2295 = vmatprep.subr.mxu0 0.0
    %2296 = vmatpush1.msra.mxu0 0.0
    %2297 = vmatprep.subr.mxu0 0.0
    %2298 = vmatpush1.msra.mxu0 0.0
    %2299 = vmatprep.subr.mxu0 0.0
    %2300 = vmatpush1.msra.mxu0 0.0
    %2301 = vmatprep.subr.mxu0 0.0
    %2302 = vmatpush1.msra.mxu0 0.0
    %2303 = vmatprep.mubr.f32.mxu0 0.0
    %2304 = vmatmul.mubr.f32.gmra.mrb[0].mxu0 %v2228
    %v2305 = vpop.f32.mrb[0].mxu0
    %v2306 = vadd.f32 %v2225, %v2305
    %v2307 = vpop.f32.mrb[0].mxu0
    %2308 = vmatprep.mubr.f32.mxu0 0.0
    %2309 = vmatmul.mubr.f32.gmra.mrb[0].mxu0 %v2231
    %v2310 = vpop.f32.mrb[0].mxu0
    %v2311 = vadd.f32 %v2225, %v2310
    %v2312 = vpop.f32.mrb[0].mxu0
    %2313 = vmatprep.mubr.f32.mxu0 0.0
    %2314 = vmatmul.mubr.f32.gmra.mrb[0].mxu0 %v2234
    %v2315 = vpop.f32.mrb[0].mxu0
    %v2316 = vadd.f32 %v2225, %v2315
    %v2317 = vpop.f32.mrb[0].mxu0
    %2318 = vmatprep.mubr.f32.mxu0 0.0
    %2319 = vmatmul.mubr.f32.gmra.mrb[0].mxu0 %v2237
    %v2320 = vpop.f32.mrb[0].mxu0
    %v2321 = vadd.f32 %v2225, %v2320
    %v2322 = vpop.f32.mrb[0].mxu0
    %2323 = vdwg.mxu0
    %v2324 = vadd.f32 %v2306, %v367
    %v2325 = vadd.f32 %v2311, %v368
    %v2326 = vadd.f32 %v2316, %v369
    %v2327 = vadd.f32 %v2321, %v370
    %v2328 = vsel %vm75, %v2324, 0.0
    %2329 = vadd.xlane.f32.xlu0 %v2328
    %v2330 = vpop.xlane.xlu0 %2329
    %v2331 = vsel %vm75, %v2325, 0.0
    %2332 = vadd.xlane.f32.xlu0 %v2331
    %v2333 = vpop.xlane.xlu0 %2332
    %v2334 = vsel %vm75, %v2326, 0.0
    %2335 = vadd.xlane.f32.xlu0 %v2334
    %v2336 = vpop.xlane.xlu0 %2335
    %v2337 = vsel %vm75, %v2327, 0.0
    %2338 = vadd.xlane.f32.xlu0 %v2337
    %v2339 = vpop.xlane.xlu0 %2338
    %v2340 = vmul.f32 %v2330, %v88
    %v2341 = vmul.f32 %v2333, %v88
    %v2342 = vmul.f32 %v2336, %v88
    %v2343 = vmul.f32 %v2339, %v88
    %v2344 = vsub.f32 %v2324, %v2340
    %v2345 = vsub.f32 %v2325, %v2341
    %v2346 = vsub.f32 %v2326, %v2342
    %v2347 = vsub.f32 %v2327, %v2343
    %v2348 = vmul.f32 %v2344, %v2344
    %v2349 = vmul.f32 %v2345, %v2345
    %v2350 = vmul.f32 %v2346, %v2346
    %v2351 = vmul.f32 %v2347, %v2347
    %v2352 = vsel %vm75, %v2348, 0.0
    %2353 = vadd.xlane.f32.xlu0 %v2352
    %v2354 = vpop.xlane.xlu0 %2353
    %v2355 = vsel %vm75, %v2349, 0.0
    %2356 = vadd.xlane.f32.xlu0 %v2355
    %v2357 = vpop.xlane.xlu0 %2356
    %v2358 = vsel %vm75, %v2350, 0.0
    %2359 = vadd.xlane.f32.xlu0 %v2358
    %v2360 = vpop.xlane.xlu0 %2359
    %v2361 = vsel %vm75, %v2351, 0.0
    %2362 = vadd.xlane.f32.xlu0 %v2361
    %v2363 = vpop.xlane.xlu0 %2362
    %v2364 = vmul.f32 %v2354, %v88
    %v2365 = vmul.f32 %v2357, %v88
    %v2366 = vmul.f32 %v2360, %v88
    %v2367 = vmul.f32 %v2363, %v88
    %v2368 = vadd.f32 %v2364, 1e-05
    %v2369 = vadd.f32 %v2365, 1e-05
    %v2370 = vadd.f32 %v2366, 1e-05
    %v2371 = vadd.f32 %v2367, 1e-05
    %v2372 = vrsqrt.pop %v2368
    %v2373 = vrsqrt.pop %v2369
    %v2374 = vrsqrt.pop %v2370
    %v2375 = vrsqrt.pop %v2371
    %v2376 = vmul.f32 %v2344, %v2372
    %v2377 = vmul.f32 %v2345, %v2373
    %v2378 = vmul.f32 %v2346, %v2374
    %v2379 = vmul.f32 %v2347, %v2375
    %v2380 = vlaneseq
    %v2381 = vshrl.u32 %v2380, 7
    %v2382 = vsub.s32 6, %v2381
    %v2383 = vrot.slane %v48, %v2382
    %v2384 = vmul.f32 %v2376, %v2383
    %v2385 = vmul.f32 %v2377, %v2383
    %v2386 = vmul.f32 %v2378, %v2383
    %v2387 = vmul.f32 %v2379, %v2383
    %v2388 = vlaneseq
    %v2389 = vshrl.u32 %v2388, 7
    %v2390 = vsub.s32 7, %v2389
    %v2391 = vrot.slane %v48, %v2390
    %v2392 = vadd.f32 %v2384, %v2391
    %v2393 = vadd.f32 %v2385, %v2391
    %v2394 = vadd.f32 %v2386, %v2391
    %v2395 = vadd.f32 %v2387, %v2391
    %v2396 = vld [vmem:[%s7] sm:$0xff]
    %v2397 = vld [vmem:[%s7 + $0x8] sm:$0xff]
    %v2398 = vld [vmem:[%s7 + $0x10] sm:$0xff]
    %v2399 = vld [vmem:[%s7 + $0x18] sm:$0xff]
    %v2400 = vlaneseq
    %v2401 = vshrl.u32 %v2400, 7
    %v2402 = vsub.s32 1, %v2401
    %v2403 = vrot.slane %v50, %v2402
    %v2405 = vsel %vm75, %v2392, 0
    %v2408 = vsel %vm75, %v2393, 0
    %v2411 = vsel %vm75, %v2394, 0
    %v2414 = vsel %vm75, %v2395, 0
    %2416 = vmatprep.subr.mxu0 0.0
    %2417 = vmatpush1.msra.mxu0 %v2396
    %2418 = vmatprep.subr.mxu0 0.0
    %2419 = vmatpush1.msra.mxu0 %v2397
    %2420 = vmatprep.subr.mxu0 0.0
    %2421 = vmatpush1.msra.mxu0 %v2398
    %2422 = vmatprep.subr.mxu0 0.0
    %2423 = vmatpush1.msra.mxu0 %v2399
    %2424 = vmatprep.subr.mxu0 0.0
    %2425 = vmatpush1.msra.mxu0 0.0
    %2426 = vmatprep.subr.mxu0 0.0
    %2427 = vmatpush1.msra.mxu0 0.0
    %2428 = vmatprep.subr.mxu0 0.0
    %2429 = vmatpush1.msra.mxu0 0.0
    %2430 = vmatprep.subr.mxu0 0.0
    %2431 = vmatpush1.msra.mxu0 0.0
    %2432 = vmatprep.subr.mxu0 0.0
    %2433 = vmatpush1.msra.mxu0 0.0
    %2434 = vmatprep.subr.mxu0 0.0
    %2435 = vmatpush1.msra.mxu0 0.0
    %2436 = vmatprep.subr.mxu0 0.0
    %2437 = vmatpush1.msra.mxu0 0.0
    %2438 = vmatprep.subr.mxu0 0.0
    %2439 = vmatpush1.msra.mxu0 0.0
    %2440 = vmatprep.subr.mxu0 0.0
    %2441 = vmatpush1.msra.mxu0 0.0
    %2442 = vmatprep.subr.mxu0 0.0
    %2443 = vmatpush1.msra.mxu0 0.0
    %2444 = vmatprep.subr.mxu0 0.0
    %2445 = vmatpush1.msra.mxu0 0.0
    %2446 = vmatprep.subr.mxu0 0.0
    %2447 = vmatpush1.msra.mxu0 0.0
    %2448 = vmatprep.subr.mxu0 0.0
    %2449 = vmatpush1.msra.mxu0 0.0
    %2450 = vmatprep.subr.mxu0 0.0
    %2451 = vmatpush1.msra.mxu0 0.0
    %2452 = vmatprep.subr.mxu0 0.0
    %2453 = vmatpush1.msra.mxu0 0.0
    %2454 = vmatprep.subr.mxu0 0.0
    %2455 = vmatpush1.msra.mxu0 0.0
    %2456 = vmatprep.subr.mxu0 0.0
    %2457 = vmatpush1.msra.mxu0 0.0
    %2458 = vmatprep.subr.mxu0 0.0
    %2459 = vmatpush1.msra.mxu0 0.0
    %2460 = vmatprep.subr.mxu0 0.0
    %2461 = vmatpush1.msra.mxu0 0.0
    %2462 = vmatprep.subr.mxu0 0.0
    %2463 = vmatpush1.msra.mxu0 0.0
    %2464 = vmatprep.subr.mxu0 0.0
    %2465 = vmatpush1.msra.mxu0 0.0
    %2466 = vmatprep.subr.mxu0 0.0
    %2467 = vmatpush1.msra.mxu0 0.0
    %2468 = vmatprep.subr.mxu0 0.0
    %2469 = vmatpush1.msra.mxu0 0.0
    %2470 = vmatprep.subr.mxu0 0.0
    %2471 = vmatpush1.msra.mxu0 0.0
    %2472 = vmatprep.subr.mxu0 0.0
    %2473 = vmatpush1.msra.mxu0 0.0
    %2474 = vmatprep.subr.mxu0 0.0
    %2475 = vmatpush1.msra.mxu0 0.0
    %2476 = vmatprep.subr.mxu0 0.0
    %2477 = vmatpush1.msra.mxu0 0.0
    %2478 = vmatprep.subr.mxu0 0.0
    %2479 = vmatpush1.msra.mxu0 0.0
    %2480 = vmatprep.mubr.f32.mxu0 0.0
    %2481 = vmatmul.mubr.f32.gmra.mrb[0].mxu0 %v2405
    %v2482 = vpop.f32.mrb[0].mxu0
    %v2483 = vadd.f32 %v2403, %v2482
    %v2484 = vpop.f32.mrb[0].mxu0
    %2485 = vmatprep.mubr.f32.mxu0 0.0
    %2486 = vmatmul.mubr.f32.gmra.mrb[0].mxu0 %v2408
    %v2487 = vpop.f32.mrb[0].mxu0
    %v2488 = vadd.f32 %v2403, %v2487
    %v2489 = vpop.f32.mrb[0].mxu0
    %2490 = vmatprep.mubr.f32.mxu0 0.0
    %2491 = vmatmul.mubr.f32.gmra.mrb[0].mxu0 %v2411
    %v2492 = vpop.f32.mrb[0].mxu0
    %v2493 = vadd.f32 %v2403, %v2492
    %v2494 = vpop.f32.mrb[0].mxu0
    %2495 = vmatprep.mubr.f32.mxu0 0.0
    %2496 = vmatmul.mubr.f32.gmra.mrb[0].mxu0 %v2414
    %v2497 = vpop.f32.mrb[0].mxu0
    %v2498 = vadd.f32 %v2403, %v2497
    %v2499 = vpop.f32.mrb[0].mxu0
    %2500 = vdwg.mxu0
    %v2501 = vxor.u32 %v2483, 2147483648
    %v2502 = vxor.u32 %v2488, 2147483648
    %v2503 = vxor.u32 %v2493, 2147483648
    %v2504 = vxor.u32 %v2498, 2147483648
    %v2505 = vmul.f32 %v2501, 1.442695
    %v2506 = vpow.pop %v2505
    %v2507 = vmul.f32 %v2502, 1.442695
    %v2508 = vpow.pop %v2507
    %v2509 = vmul.f32 %v2503, 1.442695
    %v2510 = vpow.pop %v2509
    %v2511 = vmul.f32 %v2504, 1.442695
    %v2512 = vpow.pop %v2511
    %v2513 = vadd.f32 %v2506, 1.0
    %v2514 = vadd.f32 %v2508, 1.0
    %v2515 = vadd.f32 %v2510, 1.0
    %v2516 = vadd.f32 %v2512, 1.0
    %v2517 = vrcp.pop %v2513
    %v2518 = vmul.f32 1.0, %v2517
    %v2519 = vrcp.pop %v2514
    %v2520 = vmul.f32 1.0, %v2519
    %v2521 = vrcp.pop %v2515
    %v2522 = vmul.f32 1.0, %v2521
    %v2523 = vrcp.pop %v2516
    %v2524 = vmul.f32 1.0, %v2523
    %2529 = vrot.lane.b32.xlu0 %v2518, 64
    %v2530 = vpop.permute.xlu0 %2529
    %2531 = vrot.lane.b32.xlu0 %v2520, 64
    %v2532 = vpop.permute.xlu0 %2531
    %2533 = vrot.lane.b32.xlu0 %v2522, 64
    %v2534 = vpop.permute.xlu0 %2533
    %2535 = vrot.lane.b32.xlu0 %v2524, 64
    %v2536 = vpop.permute.xlu0 %2535
    %v2541 = vmul.f32 %v2483, %v2530
    %v2542 = vmul.f32 %v2488, %v2532
    %v2543 = vmul.f32 %v2493, %v2534
    %v2544 = vmul.f32 %v2498, %v2536
    %v2545 = vld [vmem:[%s8] sm:$0x7f]
    %v2547 = vcombine.high %v2545, %v2545
    %v2549 = vunpack.c.l.s4 1966171168
    %v2550 = vunpack.c.0.s8 %v2549
    %v2551 = vlaneseq
    %v2552 = vshrl.u32 %v2551, 7
    %v2553 = vsub.s32 %v2550, %v2552
    %v2554 = vrot.slane %v2545, %v2553
    %v2556 = vunpack.c.l.s4 1966171168
    %v2557 = vunpack.c.0.s8 %v2556
    %v2558 = vlaneseq
    %v2559 = vshrl.u32 %v2558, 7
    %v2560 = vsub.s32 %v2557, %v2559
    %v2561 = vrot.slane %v2547, %v2560
    %v2562 = vcombine.high %v2554, %v2554
    %v2563 = vcombine.high %v2561, %v2561
    %v2565 = vunpack.c.l.s4 1966171168
    %v2566 = vunpack.c.0.s8 %v2565
    %v2567 = vlaneseq
    %v2568 = vshrl.u32 %v2567, 7
    %v2569 = vsub.s32 %v2566, %v2568
    %v2570 = vrot.slane %v2554, %v2569
    %v2572 = vunpack.c.l.s4 1966171168
    %v2573 = vunpack.c.0.s8 %v2572
    %v2574 = vlaneseq
    %v2575 = vshrl.u32 %v2574, 7
    %v2576 = vsub.s32 %v2573, %v2575
    %v2577 = vrot.slane %v2561, %v2576
    %v2579 = vunpack.c.l.s4 1966171168
    %v2580 = vunpack.c.0.s8 %v2579
    %v2581 = vlaneseq
    %v2582 = vshrl.u32 %v2581, 7
    %v2583 = vsub.s32 %v2580, %v2582
    %v2584 = vrot.slane %v2562, %v2583
    %v2586 = vunpack.c.l.s4 1966171168
    %v2587 = vunpack.c.0.s8 %v2586
    %v2588 = vlaneseq
    %v2589 = vshrl.u32 %v2588, 7
    %v2590 = vsub.s32 %v2587, %v2589
    %v2591 = vrot.slane %v2563, %v2590
    %v2592 = vcombine.high %v2570, %v2570
    %v2593 = vcombine.high %v2577, %v2577
    %v2594 = vcombine.high %v2584, %v2584
    %v2595 = vlaneseq
    %v2596 = vshrl.u32 %v2595, 7
    %v2597 = vsub.s32 0, %v2596
    %v2598 = vrot.slane %v2570, %v2597
    %v2599 = vlaneseq
    %v2600 = vshrl.u32 %v2599, 7
    %v2601 = vsub.s32 0, %v2600
    %v2602 = vrot.slane %v2584, %v2601
    %v2603 = vlaneseq
    %v2604 = vshrl.u32 %v2603, 7
    %v2605 = vsub.s32 0, %v2604
    %v2606 = vrot.slane %v2592, %v2605
    %v2607 = vlaneseq
    %v2608 = vshrl.u32 %v2607, 7
    %v2609 = vsub.s32 0, %v2608
    %v2610 = vrot.slane %v2594, %v2609
    %v2611 = vlaneseq
    %v2612 = vshrl.u32 %v2611, 7
    %v2613 = vsub.s32 0, %v2612
    %v2614 = vrot.slane %v2577, %v2613
    %v2615 = vlaneseq
    %v2616 = vshrl.u32 %v2615, 7
    %v2617 = vsub.s32 0, %v2616
    %v2618 = vrot.slane %v2591, %v2617
    %v2619 = vlaneseq
    %v2620 = vshrl.u32 %v2619, 7
    %v2621 = vsub.s32 0, %v2620
    %v2622 = vrot.slane %v2593, %v2621
    %v2630 = vmul.f32 %v2598, %v2541
    %v2631 = vmul.f32 %v2598, %v2542
    %v2632 = vmul.f32 %v2598, %v2543
    %v2633 = vmul.f32 %v2598, %v2544
    %v2634 = vmul.f32 %v2602, %v2541
    %v2635 = vmul.f32 %v2602, %v2542
    %v2636 = vmul.f32 %v2602, %v2543
    %v2637 = vmul.f32 %v2602, %v2544
    %v2638 = vmul.f32 %v2606, %v2541
    %v2639 = vmul.f32 %v2606, %v2542
    %v2640 = vmul.f32 %v2606, %v2543
    %v2641 = vmul.f32 %v2606, %v2544
    %v2642 = vmul.f32 %v2610, %v2541
    %v2643 = vmul.f32 %v2610, %v2542
    %v2644 = vmul.f32 %v2610, %v2543
    %v2645 = vmul.f32 %v2610, %v2544
    %v2646 = vmul.f32 %v2614, %v2541
    %v2647 = vmul.f32 %v2614, %v2542
    %v2648 = vmul.f32 %v2614, %v2543
    %v2649 = vmul.f32 %v2614, %v2544
    %v2650 = vmul.f32 %v2618, %v2541
    %v2651 = vmul.f32 %v2618, %v2542
    %v2652 = vmul.f32 %v2618, %v2543
    %v2653 = vmul.f32 %v2618, %v2544
    %v2654 = vmul.f32 %v2622, %v2541
    %v2655 = vmul.f32 %v2622, %v2542
    %v2656 = vmul.f32 %v2622, %v2543
    %v2657 = vmul.f32 %v2622, %v2544
    %v2658 = vld [vmem:[%s10] sm:$0xff]
    %v2659 = vld [vmem:[%s10 + $0x8] sm:$0xff]
    %v2660 = vld [vmem:[%s10 + $0x10] sm:$0xff]
    %v2661 = vld [vmem:[%s10 + $0x18] sm:$0xff]
    %v2662 = vld [vmem:[%s10 + $0x20] sm:$0xff]
    %v2663 = vld [vmem:[%s10 + $0x28] sm:$0xff]
    %v2664 = vld [vmem:[%s10 + $0x30] sm:$0xff]
    %v2665 = vld [vmem:[%s10 + $0x38] sm:$0xff]
    %v2666 = vld [vmem:[%s9] sm:$0x1]
    %v2668 = vlaneseq
    %v2669 = vshrl.u32 %v2668, 7
    %v2670 = vsub.s32 0, %v2669
    %v2671 = vrot.slane %v2666, %v2670
    %vm2673 = vcmask 785408
    %v2675 = vsel %vm2673, %v2659, 0
    %v2678 = vsel %vm2673, %v2661, 0
    %v2681 = vsel %vm2673, %v2663, 0
    %v2684 = vsel %vm2673, %v2665, 0
    %2686 = vmatprep.subr.mxu0 0.0
    %2687 = vmatpush1.msra.mxu0 %v2630
    %2688 = vmatprep.subr.mxu0 0.0
    %2689 = vmatpush1.msra.mxu0 %v2631
    %2690 = vmatprep.subr.mxu0 0.0
    %2691 = vmatpush1.msra.mxu0 %v2632
    %2692 = vmatprep.subr.mxu0 0.0
    %2693 = vmatpush1.msra.mxu0 %v2633
    %2694 = vmatprep.subr.mxu0 0.0
    %2695 = vmatpush1.msra.mxu0 %v2634
    %2696 = vmatprep.subr.mxu0 0.0
    %2697 = vmatpush1.msra.mxu0 %v2635
    %2698 = vmatprep.subr.mxu0 0.0
    %2699 = vmatpush1.msra.mxu0 %v2636
    %2700 = vmatprep.subr.mxu0 0.0
    %2701 = vmatpush1.msra.mxu0 %v2637
    %2702 = vmatprep.subr.mxu0 0.0
    %2703 = vmatpush1.msra.mxu0 %v2638
    %2704 = vmatprep.subr.mxu0 0.0
    %2705 = vmatpush1.msra.mxu0 %v2639
    %2706 = vmatprep.subr.mxu0 0.0
    %2707 = vmatpush1.msra.mxu0 %v2640
    %2708 = vmatprep.subr.mxu0 0.0
    %2709 = vmatpush1.msra.mxu0 %v2641
    %2710 = vmatprep.subr.mxu0 0.0
    %2711 = vmatpush1.msra.mxu0 %v2642
    %2712 = vmatprep.subr.mxu0 0.0
    %2713 = vmatpush1.msra.mxu0 %v2643
    %2714 = vmatprep.subr.mxu0 0.0
    %2715 = vmatpush1.msra.mxu0 %v2644
    %2716 = vmatprep.subr.mxu0 0.0
    %2717 = vmatpush1.msra.mxu0 %v2645
    %2718 = vmatprep.subr.mxu0 0.0
    %2719 = vmatpush1.msra.mxu0 %v2646
    %2720 = vmatprep.subr.mxu0 0.0
    %2721 = vmatpush1.msra.mxu0 %v2647
    %2722 = vmatprep.subr.mxu0 0.0
    %2723 = vmatpush1.msra.mxu0 %v2648
    %2724 = vmatprep.subr.mxu0 0.0
    %2725 = vmatpush1.msra.mxu0 %v2649
    %2726 = vmatprep.subr.mxu0 0.0
    %2727 = vmatpush1.msra.mxu0 %v2650
    %2728 = vmatprep.subr.mxu0 0.0
    %2729 = vmatpush1.msra.mxu0 %v2651
    %2730 = vmatprep.subr.mxu0 0.0
    %2731 = vmatpush1.msra.mxu0 %v2652
    %2732 = vmatprep.subr.mxu0 0.0
    %2733 = vmatpush1.msra.mxu0 %v2653
    %2734 = vmatprep.subr.mxu0 0.0
    %2735 = vmatpush1.msra.mxu0 %v2654
    %2736 = vmatprep.subr.mxu0 0.0
    %2737 = vmatpush1.msra.mxu0 %v2655
    %2738 = vmatprep.subr.mxu0 0.0
    %2739 = vmatpush1.msra.mxu0 %v2656
    %2740 = vmatprep.subr.mxu0 0.0
    %2741 = vmatpush1.msra.mxu0 %v2657
    %2742 = vmatprep.subr.mxu0 0.0
    %2743 = vmatpush1.msra.mxu0 0.0
    %2744 = vmatprep.subr.mxu0 0.0
    %2745 = vmatpush1.msra.mxu0 0.0
    %2746 = vmatprep.subr.mxu0 0.0
    %2747 = vmatpush1.msra.mxu0 0.0
    %2748 = vmatprep.subr.mxu0 0.0
    %2749 = vmatpush1.msra.mxu0 0.0
    %2750 = vmatprep.mubr.f32.mxu0 %v2675
    %2751 = vmatmul.mubr.f32.gmra.mrb[0].mxu0 %v2658
    %v2752 = vpop.f32.mrb[0].mxu0
    %v2753 = vadd.f32 %v2671, %v2752
    %v2754 = vpop.f32.mrb[0].mxu0
    %2755 = vmatprep.mubr.f32.mxu0 %v2678
    %2756 = vmatmul.mubr.f32.gmra.mrb[0].mxu0 %v2660
    %v2757 = vpop.f32.mrb[0].mxu0
    %v2758 = vadd.f32 %v2671, %v2757
    %v2759 = vpop.f32.mrb[0].mxu0
    %2760 = vmatprep.mubr.f32.mxu0 %v2681
    %2761 = vmatmul.mubr.f32.gmra.mrb[0].mxu0 %v2662
    %v2762 = vpop.f32.mrb[0].mxu0
    %v2763 = vadd.f32 %v2671, %v2762
    %v2764 = vpop.f32.mrb[0].mxu0
    %2765 = vmatprep.mubr.f32.mxu0 %v2684
    %2766 = vmatmul.mubr.f32.gmra.mrb[0].mxu0 %v2664
    %v2767 = vpop.f32.mrb[0].mxu0
    %v2768 = vadd.f32 %v2671, %v2767
    %v2769 = vpop.f32.mrb[0].mxu0
    %2770 = vdwg.mxu0
    %v2771 = vxor.u32 %v2753, 2147483648
    %v2772 = vxor.u32 %v2758, 2147483648
    %v2773 = vxor.u32 %v2763, 2147483648
    %v2774 = vxor.u32 %v2768, 2147483648
    %v2775 = vmul.f32 %v2771, 1.442695
    %v2776 = vpow.pop %v2775
    %v2777 = vmul.f32 %v2772, 1.442695
    %v2778 = vpow.pop %v2777
    %v2779 = vmul.f32 %v2773, 1.442695
    %v2780 = vpow.pop %v2779
    %v2781 = vmul.f32 %v2774, 1.442695
    %v2782 = vpow.pop %v2781
    %v2783 = vadd.f32 %v2776, 1.0
    %v2784 = vadd.f32 %v2778, 1.0
    %v2785 = vadd.f32 %v2780, 1.0
    %v2786 = vadd.f32 %v2782, 1.0
    %v2787 = vrcp.pop %v2783
    %v2788 = vmul.f32 1.0, %v2787
    %v2789 = vrcp.pop %v2784
    %v2790 = vmul.f32 1.0, %v2789
    %v2791 = vrcp.pop %v2785
    %v2792 = vmul.f32 1.0, %v2791
    %v2793 = vrcp.pop %v2786
    %v2794 = vmul.f32 1.0, %v2793
    %v2795 = vmul.f32 %v2753, %v2788
    %v2796 = vmul.f32 %v2758, %v2790
    %v2797 = vmul.f32 %v2763, %v2792
    %v2798 = vmul.f32 %v2768, %v2794
    %v2799 = vld [vmem:[%s11] sm:$0xff]
    %v2800 = vld [vmem:[%s11 + $0x8] sm:$0xff]
    %v2801 = vld [vmem:[%s11 + $0x10] sm:$0xff]
    %v2802 = vld [vmem:[%s11 + $0x18] sm:$0xff]
    %v2803 = vld [vmem:[%s11 + $0x20] sm:$0xff]
    %v2804 = vld [vmem:[%s11 + $0x28] sm:$0xff]
    %v2805 = vld [vmem:[%s11 + $0x30] sm:$0xff]
    %v2806 = vld [vmem:[%s11 + $0x38] sm:$0xff]
    %v2807 = vlaneseq
    %v2808 = vshrl.u32 %v2807, 7
    %v2809 = vsub.s32 0, %v2808
    %v2810 = vrot.slane %v49, %v2809
    %v2812 = vsel %vm2226, %v2795, 0
    %v2815 = vsel %vm2226, %v2796, 0
    %v2818 = vsel %vm2226, %v2797, 0
    %v2821 = vsel %vm2226, %v2798, 0
    %2823 = vmatprep.subr.mxu0 0.0
    %2824 = vmatpush1.msra.mxu0 %v2799
    %2825 = vmatprep.subr.mxu0 0.0
    %2826 = vmatpush1.msra.mxu0 %v2800
    %2827 = vmatprep.subr.mxu0 0.0
    %2828 = vmatpush1.msra.mxu0 %v2801
    %2829 = vmatprep.subr.mxu0 0.0
    %2830 = vmatpush1.msra.mxu0 %v2802
    %2831 = vmatprep.subr.mxu0 0.0
    %2832 = vmatpush1.msra.mxu0 %v2803
    %2833 = vmatprep.subr.mxu0 0.0
    %2834 = vmatpush1.msra.mxu0 %v2804
    %2835 = vmatprep.subr.mxu0 0.0
    %2836 = vmatpush1.msra.mxu0 %v2805
    %2837 = vmatprep.subr.mxu0 0.0
    %2838 = vmatpush1.msra.mxu0 %v2806
    %2839 = vmatprep.subr.mxu0 0.0
    %2840 = vmatpush1.msra.mxu0 0.0
    %2841 = vmatprep.subr.mxu0 0.0
    %2842 = vmatpush1.msra.mxu0 0.0
    %2843 = vmatprep.subr.mxu0 0.0
    %2844 = vmatpush1.msra.mxu0 0.0
    %2845 = vmatprep.subr.mxu0 0.0
    %2846 = vmatpush1.msra.mxu0 0.0
    %2847 = vmatprep.subr.mxu0 0.0
    %2848 = vmatpush1.msra.mxu0 0.0
    %2849 = vmatprep.subr.mxu0 0.0
    %2850 = vmatpush1.msra.mxu0 0.0
    %2851 = vmatprep.subr.mxu0 0.0
    %2852 = vmatpush1.msra.mxu0 0.0
    %2853 = vmatprep.subr.mxu0 0.0
    %2854 = vmatpush1.msra.mxu0 0.0
    %2855 = vmatprep.subr.mxu0 0.0
    %2856 = vmatpush1.msra.mxu0 0.0
    %2857 = vmatprep.subr.mxu0 0.0
    %2858 = vmatpush1.msra.mxu0 0.0
    %2859 = vmatprep.subr.mxu0 0.0
    %2860 = vmatpush1.msra.mxu0 0.0
    %2861 = vmatprep.subr.mxu0 0.0
    %2862 = vmatpush1.msra.mxu0 0.0
    %2863 = vmatprep.subr.mxu0 0.0
    %2864 = vmatpush1.msra.mxu0 0.0
    %2865 = vmatprep.subr.mxu0 0.0
    %2866 = vmatpush1.msra.mxu0 0.0
    %2867 = vmatprep.subr.mxu0 0.0
    %2868 = vmatpush1.msra.mxu0 0.0
    %2869 = vmatprep.subr.mxu0 0.0
    %2870 = vmatpush1.msra.mxu0 0.0
    %2871 = vmatprep.subr.mxu0 0.0
    %2872 = vmatpush1.msra.mxu0 0.0
    %2873 = vmatprep.subr.mxu0 0.0
    %2874 = vmatpush1.msra.mxu0 0.0
    %2875 = vmatprep.subr.mxu0 0.0
    %2876 = vmatpush1.msra.mxu0 0.0
    %2877 = vmatprep.subr.mxu0 0.0
    %2878 = vmatpush1.msra.mxu0 0.0
    %2879 = vmatprep.subr.mxu0 0.0
    %2880 = vmatpush1.msra.mxu0 0.0
    %2881 = vmatprep.subr.mxu0 0.0
    %2882 = vmatpush1.msra.mxu0 0.0
    %2883 = vmatprep.subr.mxu0 0.0
    %2884 = vmatpush1.msra.mxu0 0.0
    %2885 = vmatprep.subr.mxu0 0.0
    %2886 = vmatpush1.msra.mxu0 0.0
    %2887 = vmatprep.mubr.f32.mxu0 0.0
    %2888 = vmatmul.mubr.f32.gmra.mrb[0].mxu0 %v2812
    %v2889 = vpop.f32.mrb[0].mxu0
    %v2890 = vadd.f32 %v2810, %v2889
    %v2891 = vpop.f32.mrb[0].mxu0
    %2892 = vmatprep.mubr.f32.mxu0 0.0
    %2893 = vmatmul.mubr.f32.gmra.mrb[0].mxu0 %v2815
    %v2894 = vpop.f32.mrb[0].mxu0
    %v2895 = vadd.f32 %v2810, %v2894
    %v2896 = vpop.f32.mrb[0].mxu0
    %2897 = vmatprep.mubr.f32.mxu0 0.0
    %2898 = vmatmul.mubr.f32.gmra.mrb[0].mxu0 %v2818
    %v2899 = vpop.f32.mrb[0].mxu0
    %v2900 = vadd.f32 %v2810, %v2899
    %v2901 = vpop.f32.mrb[0].mxu0
    %2902 = vmatprep.mubr.f32.mxu0 0.0
    %2903 = vmatmul.mubr.f32.gmra.mrb[0].mxu0 %v2821
    %v2904 = vpop.f32.mrb[0].mxu0
    %v2905 = vadd.f32 %v2810, %v2904
    %v2906 = vpop.f32.mrb[0].mxu0
    %2907 = vdwg.mxu0
    %v2908 = vadd.f32 %v2890, %v2324
    %v2909 = vadd.f32 %v2895, %v2325
    %v2910 = vadd.f32 %v2900, %v2326
    %v2911 = vadd.f32 %v2905, %v2327
    %v2912 = vld [vmem:[%s12] sm:$0xff]
    %v2913 = vld [vmem:[%s12 + $0x8] sm:$0xff]
    %v2914 = vld [vmem:[%s12 + $0x10] sm:$0xff]
    %v2915 = vld [vmem:[%s12 + $0x18] sm:$0xff]
    %v2916 = vld [vmem:[%s13] sm:$0xff]
    %v2917 = vld [vmem:[%s13 + $0x8] sm:$0xff]
    %v2918 = vld [vmem:[%s13 + $0x10] sm:$0xff]
    %v2919 = vld [vmem:[%s13 + $0x18] sm:$0xff]
    %v2920 = vld [vmem:[%s13 + $0x20] sm:$0xff]
    %v2921 = vld [vmem:[%s13 + $0x28] sm:$0xff]
    %v2922 = vld [vmem:[%s13 + $0x30] sm:$0xff]
    %v2923 = vld [vmem:[%s13 + $0x38] sm:$0xff]
    %v2924 = vld [vmem:[%s13 + $0x40] sm:$0xff]
    %v2925 = vld [vmem:[%s13 + $0x48] sm:$0xff]
    %v2926 = vld [vmem:[%s13 + $0x50] sm:$0xff]
    %v2927 = vld [vmem:[%s13 + $0x58] sm:$0xff]
    %v2928 = vld [vmem:[%s13 + $0x60] sm:$0xff]
    %v2929 = vld [vmem:[%s13 + $0x68] sm:$0xff]
    %v2930 = vld [vmem:[%s13 + $0x70] sm:$0xff]
    %v2931 = vld [vmem:[%s13 + $0x78] sm:$0xff]
    %v2932 = vsel %vm75, %v2908, 0.0
    %2933 = vadd.xlane.f32.xlu0 %v2932
    %v2934 = vpop.xlane.xlu0 %2933
    %v2935 = vsel %vm75, %v2909, 0.0
    %2936 = vadd.xlane.f32.xlu0 %v2935
    %v2937 = vpop.xlane.xlu0 %2936
    %v2938 = vsel %vm75, %v2910, 0.0
    %2939 = vadd.xlane.f32.xlu0 %v2938
    %v2940 = vpop.xlane.xlu0 %2939
    %v2941 = vsel %vm75, %v2911, 0.0
    %2942 = vadd.xlane.f32.xlu0 %v2941
    %v2943 = vpop.xlane.xlu0 %2942
    %v2944 = vmul.f32 %v2934, %v88
    %v2945 = vmul.f32 %v2937, %v88
    %v2946 = vmul.f32 %v2940, %v88
    %v2947 = vmul.f32 %v2943, %v88
    %v2948 = vsub.f32 %v2908, %v2944
    %v2949 = vsub.f32 %v2909, %v2945
    %v2950 = vsub.f32 %v2910, %v2946
    %v2951 = vsub.f32 %v2911, %v2947
    %v2952 = vmul.f32 %v2948, %v2948
    %v2953 = vmul.f32 %v2949, %v2949
    %v2954 = vmul.f32 %v2950, %v2950
    %v2955 = vmul.f32 %v2951, %v2951
    %v2956 = vsel %vm75, %v2952, 0.0
    %2957 = vadd.xlane.f32.xlu0 %v2956
    %v2958 = vpop.xlane.xlu0 %2957
    %v2959 = vsel %vm75, %v2953, 0.0
    %2960 = vadd.xlane.f32.xlu0 %v2959
    %v2961 = vpop.xlane.xlu0 %2960
    %v2962 = vsel %vm75, %v2954, 0.0
    %2963 = vadd.xlane.f32.xlu0 %v2962
    %v2964 = vpop.xlane.xlu0 %2963
    %v2965 = vsel %vm75, %v2955, 0.0
    %2966 = vadd.xlane.f32.xlu0 %v2965
    %v2967 = vpop.xlane.xlu0 %2966
    %v2968 = vmul.f32 %v2958, %v88
    %v2969 = vmul.f32 %v2961, %v88
    %v2970 = vmul.f32 %v2964, %v88
    %v2971 = vmul.f32 %v2967, %v88
    %v2972 = vadd.f32 %v2968, 1e-05
    %v2973 = vadd.f32 %v2969, 1e-05
    %v2974 = vadd.f32 %v2970, 1e-05
    %v2975 = vadd.f32 %v2971, 1e-05
    %v2976 = vrsqrt.pop %v2972
    %v2977 = vrsqrt.pop %v2973
    %v2978 = vrsqrt.pop %v2974
    %v2979 = vrsqrt.pop %v2975
    %v2980 = vmul.f32 %v2948, %v2976
    %v2981 = vmul.f32 %v2949, %v2977
    %v2982 = vmul.f32 %v2950, %v2978
    %v2983 = vmul.f32 %v2951, %v2979
    %v2984 = vlaneseq
    %v2985 = vshrl.u32 %v2984, 7
    %v2986 = vsub.s32 1, %v2985
    %v2987 = vrot.slane %v49, %v2986
    %v2988 = vmul.f32 %v2980, %v2987
    %v2989 = vmul.f32 %v2981, %v2987
    %v2990 = vmul.f32 %v2982, %v2987
    %v2991 = vmul.f32 %v2983, %v2987
    %v2992 = vlaneseq
    %v2993 = vshrl.u32 %v2992, 7
    %v2994 = vsub.s32 2, %v2993
    %v2995 = vrot.slane %v49, %v2994
    %v2996 = vadd.f32 %v2988, %v2995
    %v2997 = vadd.f32 %v2989, %v2995
    %v2998 = vadd.f32 %v2990, %v2995
    %v2999 = vadd.f32 %v2991, %v2995
    %v3000 = vlaneseq
    %v3001 = vshrl.u32 %v3000, 7
    %v3002 = vsub.s32 2, %v3001
    %v3003 = vrot.slane %v50, %v3002
    %v3005 = vsel %vm75, %v2996, 0
    %v3008 = vsel %vm75, %v2997, 0
    %v3011 = vsel %vm75, %v2998, 0
    %v3014 = vsel %vm75, %v2999, 0
    %3016 = vmatprep.subr.mxu0 0.0
    %3017 = vmatpush1.msra.mxu0 %v2912
    %3018 = vmatprep.subr.mxu0 0.0
    %3019 = vmatpush1.msra.mxu0 %v2913
    %3020 = vmatprep.subr.mxu0 0.0
    %3021 = vmatpush1.msra.mxu0 %v2914
    %3022 = vmatprep.subr.mxu0 0.0
    %3023 = vmatpush1.msra.mxu0 %v2915
    %3024 = vmatprep.subr.mxu0 0.0
    %3025 = vmatpush1.msra.mxu0 0.0
    %3026 = vmatprep.subr.mxu0 0.0
    %3027 = vmatpush1.msra.mxu0 0.0
    %3028 = vmatprep.subr.mxu0 0.0
    %3029 = vmatpush1.msra.mxu0 0.0
    %3030 = vmatprep.subr.mxu0 0.0
    %3031 = vmatpush1.msra.mxu0 0.0
    %3032 = vmatprep.subr.mxu0 0.0
    %3033 = vmatpush1.msra.mxu0 0.0
    %3034 = vmatprep.subr.mxu0 0.0
    %3035 = vmatpush1.msra.mxu0 0.0
    %3036 = vmatprep.subr.mxu0 0.0
    %3037 = vmatpush1.msra.mxu0 0.0
    %3038 = vmatprep.subr.mxu0 0.0
    %3039 = vmatpush1.msra.mxu0 0.0
    %3040 = vmatprep.subr.mxu0 0.0
    %3041 = vmatpush1.msra.mxu0 0.0
    %3042 = vmatprep.subr.mxu0 0.0
    %3043 = vmatpush1.msra.mxu0 0.0
    %3044 = vmatprep.subr.mxu0 0.0
    %3045 = vmatpush1.msra.mxu0 0.0
    %3046 = vmatprep.subr.mxu0 0.0
    %3047 = vmatpush1.msra.mxu0 0.0
    %3048 = vmatprep.subr.mxu0 0.0
    %3049 = vmatpush1.msra.mxu0 0.0
    %3050 = vmatprep.subr.mxu0 0.0
    %3051 = vmatpush1.msra.mxu0 0.0
    %3052 = vmatprep.subr.mxu0 0.0
    %3053 = vmatpush1.msra.mxu0 0.0
    %3054 = vmatprep.subr.mxu0 0.0
    %3055 = vmatpush1.msra.mxu0 0.0
    %3056 = vmatprep.subr.mxu0 0.0
    %3057 = vmatpush1.msra.mxu0 0.0
    %3058 = vmatprep.subr.mxu0 0.0
    %3059 = vmatpush1.msra.mxu0 0.0
    %3060 = vmatprep.subr.mxu0 0.0
    %3061 = vmatpush1.msra.mxu0 0.0
    %3062 = vmatprep.subr.mxu0 0.0
    %3063 = vmatpush1.msra.mxu0 0.0
    %3064 = vmatprep.subr.mxu0 0.0
    %3065 = vmatpush1.msra.mxu0 0.0
    %3066 = vmatprep.subr.mxu0 0.0
    %3067 = vmatpush1.msra.mxu0 0.0
    %3068 = vmatprep.subr.mxu0 0.0
    %3069 = vmatpush1.msra.mxu0 0.0
    %3070 = vmatprep.subr.mxu0 0.0
    %3071 = vmatpush1.msra.mxu0 0.0
    %3072 = vmatprep.subr.mxu0 0.0
    %3073 = vmatpush1.msra.mxu0 0.0
    %3074 = vmatprep.subr.mxu0 0.0
    %3075 = vmatpush1.msra.mxu0 0.0
    %3076 = vmatprep.subr.mxu0 0.0
    %3077 = vmatpush1.msra.mxu0 0.0
    %3078 = vmatprep.subr.mxu0 0.0
    %3079 = vmatpush1.msra.mxu0 0.0
    %3080 = vmatprep.mubr.f32.mxu0 0.0
    %3081 = vmatmul.mubr.f32.gmra.mrb[0].mxu0 %v3005
    %v3082 = vpop.f32.mrb[0].mxu0
    %v3083 = vadd.f32 %v3003, %v3082
    %v3084 = vpop.f32.mrb[0].mxu0
    %3085 = vmatprep.mubr.f32.mxu0 0.0
    %3086 = vmatmul.mubr.f32.gmra.mrb[0].mxu0 %v3008
    %v3087 = vpop.f32.mrb[0].mxu0
    %v3088 = vadd.f32 %v3003, %v3087
    %v3089 = vpop.f32.mrb[0].mxu0
    %3090 = vmatprep.mubr.f32.mxu0 0.0
    %3091 = vmatmul.mubr.f32.gmra.mrb[0].mxu0 %v3011
    %v3092 = vpop.f32.mrb[0].mxu0
    %v3093 = vadd.f32 %v3003, %v3092
    %v3094 = vpop.f32.mrb[0].mxu0
    %3095 = vmatprep.mubr.f32.mxu0 0.0
    %3096 = vmatmul.mubr.f32.gmra.mrb[0].mxu0 %v3014
    %v3097 = vpop.f32.mrb[0].mxu0
    %v3098 = vadd.f32 %v3003, %v3097
    %v3099 = vpop.f32.mrb[0].mxu0
    %3100 = vdwg.mxu0
    %v3101 = vxor.u32 %v3083, 2147483648
    %v3102 = vxor.u32 %v3088, 2147483648
    %v3103 = vxor.u32 %v3093, 2147483648
    %v3104 = vxor.u32 %v3098, 2147483648
    %v3105 = vmul.f32 %v3101, 1.442695
    %v3106 = vpow.pop %v3105
    %v3107 = vmul.f32 %v3102, 1.442695
    %v3108 = vpow.pop %v3107
    %v3109 = vmul.f32 %v3103, 1.442695
    %v3110 = vpow.pop %v3109
    %v3111 = vmul.f32 %v3104, 1.442695
    %v3112 = vpow.pop %v3111
    %v3113 = vadd.f32 %v3106, 1.0
    %v3114 = vadd.f32 %v3108, 1.0
    %v3115 = vadd.f32 %v3110, 1.0
    %v3116 = vadd.f32 %v3112, 1.0
    %v3117 = vrcp.pop %v3113
    %v3118 = vmul.f32 1.0, %v3117
    %v3119 = vrcp.pop %v3114
    %v3120 = vmul.f32 1.0, %v3119
    %v3121 = vrcp.pop %v3115
    %v3122 = vmul.f32 1.0, %v3121
    %v3123 = vrcp.pop %v3116
    %v3124 = vmul.f32 1.0, %v3123
    %v3125 = vmul.f32 %v3083, %v3118
    %v3126 = vmul.f32 %v3088, %v3120
    %v3127 = vmul.f32 %v3093, %v3122
    %v3128 = vmul.f32 %v3098, %v3124
    %v3129 = vlaneseq
    %v3130 = vshrl.u32 %v3129, 7
    %v3131 = vsub.s32 3, %v3130
    %v3132 = vrot.slane %v49, %v3131
    %3133 = vmatprep.subr.mxu0 0.0
    %3134 = vmatpush1.msra.mxu0 %v2916
    %3135 = vmatprep.subr.mxu0 0.0
    %3136 = vmatpush1.msra.mxu0 %v2917
    %3137 = vmatprep.subr.mxu0 0.0
    %3138 = vmatpush1.msra.mxu0 %v2918
    %3139 = vmatprep.subr.mxu0 0.0
    %3140 = vmatpush1.msra.mxu0 %v2919
    %3141 = vmatprep.subr.mxu0 0.0
    %3142 = vmatpush1.msra.mxu0 %v2920
    %3143 = vmatprep.subr.mxu0 0.0
    %3144 = vmatpush1.msra.mxu0 %v2921
    %3145 = vmatprep.subr.mxu0 0.0
    %3146 = vmatpush1.msra.mxu0 %v2922
    %3147 = vmatprep.subr.mxu0 0.0
    %3148 = vmatpush1.msra.mxu0 %v2923
    %3149 = vmatprep.subr.mxu0 0.0
    %3150 = vmatpush1.msra.mxu0 %v2924
    %3151 = vmatprep.subr.mxu0 0.0
    %3152 = vmatpush1.msra.mxu0 %v2925
    %3153 = vmatprep.subr.mxu0 0.0
    %3154 = vmatpush1.msra.mxu0 %v2926
    %3155 = vmatprep.subr.mxu0 0.0
    %3156 = vmatpush1.msra.mxu0 %v2927
    %3157 = vmatprep.subr.mxu0 0.0
    %3158 = vmatpush1.msra.mxu0 %v2928
    %3159 = vmatprep.subr.mxu0 0.0
    %3160 = vmatpush1.msra.mxu0 %v2929
    %3161 = vmatprep.subr.mxu0 0.0
    %3162 = vmatpush1.msra.mxu0 %v2930
    %3163 = vmatprep.subr.mxu0 0.0
    %3164 = vmatpush1.msra.mxu0 %v2931
    %3165 = vmatprep.subr.mxu0 0.0
    %3166 = vmatpush1.msra.mxu0 0.0
    %3167 = vmatprep.subr.mxu0 0.0
    %3168 = vmatpush1.msra.mxu0 0.0
    %3169 = vmatprep.subr.mxu0 0.0
    %3170 = vmatpush1.msra.mxu0 0.0
    %3171 = vmatprep.subr.mxu0 0.0
    %3172 = vmatpush1.msra.mxu0 0.0
    %3173 = vmatprep.subr.mxu0 0.0
    %3174 = vmatpush1.msra.mxu0 0.0
    %3175 = vmatprep.subr.mxu0 0.0
    %3176 = vmatpush1.msra.mxu0 0.0
    %3177 = vmatprep.subr.mxu0 0.0
    %3178 = vmatpush1.msra.mxu0 0.0
    %3179 = vmatprep.subr.mxu0 0.0
    %3180 = vmatpush1.msra.mxu0 0.0
    %3181 = vmatprep.subr.mxu0 0.0
    %3182 = vmatpush1.msra.mxu0 0.0
    %3183 = vmatprep.subr.mxu0 0.0
    %3184 = vmatpush1.msra.mxu0 0.0
    %3185 = vmatprep.subr.mxu0 0.0
    %3186 = vmatpush1.msra.mxu0 0.0
    %3187 = vmatprep.subr.mxu0 0.0
    %3188 = vmatpush1.msra.mxu0 0.0
    %3189 = vmatprep.subr.mxu0 0.0
    %3190 = vmatpush1.msra.mxu0 0.0
    %3191 = vmatprep.subr.mxu0 0.0
    %3192 = vmatpush1.msra.mxu0 0.0
    %3193 = vmatprep.subr.mxu0 0.0
    %3194 = vmatpush1.msra.mxu0 0.0
    %3195 = vmatprep.subr.mxu0 0.0
    %3196 = vmatpush1.msra.mxu0 0.0
    %3197 = vmatprep.mubr.f32.mxu0 0.0
    %3198 = vmatmul.mubr.f32.gmra.mrb[0].mxu0 %v3125
    %v3199 = vpop.f32.mrb[0].mxu0
    %v3200 = vadd.f32 %v3132, %v3199
    %v3201 = vpop.f32.mrb[0].mxu0
    %3202 = vmatprep.mubr.f32.mxu0 0.0
    %3203 = vmatmul.mubr.f32.gmra.mrb[0].mxu0 %v3126
    %v3204 = vpop.f32.mrb[0].mxu0
    %v3205 = vadd.f32 %v3132, %v3204
    %v3206 = vpop.f32.mrb[0].mxu0
    %3207 = vmatprep.mubr.f32.mxu0 0.0
    %3208 = vmatmul.mubr.f32.gmra.mrb[0].mxu0 %v3127
    %v3209 = vpop.f32.mrb[0].mxu0
    %v3210 = vadd.f32 %v3132, %v3209
    %v3211 = vpop.f32.mrb[0].mxu0
    %3212 = vmatprep.mubr.f32.mxu0 0.0
    %3213 = vmatmul.mubr.f32.gmra.mrb[0].mxu0 %v3128
    %v3214 = vpop.f32.mrb[0].mxu0
    %v3215 = vadd.f32 %v3132, %v3214
    %v3216 = vpop.f32.mrb[0].mxu0
    %3217 = vdwg.mxu0
    %v3218 = vmul.f32 %v3200, 0.5
    %v3219 = vmul.f32 %v3205, 0.5
    %v3220 = vmul.f32 %v3210, 0.5
    %v3221 = vmul.f32 %v3215, 0.5
    %v3222 = vadd.f32 %v3218, %v2908
    %v3223 = vadd.f32 %v3219, %v2909
    %v3224 = vadd.f32 %v3220, %v2910
    %v3225 = vadd.f32 %v3221, %v2911
    %v3226 = vsel %vm75, %v3222, 0.0
    %3227 = vadd.xlane.f32.xlu0 %v3226
    %v3228 = vpop.xlane.xlu0 %3227
    %v3229 = vsel %vm75, %v3223, 0.0
    %3230 = vadd.xlane.f32.xlu0 %v3229
    %v3231 = vpop.xlane.xlu0 %3230
    %v3232 = vsel %vm75, %v3224, 0.0
    %3233 = vadd.xlane.f32.xlu0 %v3232
    %v3234 = vpop.xlane.xlu0 %3233
    %v3235 = vsel %vm75, %v3225, 0.0
    %3236 = vadd.xlane.f32.xlu0 %v3235
    %v3237 = vpop.xlane.xlu0 %3236
    %v3238 = vmul.f32 %v3228, %v88
    %v3239 = vmul.f32 %v3231, %v88
    %v3240 = vmul.f32 %v3234, %v88
    %v3241 = vmul.f32 %v3237, %v88
    %v3242 = vsub.f32 %v3222, %v3238
    %v3243 = vsub.f32 %v3223, %v3239
    %v3244 = vsub.f32 %v3224, %v3240
    %v3245 = vsub.f32 %v3225, %v3241
    %v3246 = vmul.f32 %v3242, %v3242
    %v3247 = vmul.f32 %v3243, %v3243
    %v3248 = vmul.f32 %v3244, %v3244
    %v3249 = vmul.f32 %v3245, %v3245
    %v3250 = vsel %vm75, %v3246, 0.0
    %3251 = vadd.xlane.f32.xlu0 %v3250
    %v3252 = vpop.xlane.xlu0 %3251
    %v3253 = vsel %vm75, %v3247, 0.0
    %3254 = vadd.xlane.f32.xlu0 %v3253
    %v3255 = vpop.xlane.xlu0 %3254
    %v3256 = vsel %vm75, %v3248, 0.0
    %3257 = vadd.xlane.f32.xlu0 %v3256
    %v3258 = vpop.xlane.xlu0 %3257
    %v3259 = vsel %vm75, %v3249, 0.0
    %3260 = vadd.xlane.f32.xlu0 %v3259
    %v3261 = vpop.xlane.xlu0 %3260
    %v3262 = vmul.f32 %v3252, %v88
    %v3263 = vmul.f32 %v3255, %v88
    %v3264 = vmul.f32 %v3258, %v88
    %v3265 = vmul.f32 %v3261, %v88
    %v3266 = vadd.f32 %v3262, 1e-05
    %v3267 = vadd.f32 %v3263, 1e-05
    %v3268 = vadd.f32 %v3264, 1e-05
    %v3269 = vadd.f32 %v3265, 1e-05
    %v3270 = vrsqrt.pop %v3266
    %v3271 = vrsqrt.pop %v3267
    %v3272 = vrsqrt.pop %v3268
    %v3273 = vrsqrt.pop %v3269
    %v3274 = vmul.f32 %v3242, %v3270
    %v3275 = vmul.f32 %v3243, %v3271
    %v3276 = vmul.f32 %v3244, %v3272
    %v3277 = vmul.f32 %v3245, %v3273
    %v3278 = vlaneseq
    %v3279 = vshrl.u32 %v3278, 7
    %v3280 = vsub.s32 4, %v3279
    %v3281 = vrot.slane %v49, %v3280
    %v3282 = vmul.f32 %v3274, %v3281
    %v3283 = vmul.f32 %v3275, %v3281
    %v3284 = vmul.f32 %v3276, %v3281
    %v3285 = vmul.f32 %v3277, %v3281
    %v3286 = vlaneseq
    %v3287 = vshrl.u32 %v3286, 7
    %v3288 = vsub.s32 5, %v3287
    %v3289 = vrot.slane %v49, %v3288
    %v3290 = vadd.f32 %v3282, %v3289
    %v3291 = vadd.f32 %v3283, %v3289
    %v3292 = vadd.f32 %v3284, %v3289
    %v3293 = vadd.f32 %v3285, %v3289
    %3294 = vst.msk [vmem:[#allocation2] sm:$0xff] %vm75, %v3290
    %3295 = vst.msk [vmem:[#allocation2 + $0x8] sm:$0xff] %vm75, %v3291
    %3296 = vst.msk [vmem:[#allocation2 + $0x10] sm:$0xff] %vm75, %v3292
    %3297 = vst.msk [vmem:[#allocation2 + $0x18] sm:$0xff] %vm75, %v3293
    // Predicated region
    $region58: #{conformer_block.1} parent=1 // pred_check
      _
    $region59: #{conformer_block.1} parent=1 // pred_check_branch
      %3299 = sbr.rel (0) target = $region61
    $region60: #{conformer_block.1} parent=1 // pred_region
      %s3301 = ssub.s32 512, 512
      %3302 = vsyncadd [#allocation3], %s3301
      %s3303 = sshll.u32 [#allocation2], 4
      %s3304 = int_to_ptr.vmem [resolvable:$true] %s3303
      %3309 = dma.vmem_to_hbm [thread:$0]  %s3304, 512, %s14, [#allocation3], 128, 128, 8
    $region61: #{conformer_block.1} parent=1 // pred_fallthru
      _
    // Predicated region
    $region62: #{conformer_block.1} parent=1 // pred_check
      _
    $region63: #{conformer_block.1} parent=1 // pred_check_branch
      %3311 = sbr.rel (0) target = $region65
    $region64: #{conformer_block.1} parent=1 // pred_region
      %3312 = dma.done [#allocation3], 512
    $region65: #{conformer_block.1} parent=1 // pred_fallthru
      _
    %3313 = vsyncpa [#allocation3], 1

</llo_original>
